<compile_context>
chip_gen: v5e
topology: v5e:2x2
jax: 0.10.0
libtpu: 0.0.40
codegen_flags: <defaults>
</compile_context>

<pallas_src>
import jax
import jax.numpy as jnp
from jax.experimental import pallas as pl
from jax.experimental.pallas import tpu as pltpu


def _round_up(x, m):
    return (x + m - 1) // m * m


_NC_LANE = 128                      # lane-dense output width
_RESIDENT_W_BYTES_MAX = 24 << 20    # resident path if 2x bf16 weight fits here
_TK_STREAM = 1024                   # K tile for the streaming fallback
_VMEM_SOFT = 14 << 20               # raise vmem_limit above this footprint


# ----------------------------------------------------------------------------
# Kernels
# ----------------------------------------------------------------------------
def _kernel_resident(x_ref, w_ref, b_ref, o_ref):
    # Whole bf16 weight is VMEM-resident; cast the x tile in-kernel, one MXU
    # pass, f32 accumulate, fused bias add.
    o_ref[...] = (
        jnp.dot(x_ref[...].astype(jnp.bfloat16), w_ref[...],
                preferred_element_type=jnp.float32)
        + b_ref[...])


def _kernel_stream_k(x_ref, w_ref, b_ref, o_ref):
    # Fallback for very large input_size: stream K tiles (innermost axis) and
    # accumulate directly into the K-resident f32 output block (no scratch).
    k = pl.program_id(1)

    @pl.when(k == 0)
    def _():
        o_ref[...] = jnp.zeros_like(o_ref) + b_ref[...]

    o_ref[...] += jnp.dot(x_ref[...].astype(jnp.bfloat16), w_ref[...],
                          preferred_element_type=jnp.float32)


# ----------------------------------------------------------------------------
# One-time weight preparation (hoisted out of the per-call hot path)
# ----------------------------------------------------------------------------
def prepare_params(params, dataset, hw, num_classes):
    """Fuse the two bias-only Linears, fold the avg-pool into the weights
    (cifar100), pad N to a lane-dense multiple of 128, cast weights to bf16.
    Also pre-pads K (once) if the streaming fallback will be used."""
    w1 = params["w1"].astype(jnp.float32)        # (128, in_features)
    b1 = params["b1"].astype(jnp.float32)        # (128,)
    w2 = params["w2"].astype(jnp.float32)        # (nc, 128)
    b2 = params["b2"].astype(jnp.float32)        # (nc,)

    w_eff = w1.T @ w2.T                          # (in_features, nc)
    b_eff = b1 @ w2.T + b2                       # (nc,)

    if dataset == "cifar100":
        # Fold AdaptiveAvgPool2d((1,1)):  x.reshape(B, C*HW) @ repeat(W)/HW
        # == mean_pool(x) @ W.  Row order c*HW + s matches NCHW flatten.
        w_eff = jnp.repeat(w_eff, hw, axis=0) / float(hw)   # (C*HW, nc)

    K = int(w_eff.shape[0])
    nc_pad = _round_up(num_classes, _NC_LANE)
    w_eff = jnp.pad(w_eff, ((0, 0), (0, nc_pad - num_classes)))
    b_eff = jnp.pad(b_eff, (0, nc_pad - num_classes)).reshape(1, nc_pad)

    resident = 2 * K * nc_pad * 2 <= _RESIDENT_W_BYTES_MAX
    if not resident:
        k_pad = _round_up(K, _TK_STREAM)         # pad K once, here
        w_eff = jnp.pad(w_eff, ((0, k_pad - K), (0, 0)))

    return {
        "w": w_eff.astype(jnp.bfloat16),         # (K[_pad], NC_pad) bf16
        "b": b_eff.astype(jnp.float32),          # (1, NC_pad) f32
        "nc": num_classes,
        "k": K,
        "resident": resident,
    }


def _pick_batch_tile(B, K, x_itemsize):
    """Largest TB in {8..256} with small pad waste and bounded x-tile VMEM;
    halved if the whole batch would otherwise land on one TensorCore."""
    b8 = _round_up(B, 8)
    tb = 8
    for cand in (8, 16, 32, 64, 128, 256):
        if cand > b8:
            break
        if 2 * cand * K * x_itemsize > (16 << 20):   # double-buffered x tile
            break
        if _round_up(B, cand) - B <= max(8, B // 8):  # <= ~12.5% pad waste
            tb = cand
    # v7x has 2 TensorCores: prefer >=2 "parallel" batch tiles when it does
    # not increase the padded work.
    if (_round_up(B, tb) // tb == 1 and tb >= 16
            and _round_up(B, tb // 2) == _round_up(B, tb)):
        tb //= 2
    return tb


# ----------------------------------------------------------------------------
# Forward
# ----------------------------------------------------------------------------
def completion_forward(x, prep):
    B = x.shape[0]
    x_flat = x.reshape(B, -1)                    # Flatten() (NCHW row-major)
    K = prep["k"]
    assert x_flat.shape[1] == K, (
        f"flattened input size {x_flat.shape[1]} != expected in_features {K}")

    w, b = prep["w"], prep["b"]
    nc_pad = w.shape[1]

    TB = _pick_batch_tile(B, K, x_flat.dtype.itemsize)
    B_pad = _round_up(B, TB)
    if B_pad != B:                               # waste bounded by TB choice
        x_flat = jnp.pad(x_flat, ((0, B_pad - B), (0, 0)))

    x_tile_bytes = 2 * TB * K * x_flat.dtype.itemsize
    out_tile_bytes = 2 * TB * nc_pad * 4

    if prep["resident"]:
        footprint = 2 * K * nc_pad * 2 + x_tile_bytes + out_tile_bytes
        vmem_limit = (32 << 20) if footprint > _VMEM_SOFT else None
        out = pl.pallas_call(
            _kernel_resident,
            out_shape=jax.ShapeDtypeStruct((B_pad, nc_pad), jnp.float32),
            grid_spec=pltpu.PrefetchScalarGridSpec(
                num_scalar_prefetch=0,
                grid=(B_pad // TB,),
                in_specs=[
                    pl.BlockSpec((TB, K), lambda i: (i, 0)),       # x tile
                    pl.BlockSpec((K, nc_pad), lambda i: (0, 0)),   # resident W
                    pl.BlockSpec((1, nc_pad), lambda i: (0, 0)),   # resident b
                ],
                out_specs=pl.BlockSpec((TB, nc_pad), lambda i: (i, 0)),
            ),
            compiler_params=pltpu.CompilerParams(
                dimension_semantics=("parallel",),
                vmem_limit_bytes=vmem_limit),
        )(x_flat, w, b)
    else:
        K_pad = w.shape[0]
        if K_pad != K:
            x_flat = jnp.pad(x_flat, ((0, 0), (0, K_pad - K)))
        TK = _TK_STREAM
        out = pl.pallas_call(
            _kernel_stream_k,
            out_shape=jax.ShapeDtypeStruct((B_pad, nc_pad), jnp.float32),
            grid_spec=pltpu.PrefetchScalarGridSpec(
                num_scalar_prefetch=0,
                grid=(B_pad // TB, K_pad // TK),
                in_specs=[
                    pl.BlockSpec((TB, TK), lambda i, k: (i, k)),
                    pl.BlockSpec((TK, nc_pad), lambda i, k: (k, 0)),
                    pl.BlockSpec((1, nc_pad), lambda i, k: (0, 0)),
                ],
                out_specs=pl.BlockSpec((TB, nc_pad), lambda i, k: (i, 0)),
            ),
            compiler_params=pltpu.CompilerParams(
                dimension_semantics=("parallel", "arbitrary"),
                vmem_limit_bytes=32 << 20),
        )(x_flat, w, b)

    return out[:B, :prep["nc"]]


# ----------------------------------------------------------------------------
# Synthetic parameters (PyTorch nn.Linear (out_features, in_features) layout)
# ----------------------------------------------------------------------------
def init_params(key, in_features, num_classes):
    k1, k2, k3, k4 = jax.random.split(key, 4)
    s1 = 1.0 / jnp.sqrt(in_features)
    s2 = 1.0 / jnp.sqrt(128.0)
    return {
        "w1": jax.random.uniform(k1, (128, in_features), jnp.float32, -s1, s1),
        "b1": jax.random.uniform(k2, (128,), jnp.float32, -s1, s1),
        "w2": jax.random.uniform(k3, (num_classes, 128), jnp.float32, -s2, s2),
        "b2": jax.random.uniform(k4, (num_classes,), jnp.float32, -s2, s2),
    }


# Pure-JAX reference with exact PyTorch-module semantics (f32).
def _reference(x, params, dataset):
    if dataset == "cifar100":
        pooled = jnp.mean(x, axis=(2, 3))        # AdaptiveAvgPool2d((1,1)) + Flatten
    else:
        pooled = x.reshape(x.shape[0], -1)       # Flatten
    h = pooled @ params["w1"].T + params["b1"]
    return h @ params["w2"].T + params["b2"]


if __name__ == "__main__":
    key = jax.random.PRNGKey(0)
    kx, kp, kx2, kp2 = jax.random.split(key, 4)

    # --- cifar100 branch: AdaptiveAvgPool2d -> Flatten -> Linear(512,128)
    #     -> Linear(128, num_classes).  Channels must be 512 per the module.
    B, C, H, W = 2, 512, 4, 4
    num_classes = 100
    x = jax.random.normal(kx, (B, C, H, W), jnp.float32)
    params = init_params(kp, in_features=512, num_classes=num_classes)
    prep = prepare_params(params, "cifar100", hw=H * W, num_classes=num_classes)

    out = jax.block_until_ready(completion_forward(x, prep))
    ref = _reference(x, params, "cifar100")
    assert out.shape == (B, num_classes), out.shape
    assert jnp.allclose(out, ref, atol=1e-2, rtol=1e-2), \
        "cifar100 branch mismatch vs JAX reference"

    # --- non-cifar branch: Flatten -> Linear(input_size,128) -> Linear(128,nc)
    B2, C2, H2, W2 = 2, 4, 8, 8
    input_size = C2 * H2 * W2
    nc2 = 10
    x2 = jax.random.normal(kx2, (B2, C2, H2, W2), jnp.float32)
    params2 = init_params(kp2, in_features=input_size, num_classes=nc2)
    prep2 = prepare_params(params2, "other", hw=None, num_classes=nc2)

    out2 = jax.block_until_ready(completion_forward(x2, prep2))
    ref2 = _reference(x2, params2, "other")
    assert out2.shape == (B2, nc2), out2.shape
    assert jnp.allclose(out2, ref2, atol=1e-2, rtol=1e-2), \
        "flat branch mismatch vs JAX reference"

    print("KERNEL_OK")
</pallas_src>

<mosaic_0001>
module attributes {stable_mosaic.version = 11 : i64} {
  func.func @_kernel_resident(%arg0: i32, %arg1: memref<8x8192xf32, #tpu.memory_space<vmem>>, %arg2: memref<8192x128xbf16, #tpu.memory_space<vmem>>, %arg3: memref<1x128xf32, #tpu.memory_space<vmem>>, %arg4: memref<8x128xf32, #tpu.memory_space<vmem>>) attributes {dimension_semantics = [#tpu.dimension_semantics<parallel>], iteration_bounds = array<i64: 1>, scalar_prefetch = 0 : i64, scratch_operands = 0 : i64, tpu.core_type = #tpu.core_type<tc>, window_params = [{transform_indices = @transform_0, window_bounds = array<i64: 8, 8192>}, {pipeline_mode = #tpu.pipeline_mode<synchronous>, transform_indices = @transform_1, window_bounds = array<i64: 8192, 128>}, {pipeline_mode = #tpu.pipeline_mode<synchronous>, transform_indices = @transform_2, window_bounds = array<i64: 1, 128>}, {transform_indices = @transform_3, window_bounds = array<i64: 8, 128>}]} {
    %c0 = arith.constant 0 : index
    %c0_0 = arith.constant 0 : index
    %0 = vector.load %arg1[%c0, %c0_0] : memref<8x8192xf32, #tpu.memory_space<vmem>>, vector<8x8192xf32>
    %1 = arith.truncf %0 : vector<8x8192xf32> to vector<8x8192xbf16>
    %c0_1 = arith.constant 0 : index
    %c0_2 = arith.constant 0 : index
    %2 = vector.load %arg2[%c0_1, %c0_2] : memref<8192x128xbf16, #tpu.memory_space<vmem>>, vector<8192x128xbf16>
    %cst = arith.constant dense<0.000000e+00> : vector<8x128xf32>
    %3 = tpu.matmul %1, %2, %cst {dimension_numbers = #tpu.dot_dimension_numbers<[1], [0], [0], [1], [0, 0, 1, 1], [], []>} : vector<8x8192xbf16>, vector<8192x128xbf16>, vector<8x128xf32> -> vector<8x128xf32>
    %c0_3 = arith.constant 0 : index
    %c0_4 = arith.constant 0 : index
    %4 = vector.load %arg3[%c0_3, %c0_4] : memref<1x128xf32, #tpu.memory_space<vmem>>, vector<1x128xf32>
    %5 = vector.broadcast %4 : vector<1x128xf32> to vector<8x128xf32>
    %6 = arith.addf %3, %5 : vector<8x128xf32>
    %c0_5 = arith.constant 0 : index
    %c0_6 = arith.constant 0 : index
    %7 = vector.load %arg4[%c0_5, %c0_6] : memref<8x128xf32, #tpu.memory_space<vmem>>, vector<8x128xf32>
    tpu.vector_store %arg4[%c0_5, %c0_6], %6 {strides = array<i32>} : memref<8x128xf32, #tpu.memory_space<vmem>>, vector<8x128xf32>,
    return
  }
  func.func @transform_0(%arg0: i32) -> (i32, i32) {
    %c0_i32 = arith.constant 0 : i32
    %c0_i32_0 = arith.constant 0 : i32
    return %arg0, %c0_i32 : i32, i32
  }
  func.func @transform_1(%arg0: i32) -> (i32, i32) {
    %c0_i32 = arith.constant 0 : i32
    %c0_i32_0 = arith.constant 0 : i32
    %c0_i32_1 = arith.constant 0 : i32
    return %c0_i32, %c0_i32_0 : i32, i32
  }
  func.func @transform_2(%arg0: i32) -> (i32, i32) {
    %c0_i32 = arith.constant 0 : i32
    %c0_i32_0 = arith.constant 0 : i32
    %c0_i32_1 = arith.constant 0 : i32
    return %c0_i32, %c0_i32_0 : i32, i32
  }
  func.func @transform_3(%arg0: i32) -> (i32, i32) {
    %c0_i32 = arith.constant 0 : i32
    %c0_i32_0 = arith.constant 0 : i32
    return %arg0, %c0_i32 : i32, i32
  }
}

</mosaic_0001>

<llo_original>
// kernel: tpu_custom_call.1
$region0: #{tpu_custom_call.1}
  #allocation0 [shape = 'u32[]', space=smem, size = 0x4, offset = 0x4, fixed_abs, tag = 'smem constant byte address 0x4 - core index']
  #allocation1 [shape = 'u32[72,128]{1,0:T(1,128)}', space=vmem, size = 0x9000, scoped, tag = 'internal scratch']
  %s0 = inlined_call_operand.hbm [shape: f32[8,8192], index: 0, kind: input, shape index: {}]
  %s1 = inlined_call_operand.hbm [shape: bf16[8192,128], index: 1, kind: input, shape index: {}]
  %s2 = inlined_call_operand.hbm [shape: f32[1,128], index: 2, kind: input, shape index: {}]
  %s3 = inlined_call_operand.hbm [shape: f32[8,128], index: 3, kind: output, shape index: {}]
  %s4 = sld [smem:[#allocation0]]
  $region34: #{tpu_custom_call.1} parent=0
    _
  %s6 = ssub.s32 1, %s4
  %s7 = scalar_select 0, %s6, %s4
  $region1: #{tpu_custom_call.1} parent=0
    #allocation2 [shape = 'u8[262144]{0}', space=vmem, size = 0x40000, scoped, tag = 'input window, operand 0, single buffered']
    #allocation3 [shape = 's32[1]{0}', space=sflag, size = 0x4, scoped, tag = 'scoped memory for tpu_custom_call.1']
    #allocation4 [shape = 's32[1]{0}', space=sflag, size = 0x4, scoped, tag = 'scoped memory for tpu_custom_call.1']
    #allocation5 [shape = 'u8[2097152]{0}', space=vmem, size = 0x200000, scoped, tag = 'input window, operand 1, single buffered']
    #allocation6 [shape = 's32[1]{0}', space=sflag, size = 0x4, scoped, tag = 'scoped memory for tpu_custom_call.1']
    #allocation7 [shape = 'u8[512]{0}', space=vmem, size = 0x400, scoped, tag = 'input window, operand 2, single buffered']
    #allocation8 [shape = 'u8[4096]{0}', space=vmem, size = 0x1000, scoped, tag = 'output window, operand 0, single buffered']
    %8 = vsyncpa [#allocation3], 0
    %9 = vsyncpa [#allocation6], 0
    %10 = vsyncpa [#allocation4], 0
    // Predicated region
    $region2: #{tpu_custom_call.1} parent=1 // pred_check
      _
    $region3: #{tpu_custom_call.1} parent=1 // pred_check_branch
      %12 = sbr.rel (0) target = $region5
    $region4: #{tpu_custom_call.1} parent=1 // pred_region
      %14 = vsyncadd [#allocation3], 0
      %s16 = sshll.u32 %s0, 4
      %s17 = int_to_ptr.hbm [resolvable:$true] %s16
      %s18 = sshll.u32 [#allocation2], 4
      %s19 = int_to_ptr.vmem [resolvable:$true] %s18
      %21 = dma.hbm_to_vmem [thread:$0]  %s17, 8192, %s19, [#allocation3]
    $region5: #{tpu_custom_call.1} parent=1 // pred_fallthru
      _
    // Predicated region
    $region6: #{tpu_custom_call.1} parent=1 // pred_check
      _
    $region7: #{tpu_custom_call.1} parent=1 // pred_check_branch
      %23 = sbr.rel (0) target = $region9
    $region8: #{tpu_custom_call.1} parent=1 // pred_region
      %25 = vsyncadd [#allocation6], 0
      %s26 = sshll.u32 %s1, 4
      %s27 = int_to_ptr.hbm [resolvable:$true] %s26
      %s28 = sshll.u32 [#allocation5], 4
      %s29 = int_to_ptr.vmem [resolvable:$true] %s28
      %34 = dma.hbm_to_vmem [thread:$0]  %s27, 65536, %s29, [#allocation6], 64, 64, 4
    $region9: #{tpu_custom_call.1} parent=1 // pred_fallthru
      _
    // Predicated region
    $region10: #{tpu_custom_call.1} parent=1 // pred_check
      _
    $region11: #{tpu_custom_call.1} parent=1 // pred_check_branch
      %36 = sbr.rel (0) target = $region13
    $region12: #{tpu_custom_call.1} parent=1 // pred_region
      %38 = vsyncadd [#allocation6], 0
      %s40 = sshll.u32 %s2, 4
      %s41 = int_to_ptr.hbm [resolvable:$true] %s40
      %s42 = sshll.u32 [#allocation7], 4
      %s43 = int_to_ptr.vmem [resolvable:$true] %s42
      %45 = dma.hbm_to_vmem [thread:$0]  %s41, 16, %s43, [#allocation6]
    $region13: #{tpu_custom_call.1} parent=1 // pred_fallthru
      _
    // Predicated region
    $region14: #{tpu_custom_call.1} parent=1 // pred_check
      _
    $region15: #{tpu_custom_call.1} parent=1 // pred_check_branch
      %47 = sbr.rel (0) target = $region17
    $region16: #{tpu_custom_call.1} parent=1 // pred_region
      %49 = dma.done [#allocation3], 8192
    $region17: #{tpu_custom_call.1} parent=1 // pred_fallthru
      _
    // Predicated region
    $region18: #{tpu_custom_call.1} parent=1 // pred_check
      _
    $region19: #{tpu_custom_call.1} parent=1 // pred_check_branch
      %51 = sbr.rel (0) target = $region21
    $region20: #{tpu_custom_call.1} parent=1 // pred_region
      %53 = dma.done [#allocation6], 65536
    $region21: #{tpu_custom_call.1} parent=1 // pred_fallthru
      _
    // Predicated region
    $region22: #{tpu_custom_call.1} parent=1 // pred_check
      _
    $region23: #{tpu_custom_call.1} parent=1 // pred_check_branch
      %55 = sbr.rel (0) target = $region25
    $region24: #{tpu_custom_call.1} parent=1 // pred_region
      %57 = dma.done [#allocation6], 16
    $region25: #{tpu_custom_call.1} parent=1 // pred_fallthru
      _
    %v58 = vld [vmem:[#allocation2] sm:$0xff]
    %v59 = vld [vmem:[#allocation2 + $0x8] sm:$0xff]
    %v60 = vld [vmem:[#allocation2 + $0x10] sm:$0xff]
    %v61 = vld [vmem:[#allocation2 + $0x18] sm:$0xff]
    %v62 = vld [vmem:[#allocation2 + $0x20] sm:$0xff]
    %v63 = vld [vmem:[#allocation2 + $0x28] sm:$0xff]
    %v64 = vld [vmem:[#allocation2 + $0x30] sm:$0xff]
    %v65 = vld [vmem:[#allocation2 + $0x38] sm:$0xff]
    %v66 = vld [vmem:[#allocation2 + $0x40] sm:$0xff]
    %v67 = vld [vmem:[#allocation2 + $0x48] sm:$0xff]
    %v68 = vld [vmem:[#allocation2 + $0x50] sm:$0xff]
    %v69 = vld [vmem:[#allocation2 + $0x58] sm:$0xff]
    %v70 = vld [vmem:[#allocation2 + $0x60] sm:$0xff]
    %v71 = vld [vmem:[#allocation2 + $0x68] sm:$0xff]
    %v72 = vld [vmem:[#allocation2 + $0x70] sm:$0xff]
    %v73 = vld [vmem:[#allocation2 + $0x78] sm:$0xff]
    %v74 = vld [vmem:[#allocation2 + $0x80] sm:$0xff]
    %v75 = vld [vmem:[#allocation2 + $0x88] sm:$0xff]
    %v76 = vld [vmem:[#allocation2 + $0x90] sm:$0xff]
    %v77 = vld [vmem:[#allocation2 + $0x98] sm:$0xff]
    %v78 = vld [vmem:[#allocation2 + $0xa0] sm:$0xff]
    %v79 = vld [vmem:[#allocation2 + $0xa8] sm:$0xff]
    %v80 = vld [vmem:[#allocation2 + $0xb0] sm:$0xff]
    %v81 = vld [vmem:[#allocation2 + $0xb8] sm:$0xff]
    %v82 = vld [vmem:[#allocation2 + $0xc0] sm:$0xff]
    %v83 = vld [vmem:[#allocation2 + $0xc8] sm:$0xff]
    %v84 = vld [vmem:[#allocation2 + $0xd0] sm:$0xff]
    %v85 = vld [vmem:[#allocation2 + $0xd8] sm:$0xff]
    %v86 = vld [vmem:[#allocation2 + $0xe0] sm:$0xff]
    %v87 = vld [vmem:[#allocation2 + $0xe8] sm:$0xff]
    %v88 = vld [vmem:[#allocation2 + $0xf0] sm:$0xff]
    %v89 = vld [vmem:[#allocation2 + $0xf8] sm:$0xff]
    %v90 = vld [vmem:[#allocation2 + $0x100] sm:$0xff]
    %v91 = vld [vmem:[#allocation2 + $0x108] sm:$0xff]
    %v92 = vld [vmem:[#allocation2 + $0x110] sm:$0xff]
    %v93 = vld [vmem:[#allocation2 + $0x118] sm:$0xff]
    %v94 = vld [vmem:[#allocation2 + $0x120] sm:$0xff]
    %v95 = vld [vmem:[#allocation2 + $0x128] sm:$0xff]
    %v96 = vld [vmem:[#allocation2 + $0x130] sm:$0xff]
    %v97 = vld [vmem:[#allocation2 + $0x138] sm:$0xff]
    %v98 = vld [vmem:[#allocation2 + $0x140] sm:$0xff]
    %v99 = vld [vmem:[#allocation2 + $0x148] sm:$0xff]
    %v100 = vld [vmem:[#allocation2 + $0x150] sm:$0xff]
    %v101 = vld [vmem:[#allocation2 + $0x158] sm:$0xff]
    %v102 = vld [vmem:[#allocation2 + $0x160] sm:$0xff]
    %v103 = vld [vmem:[#allocation2 + $0x168] sm:$0xff]
    %v104 = vld [vmem:[#allocation2 + $0x170] sm:$0xff]
    %v105 = vld [vmem:[#allocation2 + $0x178] sm:$0xff]
    %v106 = vld [vmem:[#allocation2 + $0x180] sm:$0xff]
    %v107 = vld [vmem:[#allocation2 + $0x188] sm:$0xff]
    %v108 = vld [vmem:[#allocation2 + $0x190] sm:$0xff]
    %v109 = vld [vmem:[#allocation2 + $0x198] sm:$0xff]
    %v110 = vld [vmem:[#allocation2 + $0x1a0] sm:$0xff]
    %v111 = vld [vmem:[#allocation2 + $0x1a8] sm:$0xff]
    %v112 = vld [vmem:[#allocation2 + $0x1b0] sm:$0xff]
    %v113 = vld [vmem:[#allocation2 + $0x1b8] sm:$0xff]
    %v114 = vld [vmem:[#allocation2 + $0x1c0] sm:$0xff]
    %v115 = vld [vmem:[#allocation2 + $0x1c8] sm:$0xff]
    %v116 = vld [vmem:[#allocation2 + $0x1d0] sm:$0xff]
    %v117 = vld [vmem:[#allocation2 + $0x1d8] sm:$0xff]
    %v118 = vld [vmem:[#allocation2 + $0x1e0] sm:$0xff]
    %v119 = vld [vmem:[#allocation2 + $0x1e8] sm:$0xff]
    %v120 = vld [vmem:[#allocation2 + $0x1f0] sm:$0xff]
    %v121 = vld [vmem:[#allocation2 + $0x1f8] sm:$0xff]
    %v122 = vpack.c.bf16 %v58, %v58
    %v123 = vpack.c.bf16 %v59, %v59
    %v124 = vpack.c.bf16 %v60, %v60
    %v125 = vpack.c.bf16 %v61, %v61
    %v126 = vpack.c.bf16 %v62, %v62
    %v127 = vpack.c.bf16 %v63, %v63
    %v128 = vpack.c.bf16 %v64, %v64
    %v129 = vpack.c.bf16 %v65, %v65
    %v130 = vpack.c.bf16 %v66, %v66
    %v131 = vpack.c.bf16 %v67, %v67
    %v132 = vpack.c.bf16 %v68, %v68
    %v133 = vpack.c.bf16 %v69, %v69
    %v134 = vpack.c.bf16 %v70, %v70
    %v135 = vpack.c.bf16 %v71, %v71
    %v136 = vpack.c.bf16 %v72, %v72
    %v137 = vpack.c.bf16 %v73, %v73
    %v138 = vpack.c.bf16 %v74, %v74
    %v139 = vpack.c.bf16 %v75, %v75
    %v140 = vpack.c.bf16 %v76, %v76
    %v141 = vpack.c.bf16 %v77, %v77
    %v142 = vpack.c.bf16 %v78, %v78
    %v143 = vpack.c.bf16 %v79, %v79
    %v144 = vpack.c.bf16 %v80, %v80
    %v145 = vpack.c.bf16 %v81, %v81
    %v146 = vpack.c.bf16 %v82, %v82
    %v147 = vpack.c.bf16 %v83, %v83
    %v148 = vpack.c.bf16 %v84, %v84
    %v149 = vpack.c.bf16 %v85, %v85
    %v150 = vpack.c.bf16 %v86, %v86
    %v151 = vpack.c.bf16 %v87, %v87
    %v152 = vpack.c.bf16 %v88, %v88
    %v153 = vpack.c.bf16 %v89, %v89
    %v154 = vpack.c.bf16 %v90, %v90
    %v155 = vpack.c.bf16 %v91, %v91
    %v156 = vpack.c.bf16 %v92, %v92
    %v157 = vpack.c.bf16 %v93, %v93
    %v158 = vpack.c.bf16 %v94, %v94
    %v159 = vpack.c.bf16 %v95, %v95
    %v160 = vpack.c.bf16 %v96, %v96
    %v161 = vpack.c.bf16 %v97, %v97
    %v162 = vpack.c.bf16 %v98, %v98
    %v163 = vpack.c.bf16 %v99, %v99
    %v164 = vpack.c.bf16 %v100, %v100
    %v165 = vpack.c.bf16 %v101, %v101
    %v166 = vpack.c.bf16 %v102, %v102
    %v167 = vpack.c.bf16 %v103, %v103
    %v168 = vpack.c.bf16 %v104, %v104
    %v169 = vpack.c.bf16 %v105, %v105
    %v170 = vpack.c.bf16 %v106, %v106
    %v171 = vpack.c.bf16 %v107, %v107
    %v172 = vpack.c.bf16 %v108, %v108
    %v173 = vpack.c.bf16 %v109, %v109
    %v174 = vpack.c.bf16 %v110, %v110
    %v175 = vpack.c.bf16 %v111, %v111
    %v176 = vpack.c.bf16 %v112, %v112
    %v177 = vpack.c.bf16 %v113, %v113
    %v178 = vpack.c.bf16 %v114, %v114
    %v179 = vpack.c.bf16 %v115, %v115
    %v180 = vpack.c.bf16 %v116, %v116
    %v181 = vpack.c.bf16 %v117, %v117
    %v182 = vpack.c.bf16 %v118, %v118
    %v183 = vpack.c.bf16 %v119, %v119
    %v184 = vpack.c.bf16 %v120, %v120
    %v185 = vpack.c.bf16 %v121, %v121
    %v186 = vld [vmem:[#allocation5] sm:$0xf]
    %v187 = vld [vmem:[#allocation5 + $0x4] sm:$0xf]
    %v188 = vld [vmem:[#allocation5 + $0x8] sm:$0xf]
    %v189 = vld [vmem:[#allocation5 + $0xc] sm:$0xf]
    %v190 = vld [vmem:[#allocation5 + $0x10] sm:$0xf]
    %v191 = vld [vmem:[#allocation5 + $0x14] sm:$0xf]
    %v192 = vld [vmem:[#allocation5 + $0x18] sm:$0xf]
    %v193 = vld [vmem:[#allocation5 + $0x1c] sm:$0xf]
    %v194 = vld [vmem:[#allocation5 + $0x20] sm:$0xf]
    %v195 = vld [vmem:[#allocation5 + $0x24] sm:$0xf]
    %v196 = vld [vmem:[#allocation5 + $0x28] sm:$0xf]
    %v197 = vld [vmem:[#allocation5 + $0x2c] sm:$0xf]
    %v198 = vld [vmem:[#allocation5 + $0x30] sm:$0xf]
    %v199 = vld [vmem:[#allocation5 + $0x34] sm:$0xf]
    %v200 = vld [vmem:[#allocation5 + $0x38] sm:$0xf]
    %v201 = vld [vmem:[#allocation5 + $0x3c] sm:$0xf]
    %v202 = vld [vmem:[#allocation5 + $0x40] sm:$0xf]
    %v203 = vld [vmem:[#allocation5 + $0x44] sm:$0xf]
    %v204 = vld [vmem:[#allocation5 + $0x48] sm:$0xf]
    %v205 = vld [vmem:[#allocation5 + $0x4c] sm:$0xf]
    %v206 = vld [vmem:[#allocation5 + $0x50] sm:$0xf]
    %v207 = vld [vmem:[#allocation5 + $0x54] sm:$0xf]
    %v208 = vld [vmem:[#allocation5 + $0x58] sm:$0xf]
    %v209 = vld [vmem:[#allocation5 + $0x5c] sm:$0xf]
    %v210 = vld [vmem:[#allocation5 + $0x60] sm:$0xf]
    %v211 = vld [vmem:[#allocation5 + $0x64] sm:$0xf]
    %v212 = vld [vmem:[#allocation5 + $0x68] sm:$0xf]
    %v213 = vld [vmem:[#allocation5 + $0x6c] sm:$0xf]
    %v214 = vld [vmem:[#allocation5 + $0x70] sm:$0xf]
    %v215 = vld [vmem:[#allocation5 + $0x74] sm:$0xf]
    %v216 = vld [vmem:[#allocation5 + $0x78] sm:$0xf]
    %v217 = vld [vmem:[#allocation5 + $0x7c] sm:$0xf]
    %v218 = vld [vmem:[#allocation5 + $0x80] sm:$0xf]
    %v219 = vld [vmem:[#allocation5 + $0x84] sm:$0xf]
    %v220 = vld [vmem:[#allocation5 + $0x88] sm:$0xf]
    %v221 = vld [vmem:[#allocation5 + $0x8c] sm:$0xf]
    %v222 = vld [vmem:[#allocation5 + $0x90] sm:$0xf]
    %v223 = vld [vmem:[#allocation5 + $0x94] sm:$0xf]
    %v224 = vld [vmem:[#allocation5 + $0x98] sm:$0xf]
    %v225 = vld [vmem:[#allocation5 + $0x9c] sm:$0xf]
    %v226 = vld [vmem:[#allocation5 + $0xa0] sm:$0xf]
    %v227 = vld [vmem:[#allocation5 + $0xa4] sm:$0xf]
    %v228 = vld [vmem:[#allocation5 + $0xa8] sm:$0xf]
    %v229 = vld [vmem:[#allocation5 + $0xac] sm:$0xf]
    %v230 = vld [vmem:[#allocation5 + $0xb0] sm:$0xf]
    %v231 = vld [vmem:[#allocation5 + $0xb4] sm:$0xf]
    %v232 = vld [vmem:[#allocation5 + $0xb8] sm:$0xf]
    %v233 = vld [vmem:[#allocation5 + $0xbc] sm:$0xf]
    %v234 = vld [vmem:[#allocation5 + $0xc0] sm:$0xf]
    %v235 = vld [vmem:[#allocation5 + $0xc4] sm:$0xf]
    %v236 = vld [vmem:[#allocation5 + $0xc8] sm:$0xf]
    %v237 = vld [vmem:[#allocation5 + $0xcc] sm:$0xf]
    %v238 = vld [vmem:[#allocation5 + $0xd0] sm:$0xf]
    %v239 = vld [vmem:[#allocation5 + $0xd4] sm:$0xf]
    %v240 = vld [vmem:[#allocation5 + $0xd8] sm:$0xf]
    %v241 = vld [vmem:[#allocation5 + $0xdc] sm:$0xf]
    %v242 = vld [vmem:[#allocation5 + $0xe0] sm:$0xf]
    %v243 = vld [vmem:[#allocation5 + $0xe4] sm:$0xf]
    %v244 = vld [vmem:[#allocation5 + $0xe8] sm:$0xf]
    %v245 = vld [vmem:[#allocation5 + $0xec] sm:$0xf]
    %v246 = vld [vmem:[#allocation5 + $0xf0] sm:$0xf]
    %v247 = vld [vmem:[#allocation5 + $0xf4] sm:$0xf]
    %v248 = vld [vmem:[#allocation5 + $0xf8] sm:$0xf]
    %v249 = vld [vmem:[#allocation5 + $0xfc] sm:$0xf]
    %v250 = vld [vmem:[#allocation5 + $0x100] sm:$0xf]
    %v251 = vld [vmem:[#allocation5 + $0x104] sm:$0xf]
    %v252 = vld [vmem:[#allocation5 + $0x108] sm:$0xf]
    %v253 = vld [vmem:[#allocation5 + $0x10c] sm:$0xf]
    %v254 = vld [vmem:[#allocation5 + $0x110] sm:$0xf]
    %v255 = vld [vmem:[#allocation5 + $0x114] sm:$0xf]
    %v256 = vld [vmem:[#allocation5 + $0x118] sm:$0xf]
    %v257 = vld [vmem:[#allocation5 + $0x11c] sm:$0xf]
    %v258 = vld [vmem:[#allocation5 + $0x120] sm:$0xf]
    %v259 = vld [vmem:[#allocation5 + $0x124] sm:$0xf]
    %v260 = vld [vmem:[#allocation5 + $0x128] sm:$0xf]
    %v261 = vld [vmem:[#allocation5 + $0x12c] sm:$0xf]
    %v262 = vld [vmem:[#allocation5 + $0x130] sm:$0xf]
    %v263 = vld [vmem:[#allocation5 + $0x134] sm:$0xf]
    %v264 = vld [vmem:[#allocation5 + $0x138] sm:$0xf]
    %v265 = vld [vmem:[#allocation5 + $0x13c] sm:$0xf]
    %v266 = vld [vmem:[#allocation5 + $0x140] sm:$0xf]
    %v267 = vld [vmem:[#allocation5 + $0x144] sm:$0xf]
    %v268 = vld [vmem:[#allocation5 + $0x148] sm:$0xf]
    %v269 = vld [vmem:[#allocation5 + $0x14c] sm:$0xf]
    %v270 = vld [vmem:[#allocation5 + $0x150] sm:$0xf]
    %v271 = vld [vmem:[#allocation5 + $0x154] sm:$0xf]
    %v272 = vld [vmem:[#allocation5 + $0x158] sm:$0xf]
    %v273 = vld [vmem:[#allocation5 + $0x15c] sm:$0xf]
    %v274 = vld [vmem:[#allocation5 + $0x160] sm:$0xf]
    %v275 = vld [vmem:[#allocation5 + $0x164] sm:$0xf]
    %v276 = vld [vmem:[#allocation5 + $0x168] sm:$0xf]
    %v277 = vld [vmem:[#allocation5 + $0x16c] sm:$0xf]
    %v278 = vld [vmem:[#allocation5 + $0x170] sm:$0xf]
    %v279 = vld [vmem:[#allocation5 + $0x174] sm:$0xf]
    %v280 = vld [vmem:[#allocation5 + $0x178] sm:$0xf]
    %v281 = vld [vmem:[#allocation5 + $0x17c] sm:$0xf]
    %v282 = vld [vmem:[#allocation5 + $0x180] sm:$0xf]
    %v283 = vld [vmem:[#allocation5 + $0x184] sm:$0xf]
    %v284 = vld [vmem:[#allocation5 + $0x188] sm:$0xf]
    %v285 = vld [vmem:[#allocation5 + $0x18c] sm:$0xf]
    %v286 = vld [vmem:[#allocation5 + $0x190] sm:$0xf]
    %v287 = vld [vmem:[#allocation5 + $0x194] sm:$0xf]
    %v288 = vld [vmem:[#allocation5 + $0x198] sm:$0xf]
    %v289 = vld [vmem:[#allocation5 + $0x19c] sm:$0xf]
    %v290 = vld [vmem:[#allocation5 + $0x1a0] sm:$0xf]
    %v291 = vld [vmem:[#allocation5 + $0x1a4] sm:$0xf]
    %v292 = vld [vmem:[#allocation5 + $0x1a8] sm:$0xf]
    %v293 = vld [vmem:[#allocation5 + $0x1ac] sm:$0xf]
    %v294 = vld [vmem:[#allocation5 + $0x1b0] sm:$0xf]
    %v295 = vld [vmem:[#allocation5 + $0x1b4] sm:$0xf]
    %v296 = vld [vmem:[#allocation5 + $0x1b8] sm:$0xf]
    %v297 = vld [vmem:[#allocation5 + $0x1bc] sm:$0xf]
    %v298 = vld [vmem:[#allocation5 + $0x1c0] sm:$0xf]
    %v299 = vld [vmem:[#allocation5 + $0x1c4] sm:$0xf]
    %v300 = vld [vmem:[#allocation5 + $0x1c8] sm:$0xf]
    %v301 = vld [vmem:[#allocation5 + $0x1cc] sm:$0xf]
    %v302 = vld [vmem:[#allocation5 + $0x1d0] sm:$0xf]
    %v303 = vld [vmem:[#allocation5 + $0x1d4] sm:$0xf]
    %v304 = vld [vmem:[#allocation5 + $0x1d8] sm:$0xf]
    %v305 = vld [vmem:[#allocation5 + $0x1dc] sm:$0xf]
    %v306 = vld [vmem:[#allocation5 + $0x1e0] sm:$0xf]
    %v307 = vld [vmem:[#allocation5 + $0x1e4] sm:$0xf]
    %v308 = vld [vmem:[#allocation5 + $0x1e8] sm:$0xf]
    %v309 = vld [vmem:[#allocation5 + $0x1ec] sm:$0xf]
    %v310 = vld [vmem:[#allocation5 + $0x1f0] sm:$0xf]
    %v311 = vld [vmem:[#allocation5 + $0x1f4] sm:$0xf]
    %v312 = vld [vmem:[#allocation5 + $0x1f8] sm:$0xf]
    %v313 = vld [vmem:[#allocation5 + $0x1fc] sm:$0xf]
    %v314 = vld [vmem:[#allocation5 + $0x200] sm:$0xf]
    %v315 = vld [vmem:[#allocation5 + $0x204] sm:$0xf]
    %v316 = vld [vmem:[#allocation5 + $0x208] sm:$0xf]
    %v317 = vld [vmem:[#allocation5 + $0x20c] sm:$0xf]
    %v318 = vld [vmem:[#allocation5 + $0x210] sm:$0xf]
    %v319 = vld [vmem:[#allocation5 + $0x214] sm:$0xf]
    %v320 = vld [vmem:[#allocation5 + $0x218] sm:$0xf]
    %v321 = vld [vmem:[#allocation5 + $0x21c] sm:$0xf]
    %v322 = vld [vmem:[#allocation5 + $0x220] sm:$0xf]
    %v323 = vld [vmem:[#allocation5 + $0x224] sm:$0xf]
    %v324 = vld [vmem:[#allocation5 + $0x228] sm:$0xf]
    %v325 = vld [vmem:[#allocation5 + $0x22c] sm:$0xf]
    %v326 = vld [vmem:[#allocation5 + $0x230] sm:$0xf]
    %v327 = vld [vmem:[#allocation5 + $0x234] sm:$0xf]
    %v328 = vld [vmem:[#allocation5 + $0x238] sm:$0xf]
    %v329 = vld [vmem:[#allocation5 + $0x23c] sm:$0xf]
    %v330 = vld [vmem:[#allocation5 + $0x240] sm:$0xf]
    %v331 = vld [vmem:[#allocation5 + $0x244] sm:$0xf]
    %v332 = vld [vmem:[#allocation5 + $0x248] sm:$0xf]
    %v333 = vld [vmem:[#allocation5 + $0x24c] sm:$0xf]
    %v334 = vld [vmem:[#allocation5 + $0x250] sm:$0xf]
    %v335 = vld [vmem:[#allocation5 + $0x254] sm:$0xf]
    %v336 = vld [vmem:[#allocation5 + $0x258] sm:$0xf]
    %v337 = vld [vmem:[#allocation5 + $0x25c] sm:$0xf]
    %v338 = vld [vmem:[#allocation5 + $0x260] sm:$0xf]
    %v339 = vld [vmem:[#allocation5 + $0x264] sm:$0xf]
    %v340 = vld [vmem:[#allocation5 + $0x268] sm:$0xf]
    %v341 = vld [vmem:[#allocation5 + $0x26c] sm:$0xf]
    %v342 = vld [vmem:[#allocation5 + $0x270] sm:$0xf]
    %v343 = vld [vmem:[#allocation5 + $0x274] sm:$0xf]
    %v344 = vld [vmem:[#allocation5 + $0x278] sm:$0xf]
    %v345 = vld [vmem:[#allocation5 + $0x27c] sm:$0xf]
    %v346 = vld [vmem:[#allocation5 + $0x280] sm:$0xf]
    %v347 = vld [vmem:[#allocation5 + $0x284] sm:$0xf]
    %v348 = vld [vmem:[#allocation5 + $0x288] sm:$0xf]
    %v349 = vld [vmem:[#allocation5 + $0x28c] sm:$0xf]
    %v350 = vld [vmem:[#allocation5 + $0x290] sm:$0xf]
    %v351 = vld [vmem:[#allocation5 + $0x294] sm:$0xf]
    %v352 = vld [vmem:[#allocation5 + $0x298] sm:$0xf]
    %v353 = vld [vmem:[#allocation5 + $0x29c] sm:$0xf]
    %v354 = vld [vmem:[#allocation5 + $0x2a0] sm:$0xf]
    %v355 = vld [vmem:[#allocation5 + $0x2a4] sm:$0xf]
    %v356 = vld [vmem:[#allocation5 + $0x2a8] sm:$0xf]
    %v357 = vld [vmem:[#allocation5 + $0x2ac] sm:$0xf]
    %v358 = vld [vmem:[#allocation5 + $0x2b0] sm:$0xf]
    %v359 = vld [vmem:[#allocation5 + $0x2b4] sm:$0xf]
    %v360 = vld [vmem:[#allocation5 + $0x2b8] sm:$0xf]
    %v361 = vld [vmem:[#allocation5 + $0x2bc] sm:$0xf]
    %v362 = vld [vmem:[#allocation5 + $0x2c0] sm:$0xf]
    %v363 = vld [vmem:[#allocation5 + $0x2c4] sm:$0xf]
    %v364 = vld [vmem:[#allocation5 + $0x2c8] sm:$0xf]
    %v365 = vld [vmem:[#allocation5 + $0x2cc] sm:$0xf]
    %v366 = vld [vmem:[#allocation5 + $0x2d0] sm:$0xf]
    %v367 = vld [vmem:[#allocation5 + $0x2d4] sm:$0xf]
    %v368 = vld [vmem:[#allocation5 + $0x2d8] sm:$0xf]
    %v369 = vld [vmem:[#allocation5 + $0x2dc] sm:$0xf]
    %v370 = vld [vmem:[#allocation5 + $0x2e0] sm:$0xf]
    %v371 = vld [vmem:[#allocation5 + $0x2e4] sm:$0xf]
    %v372 = vld [vmem:[#allocation5 + $0x2e8] sm:$0xf]
    %v373 = vld [vmem:[#allocation5 + $0x2ec] sm:$0xf]
    %v374 = vld [vmem:[#allocation5 + $0x2f0] sm:$0xf]
    %v375 = vld [vmem:[#allocation5 + $0x2f4] sm:$0xf]
    %v376 = vld [vmem:[#allocation5 + $0x2f8] sm:$0xf]
    %v377 = vld [vmem:[#allocation5 + $0x2fc] sm:$0xf]
    %v378 = vld [vmem:[#allocation5 + $0x300] sm:$0xf]
    %v379 = vld [vmem:[#allocation5 + $0x304] sm:$0xf]
    %v380 = vld [vmem:[#allocation5 + $0x308] sm:$0xf]
    %v381 = vld [vmem:[#allocation5 + $0x30c] sm:$0xf]
    %v382 = vld [vmem:[#allocation5 + $0x310] sm:$0xf]
    %v383 = vld [vmem:[#allocation5 + $0x314] sm:$0xf]
    %v384 = vld [vmem:[#allocation5 + $0x318] sm:$0xf]
    %v385 = vld [vmem:[#allocation5 + $0x31c] sm:$0xf]
    %v386 = vld [vmem:[#allocation5 + $0x320] sm:$0xf]
    %v387 = vld [vmem:[#allocation5 + $0x324] sm:$0xf]
    %v388 = vld [vmem:[#allocation5 + $0x328] sm:$0xf]
    %v389 = vld [vmem:[#allocation5 + $0x32c] sm:$0xf]
    %v390 = vld [vmem:[#allocation5 + $0x330] sm:$0xf]
    %v391 = vld [vmem:[#allocation5 + $0x334] sm:$0xf]
    %v392 = vld [vmem:[#allocation5 + $0x338] sm:$0xf]
    %v393 = vld [vmem:[#allocation5 + $0x33c] sm:$0xf]
    %v394 = vld [vmem:[#allocation5 + $0x340] sm:$0xf]
    %v395 = vld [vmem:[#allocation5 + $0x344] sm:$0xf]
    %v396 = vld [vmem:[#allocation5 + $0x348] sm:$0xf]
    %v397 = vld [vmem:[#allocation5 + $0x34c] sm:$0xf]
    %v398 = vld [vmem:[#allocation5 + $0x350] sm:$0xf]
    %v399 = vld [vmem:[#allocation5 + $0x354] sm:$0xf]
    %v400 = vld [vmem:[#allocation5 + $0x358] sm:$0xf]
    %v401 = vld [vmem:[#allocation5 + $0x35c] sm:$0xf]
    %v402 = vld [vmem:[#allocation5 + $0x360] sm:$0xf]
    %v403 = vld [vmem:[#allocation5 + $0x364] sm:$0xf]
    %v404 = vld [vmem:[#allocation5 + $0x368] sm:$0xf]
    %v405 = vld [vmem:[#allocation5 + $0x36c] sm:$0xf]
    %v406 = vld [vmem:[#allocation5 + $0x370] sm:$0xf]
    %v407 = vld [vmem:[#allocation5 + $0x374] sm:$0xf]
    %v408 = vld [vmem:[#allocation5 + $0x378] sm:$0xf]
    %v409 = vld [vmem:[#allocation5 + $0x37c] sm:$0xf]
    %v410 = vld [vmem:[#allocation5 + $0x380] sm:$0xf]
    %v411 = vld [vmem:[#allocation5 + $0x384] sm:$0xf]
    %v412 = vld [vmem:[#allocation5 + $0x388] sm:$0xf]
    %v413 = vld [vmem:[#allocation5 + $0x38c] sm:$0xf]
    %v414 = vld [vmem:[#allocation5 + $0x390] sm:$0xf]
    %v415 = vld [vmem:[#allocation5 + $0x394] sm:$0xf]
    %v416 = vld [vmem:[#allocation5 + $0x398] sm:$0xf]
    %v417 = vld [vmem:[#allocation5 + $0x39c] sm:$0xf]
    %v418 = vld [vmem:[#allocation5 + $0x3a0] sm:$0xf]
    %v419 = vld [vmem:[#allocation5 + $0x3a4] sm:$0xf]
    %v420 = vld [vmem:[#allocation5 + $0x3a8] sm:$0xf]
    %v421 = vld [vmem:[#allocation5 + $0x3ac] sm:$0xf]
    %v422 = vld [vmem:[#allocation5 + $0x3b0] sm:$0xf]
    %v423 = vld [vmem:[#allocation5 + $0x3b4] sm:$0xf]
    %v424 = vld [vmem:[#allocation5 + $0x3b8] sm:$0xf]
    %v425 = vld [vmem:[#allocation5 + $0x3bc] sm:$0xf]
    %v426 = vld [vmem:[#allocation5 + $0x3c0] sm:$0xf]
    %v427 = vld [vmem:[#allocation5 + $0x3c4] sm:$0xf]
    %v428 = vld [vmem:[#allocation5 + $0x3c8] sm:$0xf]
    %v429 = vld [vmem:[#allocation5 + $0x3cc] sm:$0xf]
    %v430 = vld [vmem:[#allocation5 + $0x3d0] sm:$0xf]
    %v431 = vld [vmem:[#allocation5 + $0x3d4] sm:$0xf]
    %v432 = vld [vmem:[#allocation5 + $0x3d8] sm:$0xf]
    %v433 = vld [vmem:[#allocation5 + $0x3dc] sm:$0xf]
    %v434 = vld [vmem:[#allocation5 + $0x3e0] sm:$0xf]
    %v435 = vld [vmem:[#allocation5 + $0x3e4] sm:$0xf]
    %v436 = vld [vmem:[#allocation5 + $0x3e8] sm:$0xf]
    %v437 = vld [vmem:[#allocation5 + $0x3ec] sm:$0xf]
    %v438 = vld [vmem:[#allocation5 + $0x3f0] sm:$0xf]
    %v439 = vld [vmem:[#allocation5 + $0x3f4] sm:$0xf]
    %v440 = vld [vmem:[#allocation5 + $0x3f8] sm:$0xf]
    %v441 = vld [vmem:[#allocation5 + $0x3fc] sm:$0xf]
    %v442 = vld [vmem:[#allocation5 + $0x400] sm:$0xf]
    %v443 = vld [vmem:[#allocation5 + $0x404] sm:$0xf]
    %v444 = vld [vmem:[#allocation5 + $0x408] sm:$0xf]
    %v445 = vld [vmem:[#allocation5 + $0x40c] sm:$0xf]
    %v446 = vld [vmem:[#allocation5 + $0x410] sm:$0xf]
    %v447 = vld [vmem:[#allocation5 + $0x414] sm:$0xf]
    %v448 = vld [vmem:[#allocation5 + $0x418] sm:$0xf]
    %v449 = vld [vmem:[#allocation5 + $0x41c] sm:$0xf]
    %v450 = vld [vmem:[#allocation5 + $0x420] sm:$0xf]
    %v451 = vld [vmem:[#allocation5 + $0x424] sm:$0xf]
    %v452 = vld [vmem:[#allocation5 + $0x428] sm:$0xf]
    %v453 = vld [vmem:[#allocation5 + $0x42c] sm:$0xf]
    %v454 = vld [vmem:[#allocation5 + $0x430] sm:$0xf]
    %v455 = vld [vmem:[#allocation5 + $0x434] sm:$0xf]
    %v456 = vld [vmem:[#allocation5 + $0x438] sm:$0xf]
    %v457 = vld [vmem:[#allocation5 + $0x43c] sm:$0xf]
    %v458 = vld [vmem:[#allocation5 + $0x440] sm:$0xf]
    %v459 = vld [vmem:[#allocation5 + $0x444] sm:$0xf]
    %v460 = vld [vmem:[#allocation5 + $0x448] sm:$0xf]
    %v461 = vld [vmem:[#allocation5 + $0x44c] sm:$0xf]
    %v462 = vld [vmem:[#allocation5 + $0x450] sm:$0xf]
    %v463 = vld [vmem:[#allocation5 + $0x454] sm:$0xf]
    %v464 = vld [vmem:[#allocation5 + $0x458] sm:$0xf]
    %v465 = vld [vmem:[#allocation5 + $0x45c] sm:$0xf]
    %v466 = vld [vmem:[#allocation5 + $0x460] sm:$0xf]
    %v467 = vld [vmem:[#allocation5 + $0x464] sm:$0xf]
    %v468 = vld [vmem:[#allocation5 + $0x468] sm:$0xf]
    %v469 = vld [vmem:[#allocation5 + $0x46c] sm:$0xf]
    %v470 = vld [vmem:[#allocation5 + $0x470] sm:$0xf]
    %v471 = vld [vmem:[#allocation5 + $0x474] sm:$0xf]
    %v472 = vld [vmem:[#allocation5 + $0x478] sm:$0xf]
    %v473 = vld [vmem:[#allocation5 + $0x47c] sm:$0xf]
    %v474 = vld [vmem:[#allocation5 + $0x480] sm:$0xf]
    %v475 = vld [vmem:[#allocation5 + $0x484] sm:$0xf]
    %v476 = vld [vmem:[#allocation5 + $0x488] sm:$0xf]
    %v477 = vld [vmem:[#allocation5 + $0x48c] sm:$0xf]
    %v478 = vld [vmem:[#allocation5 + $0x490] sm:$0xf]
    %v479 = vld [vmem:[#allocation5 + $0x494] sm:$0xf]
    %v480 = vld [vmem:[#allocation5 + $0x498] sm:$0xf]
    %v481 = vld [vmem:[#allocation5 + $0x49c] sm:$0xf]
    %v482 = vld [vmem:[#allocation5 + $0x4a0] sm:$0xf]
    %v483 = vld [vmem:[#allocation5 + $0x4a4] sm:$0xf]
    %v484 = vld [vmem:[#allocation5 + $0x4a8] sm:$0xf]
    %v485 = vld [vmem:[#allocation5 + $0x4ac] sm:$0xf]
    %v486 = vld [vmem:[#allocation5 + $0x4b0] sm:$0xf]
    %v487 = vld [vmem:[#allocation5 + $0x4b4] sm:$0xf]
    %v488 = vld [vmem:[#allocation5 + $0x4b8] sm:$0xf]
    %v489 = vld [vmem:[#allocation5 + $0x4bc] sm:$0xf]
    %v490 = vld [vmem:[#allocation5 + $0x4c0] sm:$0xf]
    %v491 = vld [vmem:[#allocation5 + $0x4c4] sm:$0xf]
    %v492 = vld [vmem:[#allocation5 + $0x4c8] sm:$0xf]
    %v493 = vld [vmem:[#allocation5 + $0x4cc] sm:$0xf]
    %v494 = vld [vmem:[#allocation5 + $0x4d0] sm:$0xf]
    %v495 = vld [vmem:[#allocation5 + $0x4d4] sm:$0xf]
    %v496 = vld [vmem:[#allocation5 + $0x4d8] sm:$0xf]
    %v497 = vld [vmem:[#allocation5 + $0x4dc] sm:$0xf]
    %v498 = vld [vmem:[#allocation5 + $0x4e0] sm:$0xf]
    %v499 = vld [vmem:[#allocation5 + $0x4e4] sm:$0xf]
    %v500 = vld [vmem:[#allocation5 + $0x4e8] sm:$0xf]
    %v501 = vld [vmem:[#allocation5 + $0x4ec] sm:$0xf]
    %v502 = vld [vmem:[#allocation5 + $0x4f0] sm:$0xf]
    %v503 = vld [vmem:[#allocation5 + $0x4f4] sm:$0xf]
    %v504 = vld [vmem:[#allocation5 + $0x4f8] sm:$0xf]
    %v505 = vld [vmem:[#allocation5 + $0x4fc] sm:$0xf]
    %v506 = vld [vmem:[#allocation5 + $0x500] sm:$0xf]
    %v507 = vld [vmem:[#allocation5 + $0x504] sm:$0xf]
    %v508 = vld [vmem:[#allocation5 + $0x508] sm:$0xf]
    %v509 = vld [vmem:[#allocation5 + $0x50c] sm:$0xf]
    %v510 = vld [vmem:[#allocation5 + $0x510] sm:$0xf]
    %v511 = vld [vmem:[#allocation5 + $0x514] sm:$0xf]
    %v512 = vld [vmem:[#allocation5 + $0x518] sm:$0xf]
    %v513 = vld [vmem:[#allocation5 + $0x51c] sm:$0xf]
    %v514 = vld [vmem:[#allocation5 + $0x520] sm:$0xf]
    %v515 = vld [vmem:[#allocation5 + $0x524] sm:$0xf]
    %v516 = vld [vmem:[#allocation5 + $0x528] sm:$0xf]
    %v517 = vld [vmem:[#allocation5 + $0x52c] sm:$0xf]
    %v518 = vld [vmem:[#allocation5 + $0x530] sm:$0xf]
    %v519 = vld [vmem:[#allocation5 + $0x534] sm:$0xf]
    %v520 = vld [vmem:[#allocation5 + $0x538] sm:$0xf]
    %v521 = vld [vmem:[#allocation5 + $0x53c] sm:$0xf]
    %v522 = vld [vmem:[#allocation5 + $0x540] sm:$0xf]
    %v523 = vld [vmem:[#allocation5 + $0x544] sm:$0xf]
    %v524 = vld [vmem:[#allocation5 + $0x548] sm:$0xf]
    %v525 = vld [vmem:[#allocation5 + $0x54c] sm:$0xf]
    %v526 = vld [vmem:[#allocation5 + $0x550] sm:$0xf]
    %v527 = vld [vmem:[#allocation5 + $0x554] sm:$0xf]
    %v528 = vld [vmem:[#allocation5 + $0x558] sm:$0xf]
    %v529 = vld [vmem:[#allocation5 + $0x55c] sm:$0xf]
    %v530 = vld [vmem:[#allocation5 + $0x560] sm:$0xf]
    %v531 = vld [vmem:[#allocation5 + $0x564] sm:$0xf]
    %v532 = vld [vmem:[#allocation5 + $0x568] sm:$0xf]
    %v533 = vld [vmem:[#allocation5 + $0x56c] sm:$0xf]
    %v534 = vld [vmem:[#allocation5 + $0x570] sm:$0xf]
    %v535 = vld [vmem:[#allocation5 + $0x574] sm:$0xf]
    %v536 = vld [vmem:[#allocation5 + $0x578] sm:$0xf]
    %v537 = vld [vmem:[#allocation5 + $0x57c] sm:$0xf]
    %v538 = vld [vmem:[#allocation5 + $0x580] sm:$0xf]
    %v539 = vld [vmem:[#allocation5 + $0x584] sm:$0xf]
    %v540 = vld [vmem:[#allocation5 + $0x588] sm:$0xf]
    %v541 = vld [vmem:[#allocation5 + $0x58c] sm:$0xf]
    %v542 = vld [vmem:[#allocation5 + $0x590] sm:$0xf]
    %v543 = vld [vmem:[#allocation5 + $0x594] sm:$0xf]
    %v544 = vld [vmem:[#allocation5 + $0x598] sm:$0xf]
    %v545 = vld [vmem:[#allocation5 + $0x59c] sm:$0xf]
    %v546 = vld [vmem:[#allocation5 + $0x5a0] sm:$0xf]
    %v547 = vld [vmem:[#allocation5 + $0x5a4] sm:$0xf]
    %v548 = vld [vmem:[#allocation5 + $0x5a8] sm:$0xf]
    %v549 = vld [vmem:[#allocation5 + $0x5ac] sm:$0xf]
    %v550 = vld [vmem:[#allocation5 + $0x5b0] sm:$0xf]
    %v551 = vld [vmem:[#allocation5 + $0x5b4] sm:$0xf]
    %v552 = vld [vmem:[#allocation5 + $0x5b8] sm:$0xf]
    %v553 = vld [vmem:[#allocation5 + $0x5bc] sm:$0xf]
    %v554 = vld [vmem:[#allocation5 + $0x5c0] sm:$0xf]
    %v555 = vld [vmem:[#allocation5 + $0x5c4] sm:$0xf]
    %v556 = vld [vmem:[#allocation5 + $0x5c8] sm:$0xf]
    %v557 = vld [vmem:[#allocation5 + $0x5cc] sm:$0xf]
    %v558 = vld [vmem:[#allocation5 + $0x5d0] sm:$0xf]
    %v559 = vld [vmem:[#allocation5 + $0x5d4] sm:$0xf]
    %v560 = vld [vmem:[#allocation5 + $0x5d8] sm:$0xf]
    %v561 = vld [vmem:[#allocation5 + $0x5dc] sm:$0xf]
    %v562 = vld [vmem:[#allocation5 + $0x5e0] sm:$0xf]
    %v563 = vld [vmem:[#allocation5 + $0x5e4] sm:$0xf]
    %v564 = vld [vmem:[#allocation5 + $0x5e8] sm:$0xf]
    %v565 = vld [vmem:[#allocation5 + $0x5ec] sm:$0xf]
    %v566 = vld [vmem:[#allocation5 + $0x5f0] sm:$0xf]
    %v567 = vld [vmem:[#allocation5 + $0x5f4] sm:$0xf]
    %v568 = vld [vmem:[#allocation5 + $0x5f8] sm:$0xf]
    %v569 = vld [vmem:[#allocation5 + $0x5fc] sm:$0xf]
    %v570 = vld [vmem:[#allocation5 + $0x600] sm:$0xf]
    %v571 = vld [vmem:[#allocation5 + $0x604] sm:$0xf]
    %v572 = vld [vmem:[#allocation5 + $0x608] sm:$0xf]
    %v573 = vld [vmem:[#allocation5 + $0x60c] sm:$0xf]
    %v574 = vld [vmem:[#allocation5 + $0x610] sm:$0xf]
    %v575 = vld [vmem:[#allocation5 + $0x614] sm:$0xf]
    %v576 = vld [vmem:[#allocation5 + $0x618] sm:$0xf]
    %v577 = vld [vmem:[#allocation5 + $0x61c] sm:$0xf]
    %v578 = vld [vmem:[#allocation5 + $0x620] sm:$0xf]
    %v579 = vld [vmem:[#allocation5 + $0x624] sm:$0xf]
    %v580 = vld [vmem:[#allocation5 + $0x628] sm:$0xf]
    %v581 = vld [vmem:[#allocation5 + $0x62c] sm:$0xf]
    %v582 = vld [vmem:[#allocation5 + $0x630] sm:$0xf]
    %v583 = vld [vmem:[#allocation5 + $0x634] sm:$0xf]
    %v584 = vld [vmem:[#allocation5 + $0x638] sm:$0xf]
    %v585 = vld [vmem:[#allocation5 + $0x63c] sm:$0xf]
    %v586 = vld [vmem:[#allocation5 + $0x640] sm:$0xf]
    %v587 = vld [vmem:[#allocation5 + $0x644] sm:$0xf]
    %v588 = vld [vmem:[#allocation5 + $0x648] sm:$0xf]
    %v589 = vld [vmem:[#allocation5 + $0x64c] sm:$0xf]
    %v590 = vld [vmem:[#allocation5 + $0x650] sm:$0xf]
    %v591 = vld [vmem:[#allocation5 + $0x654] sm:$0xf]
    %v592 = vld [vmem:[#allocation5 + $0x658] sm:$0xf]
    %v593 = vld [vmem:[#allocation5 + $0x65c] sm:$0xf]
    %v594 = vld [vmem:[#allocation5 + $0x660] sm:$0xf]
    %v595 = vld [vmem:[#allocation5 + $0x664] sm:$0xf]
    %v596 = vld [vmem:[#allocation5 + $0x668] sm:$0xf]
    %v597 = vld [vmem:[#allocation5 + $0x66c] sm:$0xf]
    %v598 = vld [vmem:[#allocation5 + $0x670] sm:$0xf]
    %v599 = vld [vmem:[#allocation5 + $0x674] sm:$0xf]
    %v600 = vld [vmem:[#allocation5 + $0x678] sm:$0xf]
    %v601 = vld [vmem:[#allocation5 + $0x67c] sm:$0xf]
    %v602 = vld [vmem:[#allocation5 + $0x680] sm:$0xf]
    %v603 = vld [vmem:[#allocation5 + $0x684] sm:$0xf]
    %v604 = vld [vmem:[#allocation5 + $0x688] sm:$0xf]
    %v605 = vld [vmem:[#allocation5 + $0x68c] sm:$0xf]
    %v606 = vld [vmem:[#allocation5 + $0x690] sm:$0xf]
    %v607 = vld [vmem:[#allocation5 + $0x694] sm:$0xf]
    %v608 = vld [vmem:[#allocation5 + $0x698] sm:$0xf]
    %v609 = vld [vmem:[#allocation5 + $0x69c] sm:$0xf]
    %v610 = vld [vmem:[#allocation5 + $0x6a0] sm:$0xf]
    %v611 = vld [vmem:[#allocation5 + $0x6a4] sm:$0xf]
    %v612 = vld [vmem:[#allocation5 + $0x6a8] sm:$0xf]
    %v613 = vld [vmem:[#allocation5 + $0x6ac] sm:$0xf]
    %v614 = vld [vmem:[#allocation5 + $0x6b0] sm:$0xf]
    %v615 = vld [vmem:[#allocation5 + $0x6b4] sm:$0xf]
    %v616 = vld [vmem:[#allocation5 + $0x6b8] sm:$0xf]
    %v617 = vld [vmem:[#allocation5 + $0x6bc] sm:$0xf]
    %v618 = vld [vmem:[#allocation5 + $0x6c0] sm:$0xf]
    %v619 = vld [vmem:[#allocation5 + $0x6c4] sm:$0xf]
    %v620 = vld [vmem:[#allocation5 + $0x6c8] sm:$0xf]
    %v621 = vld [vmem:[#allocation5 + $0x6cc] sm:$0xf]
    %v622 = vld [vmem:[#allocation5 + $0x6d0] sm:$0xf]
    %v623 = vld [vmem:[#allocation5 + $0x6d4] sm:$0xf]
    %v624 = vld [vmem:[#allocation5 + $0x6d8] sm:$0xf]
    %v625 = vld [vmem:[#allocation5 + $0x6dc] sm:$0xf]
    %v626 = vld [vmem:[#allocation5 + $0x6e0] sm:$0xf]
    %v627 = vld [vmem:[#allocation5 + $0x6e4] sm:$0xf]
    %v628 = vld [vmem:[#allocation5 + $0x6e8] sm:$0xf]
    %v629 = vld [vmem:[#allocation5 + $0x6ec] sm:$0xf]
    %v630 = vld [vmem:[#allocation5 + $0x6f0] sm:$0xf]
    %v631 = vld [vmem:[#allocation5 + $0x6f4] sm:$0xf]
    %v632 = vld [vmem:[#allocation5 + $0x6f8] sm:$0xf]
    %v633 = vld [vmem:[#allocation5 + $0x6fc] sm:$0xf]
    %v634 = vld [vmem:[#allocation5 + $0x700] sm:$0xf]
    %v635 = vld [vmem:[#allocation5 + $0x704] sm:$0xf]
    %v636 = vld [vmem:[#allocation5 + $0x708] sm:$0xf]
    %v637 = vld [vmem:[#allocation5 + $0x70c] sm:$0xf]
    %v638 = vld [vmem:[#allocation5 + $0x710] sm:$0xf]
    %v639 = vld [vmem:[#allocation5 + $0x714] sm:$0xf]
    %v640 = vld [vmem:[#allocation5 + $0x718] sm:$0xf]
    %v641 = vld [vmem:[#allocation5 + $0x71c] sm:$0xf]
    %v642 = vld [vmem:[#allocation5 + $0x720] sm:$0xf]
    %v643 = vld [vmem:[#allocation5 + $0x724] sm:$0xf]
    %v644 = vld [vmem:[#allocation5 + $0x728] sm:$0xf]
    %v645 = vld [vmem:[#allocation5 + $0x72c] sm:$0xf]
    %v646 = vld [vmem:[#allocation5 + $0x730] sm:$0xf]
    %v647 = vld [vmem:[#allocation5 + $0x734] sm:$0xf]
    %v648 = vld [vmem:[#allocation5 + $0x738] sm:$0xf]
    %v649 = vld [vmem:[#allocation5 + $0x73c] sm:$0xf]
    %v650 = vld [vmem:[#allocation5 + $0x740] sm:$0xf]
    %v651 = vld [vmem:[#allocation5 + $0x744] sm:$0xf]
    %v652 = vld [vmem:[#allocation5 + $0x748] sm:$0xf]
    %v653 = vld [vmem:[#allocation5 + $0x74c] sm:$0xf]
    %v654 = vld [vmem:[#allocation5 + $0x750] sm:$0xf]
    %v655 = vld [vmem:[#allocation5 + $0x754] sm:$0xf]
    %v656 = vld [vmem:[#allocation5 + $0x758] sm:$0xf]
    %v657 = vld [vmem:[#allocation5 + $0x75c] sm:$0xf]
    %v658 = vld [vmem:[#allocation5 + $0x760] sm:$0xf]
    %v659 = vld [vmem:[#allocation5 + $0x764] sm:$0xf]
    %v660 = vld [vmem:[#allocation5 + $0x768] sm:$0xf]
    %v661 = vld [vmem:[#allocation5 + $0x76c] sm:$0xf]
    %v662 = vld [vmem:[#allocation5 + $0x770] sm:$0xf]
    %v663 = vld [vmem:[#allocation5 + $0x774] sm:$0xf]
    %v664 = vld [vmem:[#allocation5 + $0x778] sm:$0xf]
    %v665 = vld [vmem:[#allocation5 + $0x77c] sm:$0xf]
    %v666 = vld [vmem:[#allocation5 + $0x780] sm:$0xf]
    %v667 = vld [vmem:[#allocation5 + $0x784] sm:$0xf]
    %v668 = vld [vmem:[#allocation5 + $0x788] sm:$0xf]
    %v669 = vld [vmem:[#allocation5 + $0x78c] sm:$0xf]
    %v670 = vld [vmem:[#allocation5 + $0x790] sm:$0xf]
    %v671 = vld [vmem:[#allocation5 + $0x794] sm:$0xf]
    %v672 = vld [vmem:[#allocation5 + $0x798] sm:$0xf]
    %v673 = vld [vmem:[#allocation5 + $0x79c] sm:$0xf]
    %v674 = vld [vmem:[#allocation5 + $0x7a0] sm:$0xf]
    %v675 = vld [vmem:[#allocation5 + $0x7a4] sm:$0xf]
    %v676 = vld [vmem:[#allocation5 + $0x7a8] sm:$0xf]
    %v677 = vld [vmem:[#allocation5 + $0x7ac] sm:$0xf]
    %v678 = vld [vmem:[#allocation5 + $0x7b0] sm:$0xf]
    %v679 = vld [vmem:[#allocation5 + $0x7b4] sm:$0xf]
    %v680 = vld [vmem:[#allocation5 + $0x7b8] sm:$0xf]
    %v681 = vld [vmem:[#allocation5 + $0x7bc] sm:$0xf]
    %v682 = vld [vmem:[#allocation5 + $0x7c0] sm:$0xf]
    %v683 = vld [vmem:[#allocation5 + $0x7c4] sm:$0xf]
    %v684 = vld [vmem:[#allocation5 + $0x7c8] sm:$0xf]
    %v685 = vld [vmem:[#allocation5 + $0x7cc] sm:$0xf]
    %v686 = vld [vmem:[#allocation5 + $0x7d0] sm:$0xf]
    %v687 = vld [vmem:[#allocation5 + $0x7d4] sm:$0xf]
    %v688 = vld [vmem:[#allocation5 + $0x7d8] sm:$0xf]
    %v689 = vld [vmem:[#allocation5 + $0x7dc] sm:$0xf]
    %v690 = vld [vmem:[#allocation5 + $0x7e0] sm:$0xf]
    %v691 = vld [vmem:[#allocation5 + $0x7e4] sm:$0xf]
    %v692 = vld [vmem:[#allocation5 + $0x7e8] sm:$0xf]
    %v693 = vld [vmem:[#allocation5 + $0x7ec] sm:$0xf]
    %v694 = vld [vmem:[#allocation5 + $0x7f0] sm:$0xf]
    %v695 = vld [vmem:[#allocation5 + $0x7f4] sm:$0xf]
    %v696 = vld [vmem:[#allocation5 + $0x7f8] sm:$0xf]
    %v697 = vld [vmem:[#allocation5 + $0x7fc] sm:$0xf]
    %v698 = vld [vmem:[#allocation5 + $0x800] sm:$0xf]
    %v699 = vld [vmem:[#allocation5 + $0x804] sm:$0xf]
    %v700 = vld [vmem:[#allocation5 + $0x808] sm:$0xf]
    %v701 = vld [vmem:[#allocation5 + $0x80c] sm:$0xf]
    %v702 = vld [vmem:[#allocation5 + $0x810] sm:$0xf]
    %v703 = vld [vmem:[#allocation5 + $0x814] sm:$0xf]
    %v704 = vld [vmem:[#allocation5 + $0x818] sm:$0xf]
    %v705 = vld [vmem:[#allocation5 + $0x81c] sm:$0xf]
    %v706 = vld [vmem:[#allocation5 + $0x820] sm:$0xf]
    %v707 = vld [vmem:[#allocation5 + $0x824] sm:$0xf]
    %v708 = vld [vmem:[#allocation5 + $0x828] sm:$0xf]
    %v709 = vld [vmem:[#allocation5 + $0x82c] sm:$0xf]
    %v710 = vld [vmem:[#allocation5 + $0x830] sm:$0xf]
    %v711 = vld [vmem:[#allocation5 + $0x834] sm:$0xf]
    %v712 = vld [vmem:[#allocation5 + $0x838] sm:$0xf]
    %v713 = vld [vmem:[#allocation5 + $0x83c] sm:$0xf]
    %v714 = vld [vmem:[#allocation5 + $0x840] sm:$0xf]
    %v715 = vld [vmem:[#allocation5 + $0x844] sm:$0xf]
    %v716 = vld [vmem:[#allocation5 + $0x848] sm:$0xf]
    %v717 = vld [vmem:[#allocation5 + $0x84c] sm:$0xf]
    %v718 = vld [vmem:[#allocation5 + $0x850] sm:$0xf]
    %v719 = vld [vmem:[#allocation5 + $0x854] sm:$0xf]
    %v720 = vld [vmem:[#allocation5 + $0x858] sm:$0xf]
    %v721 = vld [vmem:[#allocation5 + $0x85c] sm:$0xf]
    %v722 = vld [vmem:[#allocation5 + $0x860] sm:$0xf]
    %v723 = vld [vmem:[#allocation5 + $0x864] sm:$0xf]
    %v724 = vld [vmem:[#allocation5 + $0x868] sm:$0xf]
    %v725 = vld [vmem:[#allocation5 + $0x86c] sm:$0xf]
    %v726 = vld [vmem:[#allocation5 + $0x870] sm:$0xf]
    %v727 = vld [vmem:[#allocation5 + $0x874] sm:$0xf]
    %v728 = vld [vmem:[#allocation5 + $0x878] sm:$0xf]
    %v729 = vld [vmem:[#allocation5 + $0x87c] sm:$0xf]
    %v730 = vld [vmem:[#allocation5 + $0x880] sm:$0xf]
    %v731 = vld [vmem:[#allocation5 + $0x884] sm:$0xf]
    %v732 = vld [vmem:[#allocation5 + $0x888] sm:$0xf]
    %v733 = vld [vmem:[#allocation5 + $0x88c] sm:$0xf]
    %v734 = vld [vmem:[#allocation5 + $0x890] sm:$0xf]
    %v735 = vld [vmem:[#allocation5 + $0x894] sm:$0xf]
    %v736 = vld [vmem:[#allocation5 + $0x898] sm:$0xf]
    %v737 = vld [vmem:[#allocation5 + $0x89c] sm:$0xf]
    %v738 = vld [vmem:[#allocation5 + $0x8a0] sm:$0xf]
    %v739 = vld [vmem:[#allocation5 + $0x8a4] sm:$0xf]
    %v740 = vld [vmem:[#allocation5 + $0x8a8] sm:$0xf]
    %v741 = vld [vmem:[#allocation5 + $0x8ac] sm:$0xf]
    %v742 = vld [vmem:[#allocation5 + $0x8b0] sm:$0xf]
    %v743 = vld [vmem:[#allocation5 + $0x8b4] sm:$0xf]
    %v744 = vld [vmem:[#allocation5 + $0x8b8] sm:$0xf]
    %v745 = vld [vmem:[#allocation5 + $0x8bc] sm:$0xf]
    %v746 = vld [vmem:[#allocation5 + $0x8c0] sm:$0xf]
    %v747 = vld [vmem:[#allocation5 + $0x8c4] sm:$0xf]
    %v748 = vld [vmem:[#allocation5 + $0x8c8] sm:$0xf]
    %v749 = vld [vmem:[#allocation5 + $0x8cc] sm:$0xf]
    %v750 = vld [vmem:[#allocation5 + $0x8d0] sm:$0xf]
    %v751 = vld [vmem:[#allocation5 + $0x8d4] sm:$0xf]
    %v752 = vld [vmem:[#allocation5 + $0x8d8] sm:$0xf]
    %v753 = vld [vmem:[#allocation5 + $0x8dc] sm:$0xf]
    %v754 = vld [vmem:[#allocation5 + $0x8e0] sm:$0xf]
    %v755 = vld [vmem:[#allocation5 + $0x8e4] sm:$0xf]
    %v756 = vld [vmem:[#allocation5 + $0x8e8] sm:$0xf]
    %v757 = vld [vmem:[#allocation5 + $0x8ec] sm:$0xf]
    %v758 = vld [vmem:[#allocation5 + $0x8f0] sm:$0xf]
    %v759 = vld [vmem:[#allocation5 + $0x8f4] sm:$0xf]
    %v760 = vld [vmem:[#allocation5 + $0x8f8] sm:$0xf]
    %v761 = vld [vmem:[#allocation5 + $0x8fc] sm:$0xf]
    %v762 = vld [vmem:[#allocation5 + $0x900] sm:$0xf]
    %v763 = vld [vmem:[#allocation5 + $0x904] sm:$0xf]
    %v764 = vld [vmem:[#allocation5 + $0x908] sm:$0xf]
    %v765 = vld [vmem:[#allocation5 + $0x90c] sm:$0xf]
    %v766 = vld [vmem:[#allocation5 + $0x910] sm:$0xf]
    %v767 = vld [vmem:[#allocation5 + $0x914] sm:$0xf]
    %v768 = vld [vmem:[#allocation5 + $0x918] sm:$0xf]
    %v769 = vld [vmem:[#allocation5 + $0x91c] sm:$0xf]
    %v770 = vld [vmem:[#allocation5 + $0x920] sm:$0xf]
    %v771 = vld [vmem:[#allocation5 + $0x924] sm:$0xf]
    %v772 = vld [vmem:[#allocation5 + $0x928] sm:$0xf]
    %v773 = vld [vmem:[#allocation5 + $0x92c] sm:$0xf]
    %v774 = vld [vmem:[#allocation5 + $0x930] sm:$0xf]
    %v775 = vld [vmem:[#allocation5 + $0x934] sm:$0xf]
    %v776 = vld [vmem:[#allocation5 + $0x938] sm:$0xf]
    %v777 = vld [vmem:[#allocation5 + $0x93c] sm:$0xf]
    %v778 = vld [vmem:[#allocation5 + $0x940] sm:$0xf]
    %v779 = vld [vmem:[#allocation5 + $0x944] sm:$0xf]
    %v780 = vld [vmem:[#allocation5 + $0x948] sm:$0xf]
    %v781 = vld [vmem:[#allocation5 + $0x94c] sm:$0xf]
    %v782 = vld [vmem:[#allocation5 + $0x950] sm:$0xf]
    %v783 = vld [vmem:[#allocation5 + $0x954] sm:$0xf]
    %v784 = vld [vmem:[#allocation5 + $0x958] sm:$0xf]
    %v785 = vld [vmem:[#allocation5 + $0x95c] sm:$0xf]
    %v786 = vld [vmem:[#allocation5 + $0x960] sm:$0xf]
    %v787 = vld [vmem:[#allocation5 + $0x964] sm:$0xf]
    %v788 = vld [vmem:[#allocation5 + $0x968] sm:$0xf]
    %v789 = vld [vmem:[#allocation5 + $0x96c] sm:$0xf]
    %v790 = vld [vmem:[#allocation5 + $0x970] sm:$0xf]
    %v791 = vld [vmem:[#allocation5 + $0x974] sm:$0xf]
    %v792 = vld [vmem:[#allocation5 + $0x978] sm:$0xf]
    %v793 = vld [vmem:[#allocation5 + $0x97c] sm:$0xf]
    %v794 = vld [vmem:[#allocation5 + $0x980] sm:$0xf]
    %v795 = vld [vmem:[#allocation5 + $0x984] sm:$0xf]
    %v796 = vld [vmem:[#allocation5 + $0x988] sm:$0xf]
    %v797 = vld [vmem:[#allocation5 + $0x98c] sm:$0xf]
    %v798 = vld [vmem:[#allocation5 + $0x990] sm:$0xf]
    %v799 = vld [vmem:[#allocation5 + $0x994] sm:$0xf]
    %v800 = vld [vmem:[#allocation5 + $0x998] sm:$0xf]
    %v801 = vld [vmem:[#allocation5 + $0x99c] sm:$0xf]
    %v802 = vld [vmem:[#allocation5 + $0x9a0] sm:$0xf]
    %v803 = vld [vmem:[#allocation5 + $0x9a4] sm:$0xf]
    %v804 = vld [vmem:[#allocation5 + $0x9a8] sm:$0xf]
    %v805 = vld [vmem:[#allocation5 + $0x9ac] sm:$0xf]
    %v806 = vld [vmem:[#allocation5 + $0x9b0] sm:$0xf]
    %v807 = vld [vmem:[#allocation5 + $0x9b4] sm:$0xf]
    %v808 = vld [vmem:[#allocation5 + $0x9b8] sm:$0xf]
    %v809 = vld [vmem:[#allocation5 + $0x9bc] sm:$0xf]
    %v810 = vld [vmem:[#allocation5 + $0x9c0] sm:$0xf]
    %v811 = vld [vmem:[#allocation5 + $0x9c4] sm:$0xf]
    %v812 = vld [vmem:[#allocation5 + $0x9c8] sm:$0xf]
    %v813 = vld [vmem:[#allocation5 + $0x9cc] sm:$0xf]
    %v814 = vld [vmem:[#allocation5 + $0x9d0] sm:$0xf]
    %v815 = vld [vmem:[#allocation5 + $0x9d4] sm:$0xf]
    %v816 = vld [vmem:[#allocation5 + $0x9d8] sm:$0xf]
    %v817 = vld [vmem:[#allocation5 + $0x9dc] sm:$0xf]
    %v818 = vld [vmem:[#allocation5 + $0x9e0] sm:$0xf]
    %v819 = vld [vmem:[#allocation5 + $0x9e4] sm:$0xf]
    %v820 = vld [vmem:[#allocation5 + $0x9e8] sm:$0xf]
    %v821 = vld [vmem:[#allocation5 + $0x9ec] sm:$0xf]
    %v822 = vld [vmem:[#allocation5 + $0x9f0] sm:$0xf]
    %v823 = vld [vmem:[#allocation5 + $0x9f4] sm:$0xf]
    %v824 = vld [vmem:[#allocation5 + $0x9f8] sm:$0xf]
    %v825 = vld [vmem:[#allocation5 + $0x9fc] sm:$0xf]
    %v826 = vld [vmem:[#allocation5 + $0xa00] sm:$0xf]
    %v827 = vld [vmem:[#allocation5 + $0xa04] sm:$0xf]
    %v828 = vld [vmem:[#allocation5 + $0xa08] sm:$0xf]
    %v829 = vld [vmem:[#allocation5 + $0xa0c] sm:$0xf]
    %v830 = vld [vmem:[#allocation5 + $0xa10] sm:$0xf]
    %v831 = vld [vmem:[#allocation5 + $0xa14] sm:$0xf]
    %v832 = vld [vmem:[#allocation5 + $0xa18] sm:$0xf]
    %v833 = vld [vmem:[#allocation5 + $0xa1c] sm:$0xf]
    %v834 = vld [vmem:[#allocation5 + $0xa20] sm:$0xf]
    %v835 = vld [vmem:[#allocation5 + $0xa24] sm:$0xf]
    %v836 = vld [vmem:[#allocation5 + $0xa28] sm:$0xf]
    %v837 = vld [vmem:[#allocation5 + $0xa2c] sm:$0xf]
    %v838 = vld [vmem:[#allocation5 + $0xa30] sm:$0xf]
    %v839 = vld [vmem:[#allocation5 + $0xa34] sm:$0xf]
    %v840 = vld [vmem:[#allocation5 + $0xa38] sm:$0xf]
    %v841 = vld [vmem:[#allocation5 + $0xa3c] sm:$0xf]
    %v842 = vld [vmem:[#allocation5 + $0xa40] sm:$0xf]
    %v843 = vld [vmem:[#allocation5 + $0xa44] sm:$0xf]
    %v844 = vld [vmem:[#allocation5 + $0xa48] sm:$0xf]
    %v845 = vld [vmem:[#allocation5 + $0xa4c] sm:$0xf]
    %v846 = vld [vmem:[#allocation5 + $0xa50] sm:$0xf]
    %v847 = vld [vmem:[#allocation5 + $0xa54] sm:$0xf]
    %v848 = vld [vmem:[#allocation5 + $0xa58] sm:$0xf]
    %v849 = vld [vmem:[#allocation5 + $0xa5c] sm:$0xf]
    %v850 = vld [vmem:[#allocation5 + $0xa60] sm:$0xf]
    %v851 = vld [vmem:[#allocation5 + $0xa64] sm:$0xf]
    %v852 = vld [vmem:[#allocation5 + $0xa68] sm:$0xf]
    %v853 = vld [vmem:[#allocation5 + $0xa6c] sm:$0xf]
    %v854 = vld [vmem:[#allocation5 + $0xa70] sm:$0xf]
    %v855 = vld [vmem:[#allocation5 + $0xa74] sm:$0xf]
    %v856 = vld [vmem:[#allocation5 + $0xa78] sm:$0xf]
    %v857 = vld [vmem:[#allocation5 + $0xa7c] sm:$0xf]
    %v858 = vld [vmem:[#allocation5 + $0xa80] sm:$0xf]
    %v859 = vld [vmem:[#allocation5 + $0xa84] sm:$0xf]
    %v860 = vld [vmem:[#allocation5 + $0xa88] sm:$0xf]
    %v861 = vld [vmem:[#allocation5 + $0xa8c] sm:$0xf]
    %v862 = vld [vmem:[#allocation5 + $0xa90] sm:$0xf]
    %v863 = vld [vmem:[#allocation5 + $0xa94] sm:$0xf]
    %v864 = vld [vmem:[#allocation5 + $0xa98] sm:$0xf]
    %v865 = vld [vmem:[#allocation5 + $0xa9c] sm:$0xf]
    %v866 = vld [vmem:[#allocation5 + $0xaa0] sm:$0xf]
    %v867 = vld [vmem:[#allocation5 + $0xaa4] sm:$0xf]
    %v868 = vld [vmem:[#allocation5 + $0xaa8] sm:$0xf]
    %v869 = vld [vmem:[#allocation5 + $0xaac] sm:$0xf]
    %v870 = vld [vmem:[#allocation5 + $0xab0] sm:$0xf]
    %v871 = vld [vmem:[#allocation5 + $0xab4] sm:$0xf]
    %v872 = vld [vmem:[#allocation5 + $0xab8] sm:$0xf]
    %v873 = vld [vmem:[#allocation5 + $0xabc] sm:$0xf]
    %v874 = vld [vmem:[#allocation5 + $0xac0] sm:$0xf]
    %v875 = vld [vmem:[#allocation5 + $0xac4] sm:$0xf]
    %v876 = vld [vmem:[#allocation5 + $0xac8] sm:$0xf]
    %v877 = vld [vmem:[#allocation5 + $0xacc] sm:$0xf]
    %v878 = vld [vmem:[#allocation5 + $0xad0] sm:$0xf]
    %v879 = vld [vmem:[#allocation5 + $0xad4] sm:$0xf]
    %v880 = vld [vmem:[#allocation5 + $0xad8] sm:$0xf]
    %v881 = vld [vmem:[#allocation5 + $0xadc] sm:$0xf]
    %v882 = vld [vmem:[#allocation5 + $0xae0] sm:$0xf]
    %v883 = vld [vmem:[#allocation5 + $0xae4] sm:$0xf]
    %v884 = vld [vmem:[#allocation5 + $0xae8] sm:$0xf]
    %v885 = vld [vmem:[#allocation5 + $0xaec] sm:$0xf]
    %v886 = vld [vmem:[#allocation5 + $0xaf0] sm:$0xf]
    %v887 = vld [vmem:[#allocation5 + $0xaf4] sm:$0xf]
    %v888 = vld [vmem:[#allocation5 + $0xaf8] sm:$0xf]
    %v889 = vld [vmem:[#allocation5 + $0xafc] sm:$0xf]
    %v890 = vld [vmem:[#allocation5 + $0xb00] sm:$0xf]
    %v891 = vld [vmem:[#allocation5 + $0xb04] sm:$0xf]
    %v892 = vld [vmem:[#allocation5 + $0xb08] sm:$0xf]
    %v893 = vld [vmem:[#allocation5 + $0xb0c] sm:$0xf]
    %v894 = vld [vmem:[#allocation5 + $0xb10] sm:$0xf]
    %v895 = vld [vmem:[#allocation5 + $0xb14] sm:$0xf]
    %v896 = vld [vmem:[#allocation5 + $0xb18] sm:$0xf]
    %v897 = vld [vmem:[#allocation5 + $0xb1c] sm:$0xf]
    %v898 = vld [vmem:[#allocation5 + $0xb20] sm:$0xf]
    %v899 = vld [vmem:[#allocation5 + $0xb24] sm:$0xf]
    %v900 = vld [vmem:[#allocation5 + $0xb28] sm:$0xf]
    %v901 = vld [vmem:[#allocation5 + $0xb2c] sm:$0xf]
    %v902 = vld [vmem:[#allocation5 + $0xb30] sm:$0xf]
    %v903 = vld [vmem:[#allocation5 + $0xb34] sm:$0xf]
    %v904 = vld [vmem:[#allocation5 + $0xb38] sm:$0xf]
    %v905 = vld [vmem:[#allocation5 + $0xb3c] sm:$0xf]
    %v906 = vld [vmem:[#allocation5 + $0xb40] sm:$0xf]
    %v907 = vld [vmem:[#allocation5 + $0xb44] sm:$0xf]
    %v908 = vld [vmem:[#allocation5 + $0xb48] sm:$0xf]
    %v909 = vld [vmem:[#allocation5 + $0xb4c] sm:$0xf]
    %v910 = vld [vmem:[#allocation5 + $0xb50] sm:$0xf]
    %v911 = vld [vmem:[#allocation5 + $0xb54] sm:$0xf]
    %v912 = vld [vmem:[#allocation5 + $0xb58] sm:$0xf]
    %v913 = vld [vmem:[#allocation5 + $0xb5c] sm:$0xf]
    %v914 = vld [vmem:[#allocation5 + $0xb60] sm:$0xf]
    %v915 = vld [vmem:[#allocation5 + $0xb64] sm:$0xf]
    %v916 = vld [vmem:[#allocation5 + $0xb68] sm:$0xf]
    %v917 = vld [vmem:[#allocation5 + $0xb6c] sm:$0xf]
    %v918 = vld [vmem:[#allocation5 + $0xb70] sm:$0xf]
    %v919 = vld [vmem:[#allocation5 + $0xb74] sm:$0xf]
    %v920 = vld [vmem:[#allocation5 + $0xb78] sm:$0xf]
    %v921 = vld [vmem:[#allocation5 + $0xb7c] sm:$0xf]
    %v922 = vld [vmem:[#allocation5 + $0xb80] sm:$0xf]
    %v923 = vld [vmem:[#allocation5 + $0xb84] sm:$0xf]
    %v924 = vld [vmem:[#allocation5 + $0xb88] sm:$0xf]
    %v925 = vld [vmem:[#allocation5 + $0xb8c] sm:$0xf]
    %v926 = vld [vmem:[#allocation5 + $0xb90] sm:$0xf]
    %v927 = vld [vmem:[#allocation5 + $0xb94] sm:$0xf]
    %v928 = vld [vmem:[#allocation5 + $0xb98] sm:$0xf]
    %v929 = vld [vmem:[#allocation5 + $0xb9c] sm:$0xf]
    %v930 = vld [vmem:[#allocation5 + $0xba0] sm:$0xf]
    %v931 = vld [vmem:[#allocation5 + $0xba4] sm:$0xf]
    %v932 = vld [vmem:[#allocation5 + $0xba8] sm:$0xf]
    %v933 = vld [vmem:[#allocation5 + $0xbac] sm:$0xf]
    %v934 = vld [vmem:[#allocation5 + $0xbb0] sm:$0xf]
    %v935 = vld [vmem:[#allocation5 + $0xbb4] sm:$0xf]
    %v936 = vld [vmem:[#allocation5 + $0xbb8] sm:$0xf]
    %v937 = vld [vmem:[#allocation5 + $0xbbc] sm:$0xf]
    %v938 = vld [vmem:[#allocation5 + $0xbc0] sm:$0xf]
    %v939 = vld [vmem:[#allocation5 + $0xbc4] sm:$0xf]
    %v940 = vld [vmem:[#allocation5 + $0xbc8] sm:$0xf]
    %v941 = vld [vmem:[#allocation5 + $0xbcc] sm:$0xf]
    %v942 = vld [vmem:[#allocation5 + $0xbd0] sm:$0xf]
    %v943 = vld [vmem:[#allocation5 + $0xbd4] sm:$0xf]
    %v944 = vld [vmem:[#allocation5 + $0xbd8] sm:$0xf]
    %v945 = vld [vmem:[#allocation5 + $0xbdc] sm:$0xf]
    %v946 = vld [vmem:[#allocation5 + $0xbe0] sm:$0xf]
    %v947 = vld [vmem:[#allocation5 + $0xbe4] sm:$0xf]
    %v948 = vld [vmem:[#allocation5 + $0xbe8] sm:$0xf]
    %v949 = vld [vmem:[#allocation5 + $0xbec] sm:$0xf]
    %v950 = vld [vmem:[#allocation5 + $0xbf0] sm:$0xf]
    %v951 = vld [vmem:[#allocation5 + $0xbf4] sm:$0xf]
    %v952 = vld [vmem:[#allocation5 + $0xbf8] sm:$0xf]
    %v953 = vld [vmem:[#allocation5 + $0xbfc] sm:$0xf]
    %v954 = vld [vmem:[#allocation5 + $0xc00] sm:$0xf]
    %v955 = vld [vmem:[#allocation5 + $0xc04] sm:$0xf]
    %v956 = vld [vmem:[#allocation5 + $0xc08] sm:$0xf]
    %v957 = vld [vmem:[#allocation5 + $0xc0c] sm:$0xf]
    %v958 = vld [vmem:[#allocation5 + $0xc10] sm:$0xf]
    %v959 = vld [vmem:[#allocation5 + $0xc14] sm:$0xf]
    %v960 = vld [vmem:[#allocation5 + $0xc18] sm:$0xf]
    %v961 = vld [vmem:[#allocation5 + $0xc1c] sm:$0xf]
    %v962 = vld [vmem:[#allocation5 + $0xc20] sm:$0xf]
    %v963 = vld [vmem:[#allocation5 + $0xc24] sm:$0xf]
    %v964 = vld [vmem:[#allocation5 + $0xc28] sm:$0xf]
    %v965 = vld [vmem:[#allocation5 + $0xc2c] sm:$0xf]
    %v966 = vld [vmem:[#allocation5 + $0xc30] sm:$0xf]
    %v967 = vld [vmem:[#allocation5 + $0xc34] sm:$0xf]
    %v968 = vld [vmem:[#allocation5 + $0xc38] sm:$0xf]
    %v969 = vld [vmem:[#allocation5 + $0xc3c] sm:$0xf]
    %v970 = vld [vmem:[#allocation5 + $0xc40] sm:$0xf]
    %v971 = vld [vmem:[#allocation5 + $0xc44] sm:$0xf]
    %v972 = vld [vmem:[#allocation5 + $0xc48] sm:$0xf]
    %v973 = vld [vmem:[#allocation5 + $0xc4c] sm:$0xf]
    %v974 = vld [vmem:[#allocation5 + $0xc50] sm:$0xf]
    %v975 = vld [vmem:[#allocation5 + $0xc54] sm:$0xf]
    %v976 = vld [vmem:[#allocation5 + $0xc58] sm:$0xf]
    %v977 = vld [vmem:[#allocation5 + $0xc5c] sm:$0xf]
    %v978 = vld [vmem:[#allocation5 + $0xc60] sm:$0xf]
    %v979 = vld [vmem:[#allocation5 + $0xc64] sm:$0xf]
    %v980 = vld [vmem:[#allocation5 + $0xc68] sm:$0xf]
    %v981 = vld [vmem:[#allocation5 + $0xc6c] sm:$0xf]
    %v982 = vld [vmem:[#allocation5 + $0xc70] sm:$0xf]
    %v983 = vld [vmem:[#allocation5 + $0xc74] sm:$0xf]
    %v984 = vld [vmem:[#allocation5 + $0xc78] sm:$0xf]
    %v985 = vld [vmem:[#allocation5 + $0xc7c] sm:$0xf]
    %v986 = vld [vmem:[#allocation5 + $0xc80] sm:$0xf]
    %v987 = vld [vmem:[#allocation5 + $0xc84] sm:$0xf]
    %v988 = vld [vmem:[#allocation5 + $0xc88] sm:$0xf]
    %v989 = vld [vmem:[#allocation5 + $0xc8c] sm:$0xf]
    %v990 = vld [vmem:[#allocation5 + $0xc90] sm:$0xf]
    %v991 = vld [vmem:[#allocation5 + $0xc94] sm:$0xf]
    %v992 = vld [vmem:[#allocation5 + $0xc98] sm:$0xf]
    %v993 = vld [vmem:[#allocation5 + $0xc9c] sm:$0xf]
    %v994 = vld [vmem:[#allocation5 + $0xca0] sm:$0xf]
    %v995 = vld [vmem:[#allocation5 + $0xca4] sm:$0xf]
    %v996 = vld [vmem:[#allocation5 + $0xca8] sm:$0xf]
    %v997 = vld [vmem:[#allocation5 + $0xcac] sm:$0xf]
    %v998 = vld [vmem:[#allocation5 + $0xcb0] sm:$0xf]
    %v999 = vld [vmem:[#allocation5 + $0xcb4] sm:$0xf]
    %v1000 = vld [vmem:[#allocation5 + $0xcb8] sm:$0xf]
    %v1001 = vld [vmem:[#allocation5 + $0xcbc] sm:$0xf]
    %v1002 = vld [vmem:[#allocation5 + $0xcc0] sm:$0xf]
    %v1003 = vld [vmem:[#allocation5 + $0xcc4] sm:$0xf]
    %v1004 = vld [vmem:[#allocation5 + $0xcc8] sm:$0xf]
    %v1005 = vld [vmem:[#allocation5 + $0xccc] sm:$0xf]
    %v1006 = vld [vmem:[#allocation5 + $0xcd0] sm:$0xf]
    %v1007 = vld [vmem:[#allocation5 + $0xcd4] sm:$0xf]
    %v1008 = vld [vmem:[#allocation5 + $0xcd8] sm:$0xf]
    %v1009 = vld [vmem:[#allocation5 + $0xcdc] sm:$0xf]
    %v1010 = vld [vmem:[#allocation5 + $0xce0] sm:$0xf]
    %v1011 = vld [vmem:[#allocation5 + $0xce4] sm:$0xf]
    %v1012 = vld [vmem:[#allocation5 + $0xce8] sm:$0xf]
    %v1013 = vld [vmem:[#allocation5 + $0xcec] sm:$0xf]
    %v1014 = vld [vmem:[#allocation5 + $0xcf0] sm:$0xf]
    %v1015 = vld [vmem:[#allocation5 + $0xcf4] sm:$0xf]
    %v1016 = vld [vmem:[#allocation5 + $0xcf8] sm:$0xf]
    %v1017 = vld [vmem:[#allocation5 + $0xcfc] sm:$0xf]
    %v1018 = vld [vmem:[#allocation5 + $0xd00] sm:$0xf]
    %v1019 = vld [vmem:[#allocation5 + $0xd04] sm:$0xf]
    %v1020 = vld [vmem:[#allocation5 + $0xd08] sm:$0xf]
    %v1021 = vld [vmem:[#allocation5 + $0xd0c] sm:$0xf]
    %v1022 = vld [vmem:[#allocation5 + $0xd10] sm:$0xf]
    %v1023 = vld [vmem:[#allocation5 + $0xd14] sm:$0xf]
    %v1024 = vld [vmem:[#allocation5 + $0xd18] sm:$0xf]
    %v1025 = vld [vmem:[#allocation5 + $0xd1c] sm:$0xf]
    %v1026 = vld [vmem:[#allocation5 + $0xd20] sm:$0xf]
    %v1027 = vld [vmem:[#allocation5 + $0xd24] sm:$0xf]
    %v1028 = vld [vmem:[#allocation5 + $0xd28] sm:$0xf]
    %v1029 = vld [vmem:[#allocation5 + $0xd2c] sm:$0xf]
    %v1030 = vld [vmem:[#allocation5 + $0xd30] sm:$0xf]
    %v1031 = vld [vmem:[#allocation5 + $0xd34] sm:$0xf]
    %v1032 = vld [vmem:[#allocation5 + $0xd38] sm:$0xf]
    %v1033 = vld [vmem:[#allocation5 + $0xd3c] sm:$0xf]
    %v1034 = vld [vmem:[#allocation5 + $0xd40] sm:$0xf]
    %v1035 = vld [vmem:[#allocation5 + $0xd44] sm:$0xf]
    %v1036 = vld [vmem:[#allocation5 + $0xd48] sm:$0xf]
    %v1037 = vld [vmem:[#allocation5 + $0xd4c] sm:$0xf]
    %v1038 = vld [vmem:[#allocation5 + $0xd50] sm:$0xf]
    %v1039 = vld [vmem:[#allocation5 + $0xd54] sm:$0xf]
    %v1040 = vld [vmem:[#allocation5 + $0xd58] sm:$0xf]
    %v1041 = vld [vmem:[#allocation5 + $0xd5c] sm:$0xf]
    %v1042 = vld [vmem:[#allocation5 + $0xd60] sm:$0xf]
    %v1043 = vld [vmem:[#allocation5 + $0xd64] sm:$0xf]
    %v1044 = vld [vmem:[#allocation5 + $0xd68] sm:$0xf]
    %v1045 = vld [vmem:[#allocation5 + $0xd6c] sm:$0xf]
    %v1046 = vld [vmem:[#allocation5 + $0xd70] sm:$0xf]
    %v1047 = vld [vmem:[#allocation5 + $0xd74] sm:$0xf]
    %v1048 = vld [vmem:[#allocation5 + $0xd78] sm:$0xf]
    %v1049 = vld [vmem:[#allocation5 + $0xd7c] sm:$0xf]
    %v1050 = vld [vmem:[#allocation5 + $0xd80] sm:$0xf]
    %v1051 = vld [vmem:[#allocation5 + $0xd84] sm:$0xf]
    %v1052 = vld [vmem:[#allocation5 + $0xd88] sm:$0xf]
    %v1053 = vld [vmem:[#allocation5 + $0xd8c] sm:$0xf]
    %v1054 = vld [vmem:[#allocation5 + $0xd90] sm:$0xf]
    %v1055 = vld [vmem:[#allocation5 + $0xd94] sm:$0xf]
    %v1056 = vld [vmem:[#allocation5 + $0xd98] sm:$0xf]
    %v1057 = vld [vmem:[#allocation5 + $0xd9c] sm:$0xf]
    %v1058 = vld [vmem:[#allocation5 + $0xda0] sm:$0xf]
    %v1059 = vld [vmem:[#allocation5 + $0xda4] sm:$0xf]
    %v1060 = vld [vmem:[#allocation5 + $0xda8] sm:$0xf]
    %v1061 = vld [vmem:[#allocation5 + $0xdac] sm:$0xf]
    %v1062 = vld [vmem:[#allocation5 + $0xdb0] sm:$0xf]
    %v1063 = vld [vmem:[#allocation5 + $0xdb4] sm:$0xf]
    %v1064 = vld [vmem:[#allocation5 + $0xdb8] sm:$0xf]
    %v1065 = vld [vmem:[#allocation5 + $0xdbc] sm:$0xf]
    %v1066 = vld [vmem:[#allocation5 + $0xdc0] sm:$0xf]
    %v1067 = vld [vmem:[#allocation5 + $0xdc4] sm:$0xf]
    %v1068 = vld [vmem:[#allocation5 + $0xdc8] sm:$0xf]
    %v1069 = vld [vmem:[#allocation5 + $0xdcc] sm:$0xf]
    %v1070 = vld [vmem:[#allocation5 + $0xdd0] sm:$0xf]
    %v1071 = vld [vmem:[#allocation5 + $0xdd4] sm:$0xf]
    %v1072 = vld [vmem:[#allocation5 + $0xdd8] sm:$0xf]
    %v1073 = vld [vmem:[#allocation5 + $0xddc] sm:$0xf]
    %v1074 = vld [vmem:[#allocation5 + $0xde0] sm:$0xf]
    %v1075 = vld [vmem:[#allocation5 + $0xde4] sm:$0xf]
    %v1076 = vld [vmem:[#allocation5 + $0xde8] sm:$0xf]
    %v1077 = vld [vmem:[#allocation5 + $0xdec] sm:$0xf]
    %v1078 = vld [vmem:[#allocation5 + $0xdf0] sm:$0xf]
    %v1079 = vld [vmem:[#allocation5 + $0xdf4] sm:$0xf]
    %v1080 = vld [vmem:[#allocation5 + $0xdf8] sm:$0xf]
    %v1081 = vld [vmem:[#allocation5 + $0xdfc] sm:$0xf]
    %v1082 = vld [vmem:[#allocation5 + $0xe00] sm:$0xf]
    %v1083 = vld [vmem:[#allocation5 + $0xe04] sm:$0xf]
    %v1084 = vld [vmem:[#allocation5 + $0xe08] sm:$0xf]
    %v1085 = vld [vmem:[#allocation5 + $0xe0c] sm:$0xf]
    %v1086 = vld [vmem:[#allocation5 + $0xe10] sm:$0xf]
    %v1087 = vld [vmem:[#allocation5 + $0xe14] sm:$0xf]
    %v1088 = vld [vmem:[#allocation5 + $0xe18] sm:$0xf]
    %v1089 = vld [vmem:[#allocation5 + $0xe1c] sm:$0xf]
    %v1090 = vld [vmem:[#allocation5 + $0xe20] sm:$0xf]
    %v1091 = vld [vmem:[#allocation5 + $0xe24] sm:$0xf]
    %v1092 = vld [vmem:[#allocation5 + $0xe28] sm:$0xf]
    %v1093 = vld [vmem:[#allocation5 + $0xe2c] sm:$0xf]
    %v1094 = vld [vmem:[#allocation5 + $0xe30] sm:$0xf]
    %v1095 = vld [vmem:[#allocation5 + $0xe34] sm:$0xf]
    %v1096 = vld [vmem:[#allocation5 + $0xe38] sm:$0xf]
    %v1097 = vld [vmem:[#allocation5 + $0xe3c] sm:$0xf]
    %v1098 = vld [vmem:[#allocation5 + $0xe40] sm:$0xf]
    %v1099 = vld [vmem:[#allocation5 + $0xe44] sm:$0xf]
    %v1100 = vld [vmem:[#allocation5 + $0xe48] sm:$0xf]
    %v1101 = vld [vmem:[#allocation5 + $0xe4c] sm:$0xf]
    %v1102 = vld [vmem:[#allocation5 + $0xe50] sm:$0xf]
    %v1103 = vld [vmem:[#allocation5 + $0xe54] sm:$0xf]
    %v1104 = vld [vmem:[#allocation5 + $0xe58] sm:$0xf]
    %v1105 = vld [vmem:[#allocation5 + $0xe5c] sm:$0xf]
    %v1106 = vld [vmem:[#allocation5 + $0xe60] sm:$0xf]
    %v1107 = vld [vmem:[#allocation5 + $0xe64] sm:$0xf]
    %v1108 = vld [vmem:[#allocation5 + $0xe68] sm:$0xf]
    %v1109 = vld [vmem:[#allocation5 + $0xe6c] sm:$0xf]
    %v1110 = vld [vmem:[#allocation5 + $0xe70] sm:$0xf]
    %v1111 = vld [vmem:[#allocation5 + $0xe74] sm:$0xf]
    %v1112 = vld [vmem:[#allocation5 + $0xe78] sm:$0xf]
    %v1113 = vld [vmem:[#allocation5 + $0xe7c] sm:$0xf]
    %v1114 = vld [vmem:[#allocation5 + $0xe80] sm:$0xf]
    %v1115 = vld [vmem:[#allocation5 + $0xe84] sm:$0xf]
    %v1116 = vld [vmem:[#allocation5 + $0xe88] sm:$0xf]
    %v1117 = vld [vmem:[#allocation5 + $0xe8c] sm:$0xf]
    %v1118 = vld [vmem:[#allocation5 + $0xe90] sm:$0xf]
    %v1119 = vld [vmem:[#allocation5 + $0xe94] sm:$0xf]
    %v1120 = vld [vmem:[#allocation5 + $0xe98] sm:$0xf]
    %v1121 = vld [vmem:[#allocation5 + $0xe9c] sm:$0xf]
    %v1122 = vld [vmem:[#allocation5 + $0xea0] sm:$0xf]
    %v1123 = vld [vmem:[#allocation5 + $0xea4] sm:$0xf]
    %v1124 = vld [vmem:[#allocation5 + $0xea8] sm:$0xf]
    %v1125 = vld [vmem:[#allocation5 + $0xeac] sm:$0xf]
    %v1126 = vld [vmem:[#allocation5 + $0xeb0] sm:$0xf]
    %v1127 = vld [vmem:[#allocation5 + $0xeb4] sm:$0xf]
    %v1128 = vld [vmem:[#allocation5 + $0xeb8] sm:$0xf]
    %v1129 = vld [vmem:[#allocation5 + $0xebc] sm:$0xf]
    %v1130 = vld [vmem:[#allocation5 + $0xec0] sm:$0xf]
    %v1131 = vld [vmem:[#allocation5 + $0xec4] sm:$0xf]
    %v1132 = vld [vmem:[#allocation5 + $0xec8] sm:$0xf]
    %v1133 = vld [vmem:[#allocation5 + $0xecc] sm:$0xf]
    %v1134 = vld [vmem:[#allocation5 + $0xed0] sm:$0xf]
    %v1135 = vld [vmem:[#allocation5 + $0xed4] sm:$0xf]
    %v1136 = vld [vmem:[#allocation5 + $0xed8] sm:$0xf]
    %v1137 = vld [vmem:[#allocation5 + $0xedc] sm:$0xf]
    %v1138 = vld [vmem:[#allocation5 + $0xee0] sm:$0xf]
    %v1139 = vld [vmem:[#allocation5 + $0xee4] sm:$0xf]
    %v1140 = vld [vmem:[#allocation5 + $0xee8] sm:$0xf]
    %v1141 = vld [vmem:[#allocation5 + $0xeec] sm:$0xf]
    %v1142 = vld [vmem:[#allocation5 + $0xef0] sm:$0xf]
    %v1143 = vld [vmem:[#allocation5 + $0xef4] sm:$0xf]
    %v1144 = vld [vmem:[#allocation5 + $0xef8] sm:$0xf]
    %v1145 = vld [vmem:[#allocation5 + $0xefc] sm:$0xf]
    %v1146 = vld [vmem:[#allocation5 + $0xf00] sm:$0xf]
    %v1147 = vld [vmem:[#allocation5 + $0xf04] sm:$0xf]
    %v1148 = vld [vmem:[#allocation5 + $0xf08] sm:$0xf]
    %v1149 = vld [vmem:[#allocation5 + $0xf0c] sm:$0xf]
    %v1150 = vld [vmem:[#allocation5 + $0xf10] sm:$0xf]
    %v1151 = vld [vmem:[#allocation5 + $0xf14] sm:$0xf]
    %v1152 = vld [vmem:[#allocation5 + $0xf18] sm:$0xf]
    %v1153 = vld [vmem:[#allocation5 + $0xf1c] sm:$0xf]
    %v1154 = vld [vmem:[#allocation5 + $0xf20] sm:$0xf]
    %v1155 = vld [vmem:[#allocation5 + $0xf24] sm:$0xf]
    %v1156 = vld [vmem:[#allocation5 + $0xf28] sm:$0xf]
    %v1157 = vld [vmem:[#allocation5 + $0xf2c] sm:$0xf]
    %v1158 = vld [vmem:[#allocation5 + $0xf30] sm:$0xf]
    %v1159 = vld [vmem:[#allocation5 + $0xf34] sm:$0xf]
    %v1160 = vld [vmem:[#allocation5 + $0xf38] sm:$0xf]
    %v1161 = vld [vmem:[#allocation5 + $0xf3c] sm:$0xf]
    %v1162 = vld [vmem:[#allocation5 + $0xf40] sm:$0xf]
    %v1163 = vld [vmem:[#allocation5 + $0xf44] sm:$0xf]
    %v1164 = vld [vmem:[#allocation5 + $0xf48] sm:$0xf]
    %v1165 = vld [vmem:[#allocation5 + $0xf4c] sm:$0xf]
    %v1166 = vld [vmem:[#allocation5 + $0xf50] sm:$0xf]
    %v1167 = vld [vmem:[#allocation5 + $0xf54] sm:$0xf]
    %v1168 = vld [vmem:[#allocation5 + $0xf58] sm:$0xf]
    %v1169 = vld [vmem:[#allocation5 + $0xf5c] sm:$0xf]
    %v1170 = vld [vmem:[#allocation5 + $0xf60] sm:$0xf]
    %v1171 = vld [vmem:[#allocation5 + $0xf64] sm:$0xf]
    %v1172 = vld [vmem:[#allocation5 + $0xf68] sm:$0xf]
    %v1173 = vld [vmem:[#allocation5 + $0xf6c] sm:$0xf]
    %v1174 = vld [vmem:[#allocation5 + $0xf70] sm:$0xf]
    %v1175 = vld [vmem:[#allocation5 + $0xf74] sm:$0xf]
    %v1176 = vld [vmem:[#allocation5 + $0xf78] sm:$0xf]
    %v1177 = vld [vmem:[#allocation5 + $0xf7c] sm:$0xf]
    %v1178 = vld [vmem:[#allocation5 + $0xf80] sm:$0xf]
    %v1179 = vld [vmem:[#allocation5 + $0xf84] sm:$0xf]
    %v1180 = vld [vmem:[#allocation5 + $0xf88] sm:$0xf]
    %v1181 = vld [vmem:[#allocation5 + $0xf8c] sm:$0xf]
    %v1182 = vld [vmem:[#allocation5 + $0xf90] sm:$0xf]
    %v1183 = vld [vmem:[#allocation5 + $0xf94] sm:$0xf]
    %v1184 = vld [vmem:[#allocation5 + $0xf98] sm:$0xf]
    %v1185 = vld [vmem:[#allocation5 + $0xf9c] sm:$0xf]
    %v1186 = vld [vmem:[#allocation5 + $0xfa0] sm:$0xf]
    %v1187 = vld [vmem:[#allocation5 + $0xfa4] sm:$0xf]
    %v1188 = vld [vmem:[#allocation5 + $0xfa8] sm:$0xf]
    %v1189 = vld [vmem:[#allocation5 + $0xfac] sm:$0xf]
    %v1190 = vld [vmem:[#allocation5 + $0xfb0] sm:$0xf]
    %v1191 = vld [vmem:[#allocation5 + $0xfb4] sm:$0xf]
    %v1192 = vld [vmem:[#allocation5 + $0xfb8] sm:$0xf]
    %v1193 = vld [vmem:[#allocation5 + $0xfbc] sm:$0xf]
    %v1194 = vld [vmem:[#allocation5 + $0xfc0] sm:$0xf]
    %v1195 = vld [vmem:[#allocation5 + $0xfc4] sm:$0xf]
    %v1196 = vld [vmem:[#allocation5 + $0xfc8] sm:$0xf]
    %v1197 = vld [vmem:[#allocation5 + $0xfcc] sm:$0xf]
    %v1198 = vld [vmem:[#allocation5 + $0xfd0] sm:$0xf]
    %v1199 = vld [vmem:[#allocation5 + $0xfd4] sm:$0xf]
    %v1200 = vld [vmem:[#allocation5 + $0xfd8] sm:$0xf]
    %v1201 = vld [vmem:[#allocation5 + $0xfdc] sm:$0xf]
    %v1202 = vld [vmem:[#allocation5 + $0xfe0] sm:$0xf]
    %v1203 = vld [vmem:[#allocation5 + $0xfe4] sm:$0xf]
    %v1204 = vld [vmem:[#allocation5 + $0xfe8] sm:$0xf]
    %v1205 = vld [vmem:[#allocation5 + $0xfec] sm:$0xf]
    %v1206 = vld [vmem:[#allocation5 + $0xff0] sm:$0xf]
    %v1207 = vld [vmem:[#allocation5 + $0xff4] sm:$0xf]
    %v1208 = vld [vmem:[#allocation5 + $0xff8] sm:$0xf]
    %v1209 = vld [vmem:[#allocation5 + $0xffc] sm:$0xf]
    %v1210 = vld [vmem:[#allocation7] sm:$0x1]
    %v1212 = vperm.slane %v1210, 0
    %v2238 = vunpack.c.l.b16 %v186
    %v2239 = vunpack.c.l.b16 %v187
    %v2240 = vunpack.c.l.b16 %v188
    %v2241 = vunpack.c.l.b16 %v189
    %v2242 = vunpack.c.l.b16 %v190
    %v2243 = vunpack.c.l.b16 %v191
    %v2244 = vunpack.c.l.b16 %v192
    %v2245 = vunpack.c.l.b16 %v193
    %v2246 = vunpack.c.l.b16 %v194
    %v2247 = vunpack.c.l.b16 %v195
    %v2248 = vunpack.c.l.b16 %v196
    %v2249 = vunpack.c.l.b16 %v197
    %v2250 = vunpack.c.l.b16 %v198
    %v2251 = vunpack.c.l.b16 %v199
    %v2252 = vunpack.c.l.b16 %v200
    %v2253 = vunpack.c.l.b16 %v201
    %v2254 = vunpack.c.l.b16 %v202
    %v2255 = vunpack.c.l.b16 %v203
    %v2256 = vunpack.c.l.b16 %v204
    %v2257 = vunpack.c.l.b16 %v205
    %v2258 = vunpack.c.l.b16 %v206
    %v2259 = vunpack.c.l.b16 %v207
    %v2260 = vunpack.c.l.b16 %v208
    %v2261 = vunpack.c.l.b16 %v209
    %v2262 = vunpack.c.l.b16 %v210
    %v2263 = vunpack.c.l.b16 %v211
    %v2264 = vunpack.c.l.b16 %v212
    %v2265 = vunpack.c.l.b16 %v213
    %v2266 = vunpack.c.l.b16 %v214
    %v2267 = vunpack.c.l.b16 %v215
    %v2268 = vunpack.c.l.b16 %v216
    %v2269 = vunpack.c.l.b16 %v217
    %v2270 = vunpack.c.l.b16 %v218
    %v2271 = vunpack.c.l.b16 %v219
    %v2272 = vunpack.c.l.b16 %v220
    %v2273 = vunpack.c.l.b16 %v221
    %v2274 = vunpack.c.l.b16 %v222
    %v2275 = vunpack.c.l.b16 %v223
    %v2276 = vunpack.c.l.b16 %v224
    %v2277 = vunpack.c.l.b16 %v225
    %v2278 = vunpack.c.l.b16 %v226
    %v2279 = vunpack.c.l.b16 %v227
    %v2280 = vunpack.c.l.b16 %v228
    %v2281 = vunpack.c.l.b16 %v229
    %v2282 = vunpack.c.l.b16 %v230
    %v2283 = vunpack.c.l.b16 %v231
    %v2284 = vunpack.c.l.b16 %v232
    %v2285 = vunpack.c.l.b16 %v233
    %v2286 = vunpack.c.l.b16 %v234
    %v2287 = vunpack.c.l.b16 %v235
    %v2288 = vunpack.c.l.b16 %v236
    %v2289 = vunpack.c.l.b16 %v237
    %v2290 = vunpack.c.l.b16 %v238
    %v2291 = vunpack.c.l.b16 %v239
    %v2292 = vunpack.c.l.b16 %v240
    %v2293 = vunpack.c.l.b16 %v241
    %v2294 = vunpack.c.l.b16 %v242
    %v2295 = vunpack.c.l.b16 %v243
    %v2296 = vunpack.c.l.b16 %v244
    %v2297 = vunpack.c.l.b16 %v245
    %v2298 = vunpack.c.l.b16 %v246
    %v2299 = vunpack.c.l.b16 %v247
    %v2300 = vunpack.c.l.b16 %v248
    %v2301 = vunpack.c.l.b16 %v249
    %v2302 = vunpack.c.l.b16 %v250
    %v2303 = vunpack.c.l.b16 %v251
    %v2304 = vunpack.c.l.b16 %v252
    %v2305 = vunpack.c.l.b16 %v253
    %v2306 = vunpack.c.l.b16 %v254
    %v2307 = vunpack.c.l.b16 %v255
    %v2308 = vunpack.c.l.b16 %v256
    %v2309 = vunpack.c.l.b16 %v257
    %v2310 = vunpack.c.l.b16 %v258
    %v2311 = vunpack.c.l.b16 %v259
    %v2312 = vunpack.c.l.b16 %v260
    %v2313 = vunpack.c.l.b16 %v261
    %v2314 = vunpack.c.l.b16 %v262
    %v2315 = vunpack.c.l.b16 %v263
    %v2316 = vunpack.c.l.b16 %v264
    %v2317 = vunpack.c.l.b16 %v265
    %v2318 = vunpack.c.l.b16 %v266
    %v2319 = vunpack.c.l.b16 %v267
    %v2320 = vunpack.c.l.b16 %v268
    %v2321 = vunpack.c.l.b16 %v269
    %v2322 = vunpack.c.l.b16 %v270
    %v2323 = vunpack.c.l.b16 %v271
    %v2324 = vunpack.c.l.b16 %v272
    %v2325 = vunpack.c.l.b16 %v273
    %v2326 = vunpack.c.l.b16 %v274
    %v2327 = vunpack.c.l.b16 %v275
    %v2328 = vunpack.c.l.b16 %v276
    %v2329 = vunpack.c.l.b16 %v277
    %v2330 = vunpack.c.l.b16 %v278
    %v2331 = vunpack.c.l.b16 %v279
    %v2332 = vunpack.c.l.b16 %v280
    %v2333 = vunpack.c.l.b16 %v281
    %v2334 = vunpack.c.l.b16 %v282
    %v2335 = vunpack.c.l.b16 %v283
    %v2336 = vunpack.c.l.b16 %v284
    %v2337 = vunpack.c.l.b16 %v285
    %v2338 = vunpack.c.l.b16 %v286
    %v2339 = vunpack.c.l.b16 %v287
    %v2340 = vunpack.c.l.b16 %v288
    %v2341 = vunpack.c.l.b16 %v289
    %v2342 = vunpack.c.l.b16 %v290
    %v2343 = vunpack.c.l.b16 %v291
    %v2344 = vunpack.c.l.b16 %v292
    %v2345 = vunpack.c.l.b16 %v293
    %v2346 = vunpack.c.l.b16 %v294
    %v2347 = vunpack.c.l.b16 %v295
    %v2348 = vunpack.c.l.b16 %v296
    %v2349 = vunpack.c.l.b16 %v297
    %v2350 = vunpack.c.l.b16 %v298
    %v2351 = vunpack.c.l.b16 %v299
    %v2352 = vunpack.c.l.b16 %v300
    %v2353 = vunpack.c.l.b16 %v301
    %v2354 = vunpack.c.l.b16 %v302
    %v2355 = vunpack.c.l.b16 %v303
    %v2356 = vunpack.c.l.b16 %v304
    %v2357 = vunpack.c.l.b16 %v305
    %v2358 = vunpack.c.l.b16 %v306
    %v2359 = vunpack.c.l.b16 %v307
    %v2360 = vunpack.c.l.b16 %v308
    %v2361 = vunpack.c.l.b16 %v309
    %v2362 = vunpack.c.l.b16 %v310
    %v2363 = vunpack.c.l.b16 %v311
    %v2364 = vunpack.c.l.b16 %v312
    %v2365 = vunpack.c.l.b16 %v313
    %v2366 = vunpack.c.l.b16 %v314
    %v2367 = vunpack.c.l.b16 %v315
    %v2368 = vunpack.c.l.b16 %v316
    %v2369 = vunpack.c.l.b16 %v317
    %v2370 = vunpack.c.l.b16 %v318
    %v2371 = vunpack.c.l.b16 %v319
    %v2372 = vunpack.c.l.b16 %v320
    %v2373 = vunpack.c.l.b16 %v321
    %v2374 = vunpack.c.l.b16 %v322
    %v2375 = vunpack.c.l.b16 %v323
    %v2376 = vunpack.c.l.b16 %v324
    %v2377 = vunpack.c.l.b16 %v325
    %v2378 = vunpack.c.l.b16 %v326
    %v2379 = vunpack.c.l.b16 %v327
    %v2380 = vunpack.c.l.b16 %v328
    %v2381 = vunpack.c.l.b16 %v329
    %v2382 = vunpack.c.l.b16 %v330
    %v2383 = vunpack.c.l.b16 %v331
    %v2384 = vunpack.c.l.b16 %v332
    %v2385 = vunpack.c.l.b16 %v333
    %v2386 = vunpack.c.l.b16 %v334
    %v2387 = vunpack.c.l.b16 %v335
    %v2388 = vunpack.c.l.b16 %v336
    %v2389 = vunpack.c.l.b16 %v337
    %v2390 = vunpack.c.l.b16 %v338
    %v2391 = vunpack.c.l.b16 %v339
    %v2392 = vunpack.c.l.b16 %v340
    %v2393 = vunpack.c.l.b16 %v341
    %v2394 = vunpack.c.l.b16 %v342
    %v2395 = vunpack.c.l.b16 %v343
    %v2396 = vunpack.c.l.b16 %v344
    %v2397 = vunpack.c.l.b16 %v345
    %v2398 = vunpack.c.l.b16 %v346
    %v2399 = vunpack.c.l.b16 %v347
    %v2400 = vunpack.c.l.b16 %v348
    %v2401 = vunpack.c.l.b16 %v349
    %v2402 = vunpack.c.l.b16 %v350
    %v2403 = vunpack.c.l.b16 %v351
    %v2404 = vunpack.c.l.b16 %v352
    %v2405 = vunpack.c.l.b16 %v353
    %v2406 = vunpack.c.l.b16 %v354
    %v2407 = vunpack.c.l.b16 %v355
    %v2408 = vunpack.c.l.b16 %v356
    %v2409 = vunpack.c.l.b16 %v357
    %v2410 = vunpack.c.l.b16 %v358
    %v2411 = vunpack.c.l.b16 %v359
    %v2412 = vunpack.c.l.b16 %v360
    %v2413 = vunpack.c.l.b16 %v361
    %v2414 = vunpack.c.l.b16 %v362
    %v2415 = vunpack.c.l.b16 %v363
    %v2416 = vunpack.c.l.b16 %v364
    %v2417 = vunpack.c.l.b16 %v365
    %v2418 = vunpack.c.l.b16 %v366
    %v2419 = vunpack.c.l.b16 %v367
    %v2420 = vunpack.c.l.b16 %v368
    %v2421 = vunpack.c.l.b16 %v369
    %v2422 = vunpack.c.l.b16 %v370
    %v2423 = vunpack.c.l.b16 %v371
    %v2424 = vunpack.c.l.b16 %v372
    %v2425 = vunpack.c.l.b16 %v373
    %v2426 = vunpack.c.l.b16 %v374
    %v2427 = vunpack.c.l.b16 %v375
    %v2428 = vunpack.c.l.b16 %v376
    %v2429 = vunpack.c.l.b16 %v377
    %v2430 = vunpack.c.l.b16 %v378
    %v2431 = vunpack.c.l.b16 %v379
    %v2432 = vunpack.c.l.b16 %v380
    %v2433 = vunpack.c.l.b16 %v381
    %v2434 = vunpack.c.l.b16 %v382
    %v2435 = vunpack.c.l.b16 %v383
    %v2436 = vunpack.c.l.b16 %v384
    %v2437 = vunpack.c.l.b16 %v385
    %v2438 = vunpack.c.l.b16 %v386
    %v2439 = vunpack.c.l.b16 %v387
    %v2440 = vunpack.c.l.b16 %v388
    %v2441 = vunpack.c.l.b16 %v389
    %v2442 = vunpack.c.l.b16 %v390
    %v2443 = vunpack.c.l.b16 %v391
    %v2444 = vunpack.c.l.b16 %v392
    %v2445 = vunpack.c.l.b16 %v393
    %v2446 = vunpack.c.l.b16 %v394
    %v2447 = vunpack.c.l.b16 %v395
    %v2448 = vunpack.c.l.b16 %v396
    %v2449 = vunpack.c.l.b16 %v397
    %v2450 = vunpack.c.l.b16 %v398
    %v2451 = vunpack.c.l.b16 %v399
    %v2452 = vunpack.c.l.b16 %v400
    %v2453 = vunpack.c.l.b16 %v401
    %v2454 = vunpack.c.l.b16 %v402
    %v2455 = vunpack.c.l.b16 %v403
    %v2456 = vunpack.c.l.b16 %v404
    %v2457 = vunpack.c.l.b16 %v405
    %v2458 = vunpack.c.l.b16 %v406
    %v2459 = vunpack.c.l.b16 %v407
    %v2460 = vunpack.c.l.b16 %v408
    %v2461 = vunpack.c.l.b16 %v409
    %v2462 = vunpack.c.l.b16 %v410
    %v2463 = vunpack.c.l.b16 %v411
    %v2464 = vunpack.c.l.b16 %v412
    %v2465 = vunpack.c.l.b16 %v413
    %v2466 = vunpack.c.l.b16 %v414
    %v2467 = vunpack.c.l.b16 %v415
    %v2468 = vunpack.c.l.b16 %v416
    %v2469 = vunpack.c.l.b16 %v417
    %v2470 = vunpack.c.l.b16 %v418
    %v2471 = vunpack.c.l.b16 %v419
    %v2472 = vunpack.c.l.b16 %v420
    %v2473 = vunpack.c.l.b16 %v421
    %v2474 = vunpack.c.l.b16 %v422
    %v2475 = vunpack.c.l.b16 %v423
    %v2476 = vunpack.c.l.b16 %v424
    %v2477 = vunpack.c.l.b16 %v425
    %v2478 = vunpack.c.l.b16 %v426
    %v2479 = vunpack.c.l.b16 %v427
    %v2480 = vunpack.c.l.b16 %v428
    %v2481 = vunpack.c.l.b16 %v429
    %v2482 = vunpack.c.l.b16 %v430
    %v2483 = vunpack.c.l.b16 %v431
    %v2484 = vunpack.c.l.b16 %v432
    %v2485 = vunpack.c.l.b16 %v433
    %v2486 = vunpack.c.l.b16 %v434
    %v2487 = vunpack.c.l.b16 %v435
    %v2488 = vunpack.c.l.b16 %v436
    %v2489 = vunpack.c.l.b16 %v437
    %v2490 = vunpack.c.l.b16 %v438
    %v2491 = vunpack.c.l.b16 %v439
    %v2492 = vunpack.c.l.b16 %v440
    %v2493 = vunpack.c.l.b16 %v441
    %v2494 = vunpack.c.l.b16 %v442
    %v2495 = vunpack.c.l.b16 %v443
    %v2496 = vunpack.c.l.b16 %v444
    %v2497 = vunpack.c.l.b16 %v445
    %v2498 = vunpack.c.l.b16 %v446
    %v2499 = vunpack.c.l.b16 %v447
    %v2500 = vunpack.c.l.b16 %v448
    %v2501 = vunpack.c.l.b16 %v449
    %v2502 = vunpack.c.l.b16 %v450
    %v2503 = vunpack.c.l.b16 %v451
    %v2504 = vunpack.c.l.b16 %v452
    %v2505 = vunpack.c.l.b16 %v453
    %v2506 = vunpack.c.l.b16 %v454
    %v2507 = vunpack.c.l.b16 %v455
    %v2508 = vunpack.c.l.b16 %v456
    %v2509 = vunpack.c.l.b16 %v457
    %v2510 = vunpack.c.l.b16 %v458
    %v2511 = vunpack.c.l.b16 %v459
    %v2512 = vunpack.c.l.b16 %v460
    %v2513 = vunpack.c.l.b16 %v461
    %v2514 = vunpack.c.l.b16 %v462
    %v2515 = vunpack.c.l.b16 %v463
    %v2516 = vunpack.c.l.b16 %v464
    %v2517 = vunpack.c.l.b16 %v465
    %v2518 = vunpack.c.l.b16 %v466
    %v2519 = vunpack.c.l.b16 %v467
    %v2520 = vunpack.c.l.b16 %v468
    %v2521 = vunpack.c.l.b16 %v469
    %v2522 = vunpack.c.l.b16 %v470
    %v2523 = vunpack.c.l.b16 %v471
    %v2524 = vunpack.c.l.b16 %v472
    %v2525 = vunpack.c.l.b16 %v473
    %v2526 = vunpack.c.l.b16 %v474
    %v2527 = vunpack.c.l.b16 %v475
    %v2528 = vunpack.c.l.b16 %v476
    %v2529 = vunpack.c.l.b16 %v477
    %v2530 = vunpack.c.l.b16 %v478
    %v2531 = vunpack.c.l.b16 %v479
    %v2532 = vunpack.c.l.b16 %v480
    %v2533 = vunpack.c.l.b16 %v481
    %v2534 = vunpack.c.l.b16 %v482
    %v2535 = vunpack.c.l.b16 %v483
    %v2536 = vunpack.c.l.b16 %v484
    %v2537 = vunpack.c.l.b16 %v485
    %v2538 = vunpack.c.l.b16 %v486
    %v2539 = vunpack.c.l.b16 %v487
    %v2540 = vunpack.c.l.b16 %v488
    %v2541 = vunpack.c.l.b16 %v489
    %v2542 = vunpack.c.l.b16 %v490
    %v2543 = vunpack.c.l.b16 %v491
    %v2544 = vunpack.c.l.b16 %v492
    %v2545 = vunpack.c.l.b16 %v493
    %v2546 = vunpack.c.l.b16 %v494
    %v2547 = vunpack.c.l.b16 %v495
    %v2548 = vunpack.c.l.b16 %v496
    %v2549 = vunpack.c.l.b16 %v497
    %v2550 = vunpack.c.l.b16 %v498
    %v2551 = vunpack.c.l.b16 %v499
    %v2552 = vunpack.c.l.b16 %v500
    %v2553 = vunpack.c.l.b16 %v501
    %v2554 = vunpack.c.l.b16 %v502
    %v2555 = vunpack.c.l.b16 %v503
    %v2556 = vunpack.c.l.b16 %v504
    %v2557 = vunpack.c.l.b16 %v505
    %v2558 = vunpack.c.l.b16 %v506
    %v2559 = vunpack.c.l.b16 %v507
    %v2560 = vunpack.c.l.b16 %v508
    %v2561 = vunpack.c.l.b16 %v509
    %v2562 = vunpack.c.l.b16 %v510
    %v2563 = vunpack.c.l.b16 %v511
    %v2564 = vunpack.c.l.b16 %v512
    %v2565 = vunpack.c.l.b16 %v513
    %v2566 = vunpack.c.l.b16 %v514
    %v2567 = vunpack.c.l.b16 %v515
    %v2568 = vunpack.c.l.b16 %v516
    %v2569 = vunpack.c.l.b16 %v517
    %v2570 = vunpack.c.l.b16 %v518
    %v2571 = vunpack.c.l.b16 %v519
    %v2572 = vunpack.c.l.b16 %v520
    %v2573 = vunpack.c.l.b16 %v521
    %v2574 = vunpack.c.l.b16 %v522
    %v2575 = vunpack.c.l.b16 %v523
    %v2576 = vunpack.c.l.b16 %v524
    %v2577 = vunpack.c.l.b16 %v525
    %v2578 = vunpack.c.l.b16 %v526
    %v2579 = vunpack.c.l.b16 %v527
    %v2580 = vunpack.c.l.b16 %v528
    %v2581 = vunpack.c.l.b16 %v529
    %v2582 = vunpack.c.l.b16 %v530
    %v2583 = vunpack.c.l.b16 %v531
    %v2584 = vunpack.c.l.b16 %v532
    %v2585 = vunpack.c.l.b16 %v533
    %v2586 = vunpack.c.l.b16 %v534
    %v2587 = vunpack.c.l.b16 %v535
    %v2588 = vunpack.c.l.b16 %v536
    %v2589 = vunpack.c.l.b16 %v537
    %v2590 = vunpack.c.l.b16 %v538
    %v2591 = vunpack.c.l.b16 %v539
    %v2592 = vunpack.c.l.b16 %v540
    %v2593 = vunpack.c.l.b16 %v541
    %v2594 = vunpack.c.l.b16 %v542
    %v2595 = vunpack.c.l.b16 %v543
    %v2596 = vunpack.c.l.b16 %v544
    %v2597 = vunpack.c.l.b16 %v545
    %v2598 = vunpack.c.l.b16 %v546
    %v2599 = vunpack.c.l.b16 %v547
    %v2600 = vunpack.c.l.b16 %v548
    %v2601 = vunpack.c.l.b16 %v549
    %v2602 = vunpack.c.l.b16 %v550
    %v2603 = vunpack.c.l.b16 %v551
    %v2604 = vunpack.c.l.b16 %v552
    %v2605 = vunpack.c.l.b16 %v553
    %v2606 = vunpack.c.l.b16 %v554
    %v2607 = vunpack.c.l.b16 %v555
    %v2608 = vunpack.c.l.b16 %v556
    %v2609 = vunpack.c.l.b16 %v557
    %v2610 = vunpack.c.l.b16 %v558
    %v2611 = vunpack.c.l.b16 %v559
    %v2612 = vunpack.c.l.b16 %v560
    %v2613 = vunpack.c.l.b16 %v561
    %v2614 = vunpack.c.l.b16 %v562
    %v2615 = vunpack.c.l.b16 %v563
    %v2616 = vunpack.c.l.b16 %v564
    %v2617 = vunpack.c.l.b16 %v565
    %v2618 = vunpack.c.l.b16 %v566
    %v2619 = vunpack.c.l.b16 %v567
    %v2620 = vunpack.c.l.b16 %v568
    %v2621 = vunpack.c.l.b16 %v569
    %v2622 = vunpack.c.l.b16 %v570
    %v2623 = vunpack.c.l.b16 %v571
    %v2624 = vunpack.c.l.b16 %v572
    %v2625 = vunpack.c.l.b16 %v573
    %v2626 = vunpack.c.l.b16 %v574
    %v2627 = vunpack.c.l.b16 %v575
    %v2628 = vunpack.c.l.b16 %v576
    %v2629 = vunpack.c.l.b16 %v577
    %v2630 = vunpack.c.l.b16 %v578
    %v2631 = vunpack.c.l.b16 %v579
    %v2632 = vunpack.c.l.b16 %v580
    %v2633 = vunpack.c.l.b16 %v581
    %v2634 = vunpack.c.l.b16 %v582
    %v2635 = vunpack.c.l.b16 %v583
    %v2636 = vunpack.c.l.b16 %v584
    %v2637 = vunpack.c.l.b16 %v585
    %v2638 = vunpack.c.l.b16 %v586
    %v2639 = vunpack.c.l.b16 %v587
    %v2640 = vunpack.c.l.b16 %v588
    %v2641 = vunpack.c.l.b16 %v589
    %v2642 = vunpack.c.l.b16 %v590
    %v2643 = vunpack.c.l.b16 %v591
    %v2644 = vunpack.c.l.b16 %v592
    %v2645 = vunpack.c.l.b16 %v593
    %v2646 = vunpack.c.l.b16 %v594
    %v2647 = vunpack.c.l.b16 %v595
    %v2648 = vunpack.c.l.b16 %v596
    %v2649 = vunpack.c.l.b16 %v597
    %v2650 = vunpack.c.l.b16 %v598
    %v2651 = vunpack.c.l.b16 %v599
    %v2652 = vunpack.c.l.b16 %v600
    %v2653 = vunpack.c.l.b16 %v601
    %v2654 = vunpack.c.l.b16 %v602
    %v2655 = vunpack.c.l.b16 %v603
    %v2656 = vunpack.c.l.b16 %v604
    %v2657 = vunpack.c.l.b16 %v605
    %v2658 = vunpack.c.l.b16 %v606
    %v2659 = vunpack.c.l.b16 %v607
    %v2660 = vunpack.c.l.b16 %v608
    %v2661 = vunpack.c.l.b16 %v609
    %v2662 = vunpack.c.l.b16 %v610
    %v2663 = vunpack.c.l.b16 %v611
    %v2664 = vunpack.c.l.b16 %v612
    %v2665 = vunpack.c.l.b16 %v613
    %v2666 = vunpack.c.l.b16 %v614
    %v2667 = vunpack.c.l.b16 %v615
    %v2668 = vunpack.c.l.b16 %v616
    %v2669 = vunpack.c.l.b16 %v617
    %v2670 = vunpack.c.l.b16 %v618
    %v2671 = vunpack.c.l.b16 %v619
    %v2672 = vunpack.c.l.b16 %v620
    %v2673 = vunpack.c.l.b16 %v621
    %v2674 = vunpack.c.l.b16 %v622
    %v2675 = vunpack.c.l.b16 %v623
    %v2676 = vunpack.c.l.b16 %v624
    %v2677 = vunpack.c.l.b16 %v625
    %v2678 = vunpack.c.l.b16 %v626
    %v2679 = vunpack.c.l.b16 %v627
    %v2680 = vunpack.c.l.b16 %v628
    %v2681 = vunpack.c.l.b16 %v629
    %v2682 = vunpack.c.l.b16 %v630
    %v2683 = vunpack.c.l.b16 %v631
    %v2684 = vunpack.c.l.b16 %v632
    %v2685 = vunpack.c.l.b16 %v633
    %v2686 = vunpack.c.l.b16 %v634
    %v2687 = vunpack.c.l.b16 %v635
    %v2688 = vunpack.c.l.b16 %v636
    %v2689 = vunpack.c.l.b16 %v637
    %v2690 = vunpack.c.l.b16 %v638
    %v2691 = vunpack.c.l.b16 %v639
    %v2692 = vunpack.c.l.b16 %v640
    %v2693 = vunpack.c.l.b16 %v641
    %v2694 = vunpack.c.l.b16 %v642
    %v2695 = vunpack.c.l.b16 %v643
    %v2696 = vunpack.c.l.b16 %v644
    %v2697 = vunpack.c.l.b16 %v645
    %v2698 = vunpack.c.l.b16 %v646
    %v2699 = vunpack.c.l.b16 %v647
    %v2700 = vunpack.c.l.b16 %v648
    %v2701 = vunpack.c.l.b16 %v649
    %v2702 = vunpack.c.l.b16 %v650
    %v2703 = vunpack.c.l.b16 %v651
    %v2704 = vunpack.c.l.b16 %v652
    %v2705 = vunpack.c.l.b16 %v653
    %v2706 = vunpack.c.l.b16 %v654
    %v2707 = vunpack.c.l.b16 %v655
    %v2708 = vunpack.c.l.b16 %v656
    %v2709 = vunpack.c.l.b16 %v657
    %v2710 = vunpack.c.l.b16 %v658
    %v2711 = vunpack.c.l.b16 %v659
    %v2712 = vunpack.c.l.b16 %v660
    %v2713 = vunpack.c.l.b16 %v661
    %v2714 = vunpack.c.l.b16 %v662
    %v2715 = vunpack.c.l.b16 %v663
    %v2716 = vunpack.c.l.b16 %v664
    %v2717 = vunpack.c.l.b16 %v665
    %v2718 = vunpack.c.l.b16 %v666
    %v2719 = vunpack.c.l.b16 %v667
    %v2720 = vunpack.c.l.b16 %v668
    %v2721 = vunpack.c.l.b16 %v669
    %v2722 = vunpack.c.l.b16 %v670
    %v2723 = vunpack.c.l.b16 %v671
    %v2724 = vunpack.c.l.b16 %v672
    %v2725 = vunpack.c.l.b16 %v673
    %v2726 = vunpack.c.l.b16 %v674
    %v2727 = vunpack.c.l.b16 %v675
    %v2728 = vunpack.c.l.b16 %v676
    %v2729 = vunpack.c.l.b16 %v677
    %v2730 = vunpack.c.l.b16 %v678
    %v2731 = vunpack.c.l.b16 %v679
    %v2732 = vunpack.c.l.b16 %v680
    %v2733 = vunpack.c.l.b16 %v681
    %v2734 = vunpack.c.l.b16 %v682
    %v2735 = vunpack.c.l.b16 %v683
    %v2736 = vunpack.c.l.b16 %v684
    %v2737 = vunpack.c.l.b16 %v685
    %v2738 = vunpack.c.l.b16 %v686
    %v2739 = vunpack.c.l.b16 %v687
    %v2740 = vunpack.c.l.b16 %v688
    %v2741 = vunpack.c.l.b16 %v689
    %v2742 = vunpack.c.l.b16 %v690
    %v2743 = vunpack.c.l.b16 %v691
    %v2744 = vunpack.c.l.b16 %v692
    %v2745 = vunpack.c.l.b16 %v693
    %v2746 = vunpack.c.l.b16 %v694
    %v2747 = vunpack.c.l.b16 %v695
    %v2748 = vunpack.c.l.b16 %v696
    %v2749 = vunpack.c.l.b16 %v697
    %v2750 = vunpack.c.l.b16 %v698
    %v2751 = vunpack.c.l.b16 %v699
    %v2752 = vunpack.c.l.b16 %v700
    %v2753 = vunpack.c.l.b16 %v701
    %v2754 = vunpack.c.l.b16 %v702
    %v2755 = vunpack.c.l.b16 %v703
    %v2756 = vunpack.c.l.b16 %v704
    %v2757 = vunpack.c.l.b16 %v705
    %v2758 = vunpack.c.l.b16 %v706
    %v2759 = vunpack.c.l.b16 %v707
    %v2760 = vunpack.c.l.b16 %v708
    %v2761 = vunpack.c.l.b16 %v709
    %v2762 = vunpack.c.l.b16 %v710
    %v2763 = vunpack.c.l.b16 %v711
    %v2764 = vunpack.c.l.b16 %v712
    %v2765 = vunpack.c.l.b16 %v713
    %v2766 = vunpack.c.l.b16 %v714
    %v2767 = vunpack.c.l.b16 %v715
    %v2768 = vunpack.c.l.b16 %v716
    %v2769 = vunpack.c.l.b16 %v717
    %v2770 = vunpack.c.l.b16 %v718
    %v2771 = vunpack.c.l.b16 %v719
    %v2772 = vunpack.c.l.b16 %v720
    %v2773 = vunpack.c.l.b16 %v721
    %v2774 = vunpack.c.l.b16 %v722
    %v2775 = vunpack.c.l.b16 %v723
    %v2776 = vunpack.c.l.b16 %v724
    %v2777 = vunpack.c.l.b16 %v725
    %v2778 = vunpack.c.l.b16 %v726
    %v2779 = vunpack.c.l.b16 %v727
    %v2780 = vunpack.c.l.b16 %v728
    %v2781 = vunpack.c.l.b16 %v729
    %v2782 = vunpack.c.l.b16 %v730
    %v2783 = vunpack.c.l.b16 %v731
    %v2784 = vunpack.c.l.b16 %v732
    %v2785 = vunpack.c.l.b16 %v733
    %v2786 = vunpack.c.l.b16 %v734
    %v2787 = vunpack.c.l.b16 %v735
    %v2788 = vunpack.c.l.b16 %v736
    %v2789 = vunpack.c.l.b16 %v737
    %v2790 = vunpack.c.l.b16 %v738
    %v2791 = vunpack.c.l.b16 %v739
    %v2792 = vunpack.c.l.b16 %v740
    %v2793 = vunpack.c.l.b16 %v741
    %v2794 = vunpack.c.l.b16 %v742
    %v2795 = vunpack.c.l.b16 %v743
    %v2796 = vunpack.c.l.b16 %v744
    %v2797 = vunpack.c.l.b16 %v745
    %v2798 = vunpack.c.l.b16 %v746
    %v2799 = vunpack.c.l.b16 %v747
    %v2800 = vunpack.c.l.b16 %v748
    %v2801 = vunpack.c.l.b16 %v749
    %v2802 = vunpack.c.l.b16 %v750
    %v2803 = vunpack.c.l.b16 %v751
    %v2804 = vunpack.c.l.b16 %v752
    %v2805 = vunpack.c.l.b16 %v753
    %v2806 = vunpack.c.l.b16 %v754
    %v2807 = vunpack.c.l.b16 %v755
    %v2808 = vunpack.c.l.b16 %v756
    %v2809 = vunpack.c.l.b16 %v757
    %v2810 = vunpack.c.l.b16 %v758
    %v2811 = vunpack.c.l.b16 %v759
    %v2812 = vunpack.c.l.b16 %v760
    %v2813 = vunpack.c.l.b16 %v761
    %v2814 = vunpack.c.l.b16 %v762
    %v2815 = vunpack.c.l.b16 %v763
    %v2816 = vunpack.c.l.b16 %v764
    %v2817 = vunpack.c.l.b16 %v765
    %v2818 = vunpack.c.l.b16 %v766
    %v2819 = vunpack.c.l.b16 %v767
    %v2820 = vunpack.c.l.b16 %v768
    %v2821 = vunpack.c.l.b16 %v769
    %v2822 = vunpack.c.l.b16 %v770
    %v2823 = vunpack.c.l.b16 %v771
    %v2824 = vunpack.c.l.b16 %v772
    %v2825 = vunpack.c.l.b16 %v773
    %v2826 = vunpack.c.l.b16 %v774
    %v2827 = vunpack.c.l.b16 %v775
    %v2828 = vunpack.c.l.b16 %v776
    %v2829 = vunpack.c.l.b16 %v777
    %v2830 = vunpack.c.l.b16 %v778
    %v2831 = vunpack.c.l.b16 %v779
    %v2832 = vunpack.c.l.b16 %v780
    %v2833 = vunpack.c.l.b16 %v781
    %v2834 = vunpack.c.l.b16 %v782
    %v2835 = vunpack.c.l.b16 %v783
    %v2836 = vunpack.c.l.b16 %v784
    %v2837 = vunpack.c.l.b16 %v785
    %v2838 = vunpack.c.l.b16 %v786
    %v2839 = vunpack.c.l.b16 %v787
    %v2840 = vunpack.c.l.b16 %v788
    %v2841 = vunpack.c.l.b16 %v789
    %v2842 = vunpack.c.l.b16 %v790
    %v2843 = vunpack.c.l.b16 %v791
    %v2844 = vunpack.c.l.b16 %v792
    %v2845 = vunpack.c.l.b16 %v793
    %v2846 = vunpack.c.l.b16 %v794
    %v2847 = vunpack.c.l.b16 %v795
    %v2848 = vunpack.c.l.b16 %v796
    %v2849 = vunpack.c.l.b16 %v797
    %v2850 = vunpack.c.l.b16 %v798
    %v2851 = vunpack.c.l.b16 %v799
    %v2852 = vunpack.c.l.b16 %v800
    %v2853 = vunpack.c.l.b16 %v801
    %v2854 = vunpack.c.l.b16 %v802
    %v2855 = vunpack.c.l.b16 %v803
    %v2856 = vunpack.c.l.b16 %v804
    %v2857 = vunpack.c.l.b16 %v805
    %v2858 = vunpack.c.l.b16 %v806
    %v2859 = vunpack.c.l.b16 %v807
    %v2860 = vunpack.c.l.b16 %v808
    %v2861 = vunpack.c.l.b16 %v809
    %v2862 = vunpack.c.l.b16 %v810
    %v2863 = vunpack.c.l.b16 %v811
    %v2864 = vunpack.c.l.b16 %v812
    %v2865 = vunpack.c.l.b16 %v813
    %v2866 = vunpack.c.l.b16 %v814
    %v2867 = vunpack.c.l.b16 %v815
    %v2868 = vunpack.c.l.b16 %v816
    %v2869 = vunpack.c.l.b16 %v817
    %v2870 = vunpack.c.l.b16 %v818
    %v2871 = vunpack.c.l.b16 %v819
    %v2872 = vunpack.c.l.b16 %v820
    %v2873 = vunpack.c.l.b16 %v821
    %v2874 = vunpack.c.l.b16 %v822
    %v2875 = vunpack.c.l.b16 %v823
    %v2876 = vunpack.c.l.b16 %v824
    %v2877 = vunpack.c.l.b16 %v825
    %v2878 = vunpack.c.l.b16 %v826
    %v2879 = vunpack.c.l.b16 %v827
    %v2880 = vunpack.c.l.b16 %v828
    %v2881 = vunpack.c.l.b16 %v829
    %v2882 = vunpack.c.l.b16 %v830
    %v2883 = vunpack.c.l.b16 %v831
    %v2884 = vunpack.c.l.b16 %v832
    %v2885 = vunpack.c.l.b16 %v833
    %v2886 = vunpack.c.l.b16 %v834
    %v2887 = vunpack.c.l.b16 %v835
    %v2888 = vunpack.c.l.b16 %v836
    %v2889 = vunpack.c.l.b16 %v837
    %v2890 = vunpack.c.l.b16 %v838
    %v2891 = vunpack.c.l.b16 %v839
    %v2892 = vunpack.c.l.b16 %v840
    %v2893 = vunpack.c.l.b16 %v841
    %v2894 = vunpack.c.l.b16 %v842
    %v2895 = vunpack.c.l.b16 %v843
    %v2896 = vunpack.c.l.b16 %v844
    %v2897 = vunpack.c.l.b16 %v845
    %v2898 = vunpack.c.l.b16 %v846
    %v2899 = vunpack.c.l.b16 %v847
    %v2900 = vunpack.c.l.b16 %v848
    %v2901 = vunpack.c.l.b16 %v849
    %v2902 = vunpack.c.l.b16 %v850
    %v2903 = vunpack.c.l.b16 %v851
    %v2904 = vunpack.c.l.b16 %v852
    %v2905 = vunpack.c.l.b16 %v853
    %v2906 = vunpack.c.l.b16 %v854
    %v2907 = vunpack.c.l.b16 %v855
    %v2908 = vunpack.c.l.b16 %v856
    %v2909 = vunpack.c.l.b16 %v857
    %v2910 = vunpack.c.l.b16 %v858
    %v2911 = vunpack.c.l.b16 %v859
    %v2912 = vunpack.c.l.b16 %v860
    %v2913 = vunpack.c.l.b16 %v861
    %v2914 = vunpack.c.l.b16 %v862
    %v2915 = vunpack.c.l.b16 %v863
    %v2916 = vunpack.c.l.b16 %v864
    %v2917 = vunpack.c.l.b16 %v865
    %v2918 = vunpack.c.l.b16 %v866
    %v2919 = vunpack.c.l.b16 %v867
    %v2920 = vunpack.c.l.b16 %v868
    %v2921 = vunpack.c.l.b16 %v869
    %v2922 = vunpack.c.l.b16 %v870
    %v2923 = vunpack.c.l.b16 %v871
    %v2924 = vunpack.c.l.b16 %v872
    %v2925 = vunpack.c.l.b16 %v873
    %v2926 = vunpack.c.l.b16 %v874
    %v2927 = vunpack.c.l.b16 %v875
    %v2928 = vunpack.c.l.b16 %v876
    %v2929 = vunpack.c.l.b16 %v877
    %v2930 = vunpack.c.l.b16 %v878
    %v2931 = vunpack.c.l.b16 %v879
    %v2932 = vunpack.c.l.b16 %v880
    %v2933 = vunpack.c.l.b16 %v881
    %v2934 = vunpack.c.l.b16 %v882
    %v2935 = vunpack.c.l.b16 %v883
    %v2936 = vunpack.c.l.b16 %v884
    %v2937 = vunpack.c.l.b16 %v885
    %v2938 = vunpack.c.l.b16 %v886
    %v2939 = vunpack.c.l.b16 %v887
    %v2940 = vunpack.c.l.b16 %v888
    %v2941 = vunpack.c.l.b16 %v889
    %v2942 = vunpack.c.l.b16 %v890
    %v2943 = vunpack.c.l.b16 %v891
    %v2944 = vunpack.c.l.b16 %v892
    %v2945 = vunpack.c.l.b16 %v893
    %v2946 = vunpack.c.l.b16 %v894
    %v2947 = vunpack.c.l.b16 %v895
    %v2948 = vunpack.c.l.b16 %v896
    %v2949 = vunpack.c.l.b16 %v897
    %v2950 = vunpack.c.l.b16 %v898
    %v2951 = vunpack.c.l.b16 %v899
    %v2952 = vunpack.c.l.b16 %v900
    %v2953 = vunpack.c.l.b16 %v901
    %v2954 = vunpack.c.l.b16 %v902
    %v2955 = vunpack.c.l.b16 %v903
    %v2956 = vunpack.c.l.b16 %v904
    %v2957 = vunpack.c.l.b16 %v905
    %v2958 = vunpack.c.l.b16 %v906
    %v2959 = vunpack.c.l.b16 %v907
    %v2960 = vunpack.c.l.b16 %v908
    %v2961 = vunpack.c.l.b16 %v909
    %v2962 = vunpack.c.l.b16 %v910
    %v2963 = vunpack.c.l.b16 %v911
    %v2964 = vunpack.c.l.b16 %v912
    %v2965 = vunpack.c.l.b16 %v913
    %v2966 = vunpack.c.l.b16 %v914
    %v2967 = vunpack.c.l.b16 %v915
    %v2968 = vunpack.c.l.b16 %v916
    %v2969 = vunpack.c.l.b16 %v917
    %v2970 = vunpack.c.l.b16 %v918
    %v2971 = vunpack.c.l.b16 %v919
    %v2972 = vunpack.c.l.b16 %v920
    %v2973 = vunpack.c.l.b16 %v921
    %v2974 = vunpack.c.l.b16 %v922
    %v2975 = vunpack.c.l.b16 %v923
    %v2976 = vunpack.c.l.b16 %v924
    %v2977 = vunpack.c.l.b16 %v925
    %v2978 = vunpack.c.l.b16 %v926
    %v2979 = vunpack.c.l.b16 %v927
    %v2980 = vunpack.c.l.b16 %v928
    %v2981 = vunpack.c.l.b16 %v929
    %v2982 = vunpack.c.l.b16 %v930
    %v2983 = vunpack.c.l.b16 %v931
    %v2984 = vunpack.c.l.b16 %v932
    %v2985 = vunpack.c.l.b16 %v933
    %v2986 = vunpack.c.l.b16 %v934
    %v2987 = vunpack.c.l.b16 %v935
    %v2988 = vunpack.c.l.b16 %v936
    %v2989 = vunpack.c.l.b16 %v937
    %v2990 = vunpack.c.l.b16 %v938
    %v2991 = vunpack.c.l.b16 %v939
    %v2992 = vunpack.c.l.b16 %v940
    %v2993 = vunpack.c.l.b16 %v941
    %v2994 = vunpack.c.l.b16 %v942
    %v2995 = vunpack.c.l.b16 %v943
    %v2996 = vunpack.c.l.b16 %v944
    %v2997 = vunpack.c.l.b16 %v945
    %v2998 = vunpack.c.l.b16 %v946
    %v2999 = vunpack.c.l.b16 %v947
    %v3000 = vunpack.c.l.b16 %v948
    %v3001 = vunpack.c.l.b16 %v949
    %v3002 = vunpack.c.l.b16 %v950
    %v3003 = vunpack.c.l.b16 %v951
    %v3004 = vunpack.c.l.b16 %v952
    %v3005 = vunpack.c.l.b16 %v953
    %v3006 = vunpack.c.l.b16 %v954
    %v3007 = vunpack.c.l.b16 %v955
    %v3008 = vunpack.c.l.b16 %v956
    %v3009 = vunpack.c.l.b16 %v957
    %v3010 = vunpack.c.l.b16 %v958
    %v3011 = vunpack.c.l.b16 %v959
    %v3012 = vunpack.c.l.b16 %v960
    %v3013 = vunpack.c.l.b16 %v961
    %v3014 = vunpack.c.l.b16 %v962
    %v3015 = vunpack.c.l.b16 %v963
    %v3016 = vunpack.c.l.b16 %v964
    %v3017 = vunpack.c.l.b16 %v965
    %v3018 = vunpack.c.l.b16 %v966
    %v3019 = vunpack.c.l.b16 %v967
    %v3020 = vunpack.c.l.b16 %v968
    %v3021 = vunpack.c.l.b16 %v969
    %v3022 = vunpack.c.l.b16 %v970
    %v3023 = vunpack.c.l.b16 %v971
    %v3024 = vunpack.c.l.b16 %v972
    %v3025 = vunpack.c.l.b16 %v973
    %v3026 = vunpack.c.l.b16 %v974
    %v3027 = vunpack.c.l.b16 %v975
    %v3028 = vunpack.c.l.b16 %v976
    %v3029 = vunpack.c.l.b16 %v977
    %v3030 = vunpack.c.l.b16 %v978
    %v3031 = vunpack.c.l.b16 %v979
    %v3032 = vunpack.c.l.b16 %v980
    %v3033 = vunpack.c.l.b16 %v981
    %v3034 = vunpack.c.l.b16 %v982
    %v3035 = vunpack.c.l.b16 %v983
    %v3036 = vunpack.c.l.b16 %v984
    %v3037 = vunpack.c.l.b16 %v985
    %v3038 = vunpack.c.l.b16 %v986
    %v3039 = vunpack.c.l.b16 %v987
    %v3040 = vunpack.c.l.b16 %v988
    %v3041 = vunpack.c.l.b16 %v989
    %v3042 = vunpack.c.l.b16 %v990
    %v3043 = vunpack.c.l.b16 %v991
    %v3044 = vunpack.c.l.b16 %v992
    %v3045 = vunpack.c.l.b16 %v993
    %v3046 = vunpack.c.l.b16 %v994
    %v3047 = vunpack.c.l.b16 %v995
    %v3048 = vunpack.c.l.b16 %v996
    %v3049 = vunpack.c.l.b16 %v997
    %v3050 = vunpack.c.l.b16 %v998
    %v3051 = vunpack.c.l.b16 %v999
    %v3052 = vunpack.c.l.b16 %v1000
    %v3053 = vunpack.c.l.b16 %v1001
    %v3054 = vunpack.c.l.b16 %v1002
    %v3055 = vunpack.c.l.b16 %v1003
    %v3056 = vunpack.c.l.b16 %v1004
    %v3057 = vunpack.c.l.b16 %v1005
    %v3058 = vunpack.c.l.b16 %v1006
    %v3059 = vunpack.c.l.b16 %v1007
    %v3060 = vunpack.c.l.b16 %v1008
    %v3061 = vunpack.c.l.b16 %v1009
    %v3062 = vunpack.c.l.b16 %v1010
    %v3063 = vunpack.c.l.b16 %v1011
    %v3064 = vunpack.c.l.b16 %v1012
    %v3065 = vunpack.c.l.b16 %v1013
    %v3066 = vunpack.c.l.b16 %v1014
    %v3067 = vunpack.c.l.b16 %v1015
    %v3068 = vunpack.c.l.b16 %v1016
    %v3069 = vunpack.c.l.b16 %v1017
    %v3070 = vunpack.c.l.b16 %v1018
    %v3071 = vunpack.c.l.b16 %v1019
    %v3072 = vunpack.c.l.b16 %v1020
    %v3073 = vunpack.c.l.b16 %v1021
    %v3074 = vunpack.c.l.b16 %v1022
    %v3075 = vunpack.c.l.b16 %v1023
    %v3076 = vunpack.c.l.b16 %v1024
    %v3077 = vunpack.c.l.b16 %v1025
    %v3078 = vunpack.c.l.b16 %v1026
    %v3079 = vunpack.c.l.b16 %v1027
    %v3080 = vunpack.c.l.b16 %v1028
    %v3081 = vunpack.c.l.b16 %v1029
    %v3082 = vunpack.c.l.b16 %v1030
    %v3083 = vunpack.c.l.b16 %v1031
    %v3084 = vunpack.c.l.b16 %v1032
    %v3085 = vunpack.c.l.b16 %v1033
    %v3086 = vunpack.c.l.b16 %v1034
    %v3087 = vunpack.c.l.b16 %v1035
    %v3088 = vunpack.c.l.b16 %v1036
    %v3089 = vunpack.c.l.b16 %v1037
    %v3090 = vunpack.c.l.b16 %v1038
    %v3091 = vunpack.c.l.b16 %v1039
    %v3092 = vunpack.c.l.b16 %v1040
    %v3093 = vunpack.c.l.b16 %v1041
    %v3094 = vunpack.c.l.b16 %v1042
    %v3095 = vunpack.c.l.b16 %v1043
    %v3096 = vunpack.c.l.b16 %v1044
    %v3097 = vunpack.c.l.b16 %v1045
    %v3098 = vunpack.c.l.b16 %v1046
    %v3099 = vunpack.c.l.b16 %v1047
    %v3100 = vunpack.c.l.b16 %v1048
    %v3101 = vunpack.c.l.b16 %v1049
    %v3102 = vunpack.c.l.b16 %v1050
    %v3103 = vunpack.c.l.b16 %v1051
    %v3104 = vunpack.c.l.b16 %v1052
    %v3105 = vunpack.c.l.b16 %v1053
    %v3106 = vunpack.c.l.b16 %v1054
    %v3107 = vunpack.c.l.b16 %v1055
    %v3108 = vunpack.c.l.b16 %v1056
    %v3109 = vunpack.c.l.b16 %v1057
    %v3110 = vunpack.c.l.b16 %v1058
    %v3111 = vunpack.c.l.b16 %v1059
    %v3112 = vunpack.c.l.b16 %v1060
    %v3113 = vunpack.c.l.b16 %v1061
    %v3114 = vunpack.c.l.b16 %v1062
    %v3115 = vunpack.c.l.b16 %v1063
    %v3116 = vunpack.c.l.b16 %v1064
    %v3117 = vunpack.c.l.b16 %v1065
    %v3118 = vunpack.c.l.b16 %v1066
    %v3119 = vunpack.c.l.b16 %v1067
    %v3120 = vunpack.c.l.b16 %v1068
    %v3121 = vunpack.c.l.b16 %v1069
    %v3122 = vunpack.c.l.b16 %v1070
    %v3123 = vunpack.c.l.b16 %v1071
    %v3124 = vunpack.c.l.b16 %v1072
    %v3125 = vunpack.c.l.b16 %v1073
    %v3126 = vunpack.c.l.b16 %v1074
    %v3127 = vunpack.c.l.b16 %v1075
    %v3128 = vunpack.c.l.b16 %v1076
    %v3129 = vunpack.c.l.b16 %v1077
    %v3130 = vunpack.c.l.b16 %v1078
    %v3131 = vunpack.c.l.b16 %v1079
    %v3132 = vunpack.c.l.b16 %v1080
    %v3133 = vunpack.c.l.b16 %v1081
    %v3134 = vunpack.c.l.b16 %v1082
    %v3135 = vunpack.c.l.b16 %v1083
    %v3136 = vunpack.c.l.b16 %v1084
    %v3137 = vunpack.c.l.b16 %v1085
    %v3138 = vunpack.c.l.b16 %v1086
    %v3139 = vunpack.c.l.b16 %v1087
    %v3140 = vunpack.c.l.b16 %v1088
    %v3141 = vunpack.c.l.b16 %v1089
    %v3142 = vunpack.c.l.b16 %v1090
    %v3143 = vunpack.c.l.b16 %v1091
    %v3144 = vunpack.c.l.b16 %v1092
    %v3145 = vunpack.c.l.b16 %v1093
    %v3146 = vunpack.c.l.b16 %v1094
    %v3147 = vunpack.c.l.b16 %v1095
    %v3148 = vunpack.c.l.b16 %v1096
    %v3149 = vunpack.c.l.b16 %v1097
    %v3150 = vunpack.c.l.b16 %v1098
    %v3151 = vunpack.c.l.b16 %v1099
    %v3152 = vunpack.c.l.b16 %v1100
    %v3153 = vunpack.c.l.b16 %v1101
    %v3154 = vunpack.c.l.b16 %v1102
    %v3155 = vunpack.c.l.b16 %v1103
    %v3156 = vunpack.c.l.b16 %v1104
    %v3157 = vunpack.c.l.b16 %v1105
    %v3158 = vunpack.c.l.b16 %v1106
    %v3159 = vunpack.c.l.b16 %v1107
    %v3160 = vunpack.c.l.b16 %v1108
    %v3161 = vunpack.c.l.b16 %v1109
    %v3162 = vunpack.c.l.b16 %v1110
    %v3163 = vunpack.c.l.b16 %v1111
    %v3164 = vunpack.c.l.b16 %v1112
    %v3165 = vunpack.c.l.b16 %v1113
    %v3166 = vunpack.c.l.b16 %v1114
    %v3167 = vunpack.c.l.b16 %v1115
    %v3168 = vunpack.c.l.b16 %v1116
    %v3169 = vunpack.c.l.b16 %v1117
    %v3170 = vunpack.c.l.b16 %v1118
    %v3171 = vunpack.c.l.b16 %v1119
    %v3172 = vunpack.c.l.b16 %v1120
    %v3173 = vunpack.c.l.b16 %v1121
    %v3174 = vunpack.c.l.b16 %v1122
    %v3175 = vunpack.c.l.b16 %v1123
    %v3176 = vunpack.c.l.b16 %v1124
    %v3177 = vunpack.c.l.b16 %v1125
    %v3178 = vunpack.c.l.b16 %v1126
    %v3179 = vunpack.c.l.b16 %v1127
    %v3180 = vunpack.c.l.b16 %v1128
    %v3181 = vunpack.c.l.b16 %v1129
    %v3182 = vunpack.c.l.b16 %v1130
    %v3183 = vunpack.c.l.b16 %v1131
    %v3184 = vunpack.c.l.b16 %v1132
    %v3185 = vunpack.c.l.b16 %v1133
    %v3186 = vunpack.c.l.b16 %v1134
    %v3187 = vunpack.c.l.b16 %v1135
    %v3188 = vunpack.c.l.b16 %v1136
    %v3189 = vunpack.c.l.b16 %v1137
    %v3190 = vunpack.c.l.b16 %v1138
    %v3191 = vunpack.c.l.b16 %v1139
    %v3192 = vunpack.c.l.b16 %v1140
    %v3193 = vunpack.c.l.b16 %v1141
    %v3194 = vunpack.c.l.b16 %v1142
    %v3195 = vunpack.c.l.b16 %v1143
    %v3196 = vunpack.c.l.b16 %v1144
    %v3197 = vunpack.c.l.b16 %v1145
    %v3198 = vunpack.c.l.b16 %v1146
    %v3199 = vunpack.c.l.b16 %v1147
    %v3200 = vunpack.c.l.b16 %v1148
    %v3201 = vunpack.c.l.b16 %v1149
    %v3202 = vunpack.c.l.b16 %v1150
    %v3203 = vunpack.c.l.b16 %v1151
    %v3204 = vunpack.c.l.b16 %v1152
    %v3205 = vunpack.c.l.b16 %v1153
    %v3206 = vunpack.c.l.b16 %v1154
    %v3207 = vunpack.c.l.b16 %v1155
    %v3208 = vunpack.c.l.b16 %v1156
    %v3209 = vunpack.c.l.b16 %v1157
    %v3210 = vunpack.c.l.b16 %v1158
    %v3211 = vunpack.c.l.b16 %v1159
    %v3212 = vunpack.c.l.b16 %v1160
    %v3213 = vunpack.c.l.b16 %v1161
    %v3214 = vunpack.c.l.b16 %v1162
    %v3215 = vunpack.c.l.b16 %v1163
    %v3216 = vunpack.c.l.b16 %v1164
    %v3217 = vunpack.c.l.b16 %v1165
    %v3218 = vunpack.c.l.b16 %v1166
    %v3219 = vunpack.c.l.b16 %v1167
    %v3220 = vunpack.c.l.b16 %v1168
    %v3221 = vunpack.c.l.b16 %v1169
    %v3222 = vunpack.c.l.b16 %v1170
    %v3223 = vunpack.c.l.b16 %v1171
    %v3224 = vunpack.c.l.b16 %v1172
    %v3225 = vunpack.c.l.b16 %v1173
    %v3226 = vunpack.c.l.b16 %v1174
    %v3227 = vunpack.c.l.b16 %v1175
    %v3228 = vunpack.c.l.b16 %v1176
    %v3229 = vunpack.c.l.b16 %v1177
    %v3230 = vunpack.c.l.b16 %v1178
    %v3231 = vunpack.c.l.b16 %v1179
    %v3232 = vunpack.c.l.b16 %v1180
    %v3233 = vunpack.c.l.b16 %v1181
    %v3234 = vunpack.c.l.b16 %v1182
    %v3235 = vunpack.c.l.b16 %v1183
    %v3236 = vunpack.c.l.b16 %v1184
    %v3237 = vunpack.c.l.b16 %v1185
    %v3238 = vunpack.c.l.b16 %v1186
    %v3239 = vunpack.c.l.b16 %v1187
    %v3240 = vunpack.c.l.b16 %v1188
    %v3241 = vunpack.c.l.b16 %v1189
    %v3242 = vunpack.c.l.b16 %v1190
    %v3243 = vunpack.c.l.b16 %v1191
    %v3244 = vunpack.c.l.b16 %v1192
    %v3245 = vunpack.c.l.b16 %v1193
    %v3246 = vunpack.c.l.b16 %v1194
    %v3247 = vunpack.c.l.b16 %v1195
    %v3248 = vunpack.c.l.b16 %v1196
    %v3249 = vunpack.c.l.b16 %v1197
    %v3250 = vunpack.c.l.b16 %v1198
    %v3251 = vunpack.c.l.b16 %v1199
    %v3252 = vunpack.c.l.b16 %v1200
    %v3253 = vunpack.c.l.b16 %v1201
    %v3254 = vunpack.c.l.b16 %v1202
    %v3255 = vunpack.c.l.b16 %v1203
    %v3256 = vunpack.c.l.b16 %v1204
    %v3257 = vunpack.c.l.b16 %v1205
    %v3258 = vunpack.c.l.b16 %v1206
    %v3259 = vunpack.c.l.b16 %v1207
    %v3260 = vunpack.c.l.b16 %v1208
    %v3261 = vunpack.c.l.b16 %v1209
    %v3262 = vpack.c.b16 %v2239, %v2238
    %v3263 = vpack.c.b16 %v2241, %v2240
    %v3264 = vpack.c.b16 %v2243, %v2242
    %v3265 = vpack.c.b16 %v2245, %v2244
    %v3266 = vpack.c.b16 %v2247, %v2246
    %v3267 = vpack.c.b16 %v2249, %v2248
    %v3268 = vpack.c.b16 %v2251, %v2250
    %v3269 = vpack.c.b16 %v2253, %v2252
    %v3270 = vpack.c.b16 %v2255, %v2254
    %v3271 = vpack.c.b16 %v2257, %v2256
    %v3272 = vpack.c.b16 %v2259, %v2258
    %v3273 = vpack.c.b16 %v2261, %v2260
    %v3274 = vpack.c.b16 %v2263, %v2262
    %v3275 = vpack.c.b16 %v2265, %v2264
    %v3276 = vpack.c.b16 %v2267, %v2266
    %v3277 = vpack.c.b16 %v2269, %v2268
    %v3278 = vpack.c.b16 %v2271, %v2270
    %v3279 = vpack.c.b16 %v2273, %v2272
    %v3280 = vpack.c.b16 %v2275, %v2274
    %v3281 = vpack.c.b16 %v2277, %v2276
    %v3282 = vpack.c.b16 %v2279, %v2278
    %v3283 = vpack.c.b16 %v2281, %v2280
    %v3284 = vpack.c.b16 %v2283, %v2282
    %v3285 = vpack.c.b16 %v2285, %v2284
    %v3286 = vpack.c.b16 %v2287, %v2286
    %v3287 = vpack.c.b16 %v2289, %v2288
    %v3288 = vpack.c.b16 %v2291, %v2290
    %v3289 = vpack.c.b16 %v2293, %v2292
    %v3290 = vpack.c.b16 %v2295, %v2294
    %v3291 = vpack.c.b16 %v2297, %v2296
    %v3292 = vpack.c.b16 %v2299, %v2298
    %v3293 = vpack.c.b16 %v2301, %v2300
    %v3294 = vpack.c.b16 %v2303, %v2302
    %v3295 = vpack.c.b16 %v2305, %v2304
    %v3296 = vpack.c.b16 %v2307, %v2306
    %v3297 = vpack.c.b16 %v2309, %v2308
    %v3298 = vpack.c.b16 %v2311, %v2310
    %v3299 = vpack.c.b16 %v2313, %v2312
    %v3300 = vpack.c.b16 %v2315, %v2314
    %v3301 = vpack.c.b16 %v2317, %v2316
    %v3302 = vpack.c.b16 %v2319, %v2318
    %v3303 = vpack.c.b16 %v2321, %v2320
    %v3304 = vpack.c.b16 %v2323, %v2322
    %v3305 = vpack.c.b16 %v2325, %v2324
    %v3306 = vpack.c.b16 %v2327, %v2326
    %v3307 = vpack.c.b16 %v2329, %v2328
    %v3308 = vpack.c.b16 %v2331, %v2330
    %v3309 = vpack.c.b16 %v2333, %v2332
    %v3310 = vpack.c.b16 %v2335, %v2334
    %v3311 = vpack.c.b16 %v2337, %v2336
    %v3312 = vpack.c.b16 %v2339, %v2338
    %v3313 = vpack.c.b16 %v2341, %v2340
    %v3314 = vpack.c.b16 %v2343, %v2342
    %v3315 = vpack.c.b16 %v2345, %v2344
    %v3316 = vpack.c.b16 %v2347, %v2346
    %v3317 = vpack.c.b16 %v2349, %v2348
    %v3318 = vpack.c.b16 %v2351, %v2350
    %v3319 = vpack.c.b16 %v2353, %v2352
    %v3320 = vpack.c.b16 %v2355, %v2354
    %v3321 = vpack.c.b16 %v2357, %v2356
    %v3322 = vpack.c.b16 %v2359, %v2358
    %v3323 = vpack.c.b16 %v2361, %v2360
    %v3324 = vpack.c.b16 %v2363, %v2362
    %v3325 = vpack.c.b16 %v2365, %v2364
    %v3326 = vpack.c.b16 %v2367, %v2366
    %v3327 = vpack.c.b16 %v2369, %v2368
    %v3328 = vpack.c.b16 %v2371, %v2370
    %v3329 = vpack.c.b16 %v2373, %v2372
    %v3330 = vpack.c.b16 %v2375, %v2374
    %v3331 = vpack.c.b16 %v2377, %v2376
    %v3332 = vpack.c.b16 %v2379, %v2378
    %v3333 = vpack.c.b16 %v2381, %v2380
    %v3334 = vpack.c.b16 %v2383, %v2382
    %v3335 = vpack.c.b16 %v2385, %v2384
    %v3336 = vpack.c.b16 %v2387, %v2386
    %v3337 = vpack.c.b16 %v2389, %v2388
    %v3338 = vpack.c.b16 %v2391, %v2390
    %v3339 = vpack.c.b16 %v2393, %v2392
    %v3340 = vpack.c.b16 %v2395, %v2394
    %v3341 = vpack.c.b16 %v2397, %v2396
    %v3342 = vpack.c.b16 %v2399, %v2398
    %v3343 = vpack.c.b16 %v2401, %v2400
    %v3344 = vpack.c.b16 %v2403, %v2402
    %v3345 = vpack.c.b16 %v2405, %v2404
    %v3346 = vpack.c.b16 %v2407, %v2406
    %v3347 = vpack.c.b16 %v2409, %v2408
    %v3348 = vpack.c.b16 %v2411, %v2410
    %v3349 = vpack.c.b16 %v2413, %v2412
    %v3350 = vpack.c.b16 %v2415, %v2414
    %v3351 = vpack.c.b16 %v2417, %v2416
    %v3352 = vpack.c.b16 %v2419, %v2418
    %v3353 = vpack.c.b16 %v2421, %v2420
    %v3354 = vpack.c.b16 %v2423, %v2422
    %v3355 = vpack.c.b16 %v2425, %v2424
    %v3356 = vpack.c.b16 %v2427, %v2426
    %v3357 = vpack.c.b16 %v2429, %v2428
    %v3358 = vpack.c.b16 %v2431, %v2430
    %v3359 = vpack.c.b16 %v2433, %v2432
    %v3360 = vpack.c.b16 %v2435, %v2434
    %v3361 = vpack.c.b16 %v2437, %v2436
    %v3362 = vpack.c.b16 %v2439, %v2438
    %v3363 = vpack.c.b16 %v2441, %v2440
    %v3364 = vpack.c.b16 %v2443, %v2442
    %v3365 = vpack.c.b16 %v2445, %v2444
    %v3366 = vpack.c.b16 %v2447, %v2446
    %v3367 = vpack.c.b16 %v2449, %v2448
    %v3368 = vpack.c.b16 %v2451, %v2450
    %v3369 = vpack.c.b16 %v2453, %v2452
    %v3370 = vpack.c.b16 %v2455, %v2454
    %v3371 = vpack.c.b16 %v2457, %v2456
    %v3372 = vpack.c.b16 %v2459, %v2458
    %v3373 = vpack.c.b16 %v2461, %v2460
    %v3374 = vpack.c.b16 %v2463, %v2462
    %v3375 = vpack.c.b16 %v2465, %v2464
    %v3376 = vpack.c.b16 %v2467, %v2466
    %v3377 = vpack.c.b16 %v2469, %v2468
    %v3378 = vpack.c.b16 %v2471, %v2470
    %v3379 = vpack.c.b16 %v2473, %v2472
    %v3380 = vpack.c.b16 %v2475, %v2474
    %v3381 = vpack.c.b16 %v2477, %v2476
    %v3382 = vpack.c.b16 %v2479, %v2478
    %v3383 = vpack.c.b16 %v2481, %v2480
    %v3384 = vpack.c.b16 %v2483, %v2482
    %v3385 = vpack.c.b16 %v2485, %v2484
    %v3386 = vpack.c.b16 %v2487, %v2486
    %v3387 = vpack.c.b16 %v2489, %v2488
    %v3388 = vpack.c.b16 %v2491, %v2490
    %v3389 = vpack.c.b16 %v2493, %v2492
    %v3390 = vpack.c.b16 %v2495, %v2494
    %v3391 = vpack.c.b16 %v2497, %v2496
    %v3392 = vpack.c.b16 %v2499, %v2498
    %v3393 = vpack.c.b16 %v2501, %v2500
    %v3394 = vpack.c.b16 %v2503, %v2502
    %v3395 = vpack.c.b16 %v2505, %v2504
    %v3396 = vpack.c.b16 %v2507, %v2506
    %v3397 = vpack.c.b16 %v2509, %v2508
    %v3398 = vpack.c.b16 %v2511, %v2510
    %v3399 = vpack.c.b16 %v2513, %v2512
    %v3400 = vpack.c.b16 %v2515, %v2514
    %v3401 = vpack.c.b16 %v2517, %v2516
    %v3402 = vpack.c.b16 %v2519, %v2518
    %v3403 = vpack.c.b16 %v2521, %v2520
    %v3404 = vpack.c.b16 %v2523, %v2522
    %v3405 = vpack.c.b16 %v2525, %v2524
    %v3406 = vpack.c.b16 %v2527, %v2526
    %v3407 = vpack.c.b16 %v2529, %v2528
    %v3408 = vpack.c.b16 %v2531, %v2530
    %v3409 = vpack.c.b16 %v2533, %v2532
    %v3410 = vpack.c.b16 %v2535, %v2534
    %v3411 = vpack.c.b16 %v2537, %v2536
    %v3412 = vpack.c.b16 %v2539, %v2538
    %v3413 = vpack.c.b16 %v2541, %v2540
    %v3414 = vpack.c.b16 %v2543, %v2542
    %v3415 = vpack.c.b16 %v2545, %v2544
    %v3416 = vpack.c.b16 %v2547, %v2546
    %v3417 = vpack.c.b16 %v2549, %v2548
    %v3418 = vpack.c.b16 %v2551, %v2550
    %v3419 = vpack.c.b16 %v2553, %v2552
    %v3420 = vpack.c.b16 %v2555, %v2554
    %v3421 = vpack.c.b16 %v2557, %v2556
    %v3422 = vpack.c.b16 %v2559, %v2558
    %v3423 = vpack.c.b16 %v2561, %v2560
    %v3424 = vpack.c.b16 %v2563, %v2562
    %v3425 = vpack.c.b16 %v2565, %v2564
    %v3426 = vpack.c.b16 %v2567, %v2566
    %v3427 = vpack.c.b16 %v2569, %v2568
    %v3428 = vpack.c.b16 %v2571, %v2570
    %v3429 = vpack.c.b16 %v2573, %v2572
    %v3430 = vpack.c.b16 %v2575, %v2574
    %v3431 = vpack.c.b16 %v2577, %v2576
    %v3432 = vpack.c.b16 %v2579, %v2578
    %v3433 = vpack.c.b16 %v2581, %v2580
    %v3434 = vpack.c.b16 %v2583, %v2582
    %v3435 = vpack.c.b16 %v2585, %v2584
    %v3436 = vpack.c.b16 %v2587, %v2586
    %v3437 = vpack.c.b16 %v2589, %v2588
    %v3438 = vpack.c.b16 %v2591, %v2590
    %v3439 = vpack.c.b16 %v2593, %v2592
    %v3440 = vpack.c.b16 %v2595, %v2594
    %v3441 = vpack.c.b16 %v2597, %v2596
    %v3442 = vpack.c.b16 %v2599, %v2598
    %v3443 = vpack.c.b16 %v2601, %v2600
    %v3444 = vpack.c.b16 %v2603, %v2602
    %v3445 = vpack.c.b16 %v2605, %v2604
    %v3446 = vpack.c.b16 %v2607, %v2606
    %v3447 = vpack.c.b16 %v2609, %v2608
    %v3448 = vpack.c.b16 %v2611, %v2610
    %v3449 = vpack.c.b16 %v2613, %v2612
    %v3450 = vpack.c.b16 %v2615, %v2614
    %v3451 = vpack.c.b16 %v2617, %v2616
    %v3452 = vpack.c.b16 %v2619, %v2618
    %v3453 = vpack.c.b16 %v2621, %v2620
    %v3454 = vpack.c.b16 %v2623, %v2622
    %v3455 = vpack.c.b16 %v2625, %v2624
    %v3456 = vpack.c.b16 %v2627, %v2626
    %v3457 = vpack.c.b16 %v2629, %v2628
    %v3458 = vpack.c.b16 %v2631, %v2630
    %v3459 = vpack.c.b16 %v2633, %v2632
    %v3460 = vpack.c.b16 %v2635, %v2634
    %v3461 = vpack.c.b16 %v2637, %v2636
    %v3462 = vpack.c.b16 %v2639, %v2638
    %v3463 = vpack.c.b16 %v2641, %v2640
    %v3464 = vpack.c.b16 %v2643, %v2642
    %v3465 = vpack.c.b16 %v2645, %v2644
    %v3466 = vpack.c.b16 %v2647, %v2646
    %v3467 = vpack.c.b16 %v2649, %v2648
    %v3468 = vpack.c.b16 %v2651, %v2650
    %v3469 = vpack.c.b16 %v2653, %v2652
    %v3470 = vpack.c.b16 %v2655, %v2654
    %v3471 = vpack.c.b16 %v2657, %v2656
    %v3472 = vpack.c.b16 %v2659, %v2658
    %v3473 = vpack.c.b16 %v2661, %v2660
    %v3474 = vpack.c.b16 %v2663, %v2662
    %v3475 = vpack.c.b16 %v2665, %v2664
    %v3476 = vpack.c.b16 %v2667, %v2666
    %v3477 = vpack.c.b16 %v2669, %v2668
    %v3478 = vpack.c.b16 %v2671, %v2670
    %v3479 = vpack.c.b16 %v2673, %v2672
    %v3480 = vpack.c.b16 %v2675, %v2674
    %v3481 = vpack.c.b16 %v2677, %v2676
    %v3482 = vpack.c.b16 %v2679, %v2678
    %v3483 = vpack.c.b16 %v2681, %v2680
    %v3484 = vpack.c.b16 %v2683, %v2682
    %v3485 = vpack.c.b16 %v2685, %v2684
    %v3486 = vpack.c.b16 %v2687, %v2686
    %v3487 = vpack.c.b16 %v2689, %v2688
    %v3488 = vpack.c.b16 %v2691, %v2690
    %v3489 = vpack.c.b16 %v2693, %v2692
    %v3490 = vpack.c.b16 %v2695, %v2694
    %v3491 = vpack.c.b16 %v2697, %v2696
    %v3492 = vpack.c.b16 %v2699, %v2698
    %v3493 = vpack.c.b16 %v2701, %v2700
    %v3494 = vpack.c.b16 %v2703, %v2702
    %v3495 = vpack.c.b16 %v2705, %v2704
    %v3496 = vpack.c.b16 %v2707, %v2706
    %v3497 = vpack.c.b16 %v2709, %v2708
    %v3498 = vpack.c.b16 %v2711, %v2710
    %v3499 = vpack.c.b16 %v2713, %v2712
    %v3500 = vpack.c.b16 %v2715, %v2714
    %v3501 = vpack.c.b16 %v2717, %v2716
    %v3502 = vpack.c.b16 %v2719, %v2718
    %v3503 = vpack.c.b16 %v2721, %v2720
    %v3504 = vpack.c.b16 %v2723, %v2722
    %v3505 = vpack.c.b16 %v2725, %v2724
    %v3506 = vpack.c.b16 %v2727, %v2726
    %v3507 = vpack.c.b16 %v2729, %v2728
    %v3508 = vpack.c.b16 %v2731, %v2730
    %v3509 = vpack.c.b16 %v2733, %v2732
    %v3510 = vpack.c.b16 %v2735, %v2734
    %v3511 = vpack.c.b16 %v2737, %v2736
    %v3512 = vpack.c.b16 %v2739, %v2738
    %v3513 = vpack.c.b16 %v2741, %v2740
    %v3514 = vpack.c.b16 %v2743, %v2742
    %v3515 = vpack.c.b16 %v2745, %v2744
    %v3516 = vpack.c.b16 %v2747, %v2746
    %v3517 = vpack.c.b16 %v2749, %v2748
    %v3518 = vpack.c.b16 %v2751, %v2750
    %v3519 = vpack.c.b16 %v2753, %v2752
    %v3520 = vpack.c.b16 %v2755, %v2754
    %v3521 = vpack.c.b16 %v2757, %v2756
    %v3522 = vpack.c.b16 %v2759, %v2758
    %v3523 = vpack.c.b16 %v2761, %v2760
    %v3524 = vpack.c.b16 %v2763, %v2762
    %v3525 = vpack.c.b16 %v2765, %v2764
    %v3526 = vpack.c.b16 %v2767, %v2766
    %v3527 = vpack.c.b16 %v2769, %v2768
    %v3528 = vpack.c.b16 %v2771, %v2770
    %v3529 = vpack.c.b16 %v2773, %v2772
    %v3530 = vpack.c.b16 %v2775, %v2774
    %v3531 = vpack.c.b16 %v2777, %v2776
    %v3532 = vpack.c.b16 %v2779, %v2778
    %v3533 = vpack.c.b16 %v2781, %v2780
    %v3534 = vpack.c.b16 %v2783, %v2782
    %v3535 = vpack.c.b16 %v2785, %v2784
    %v3536 = vpack.c.b16 %v2787, %v2786
    %v3537 = vpack.c.b16 %v2789, %v2788
    %v3538 = vpack.c.b16 %v2791, %v2790
    %v3539 = vpack.c.b16 %v2793, %v2792
    %v3540 = vpack.c.b16 %v2795, %v2794
    %v3541 = vpack.c.b16 %v2797, %v2796
    %v3542 = vpack.c.b16 %v2799, %v2798
    %v3543 = vpack.c.b16 %v2801, %v2800
    %v3544 = vpack.c.b16 %v2803, %v2802
    %v3545 = vpack.c.b16 %v2805, %v2804
    %v3546 = vpack.c.b16 %v2807, %v2806
    %v3547 = vpack.c.b16 %v2809, %v2808
    %v3548 = vpack.c.b16 %v2811, %v2810
    %v3549 = vpack.c.b16 %v2813, %v2812
    %v3550 = vpack.c.b16 %v2815, %v2814
    %v3551 = vpack.c.b16 %v2817, %v2816
    %v3552 = vpack.c.b16 %v2819, %v2818
    %v3553 = vpack.c.b16 %v2821, %v2820
    %v3554 = vpack.c.b16 %v2823, %v2822
    %v3555 = vpack.c.b16 %v2825, %v2824
    %v3556 = vpack.c.b16 %v2827, %v2826
    %v3557 = vpack.c.b16 %v2829, %v2828
    %v3558 = vpack.c.b16 %v2831, %v2830
    %v3559 = vpack.c.b16 %v2833, %v2832
    %v3560 = vpack.c.b16 %v2835, %v2834
    %v3561 = vpack.c.b16 %v2837, %v2836
    %v3562 = vpack.c.b16 %v2839, %v2838
    %v3563 = vpack.c.b16 %v2841, %v2840
    %v3564 = vpack.c.b16 %v2843, %v2842
    %v3565 = vpack.c.b16 %v2845, %v2844
    %v3566 = vpack.c.b16 %v2847, %v2846
    %v3567 = vpack.c.b16 %v2849, %v2848
    %v3568 = vpack.c.b16 %v2851, %v2850
    %v3569 = vpack.c.b16 %v2853, %v2852
    %v3570 = vpack.c.b16 %v2855, %v2854
    %v3571 = vpack.c.b16 %v2857, %v2856
    %v3572 = vpack.c.b16 %v2859, %v2858
    %v3573 = vpack.c.b16 %v2861, %v2860
    %v3574 = vpack.c.b16 %v2863, %v2862
    %v3575 = vpack.c.b16 %v2865, %v2864
    %v3576 = vpack.c.b16 %v2867, %v2866
    %v3577 = vpack.c.b16 %v2869, %v2868
    %v3578 = vpack.c.b16 %v2871, %v2870
    %v3579 = vpack.c.b16 %v2873, %v2872
    %v3580 = vpack.c.b16 %v2875, %v2874
    %v3581 = vpack.c.b16 %v2877, %v2876
    %v3582 = vpack.c.b16 %v2879, %v2878
    %v3583 = vpack.c.b16 %v2881, %v2880
    %v3584 = vpack.c.b16 %v2883, %v2882
    %v3585 = vpack.c.b16 %v2885, %v2884
    %v3586 = vpack.c.b16 %v2887, %v2886
    %v3587 = vpack.c.b16 %v2889, %v2888
    %v3588 = vpack.c.b16 %v2891, %v2890
    %v3589 = vpack.c.b16 %v2893, %v2892
    %v3590 = vpack.c.b16 %v2895, %v2894
    %v3591 = vpack.c.b16 %v2897, %v2896
    %v3592 = vpack.c.b16 %v2899, %v2898
    %v3593 = vpack.c.b16 %v2901, %v2900
    %v3594 = vpack.c.b16 %v2903, %v2902
    %v3595 = vpack.c.b16 %v2905, %v2904
    %v3596 = vpack.c.b16 %v2907, %v2906
    %v3597 = vpack.c.b16 %v2909, %v2908
    %v3598 = vpack.c.b16 %v2911, %v2910
    %v3599 = vpack.c.b16 %v2913, %v2912
    %v3600 = vpack.c.b16 %v2915, %v2914
    %v3601 = vpack.c.b16 %v2917, %v2916
    %v3602 = vpack.c.b16 %v2919, %v2918
    %v3603 = vpack.c.b16 %v2921, %v2920
    %v3604 = vpack.c.b16 %v2923, %v2922
    %v3605 = vpack.c.b16 %v2925, %v2924
    %v3606 = vpack.c.b16 %v2927, %v2926
    %v3607 = vpack.c.b16 %v2929, %v2928
    %v3608 = vpack.c.b16 %v2931, %v2930
    %v3609 = vpack.c.b16 %v2933, %v2932
    %v3610 = vpack.c.b16 %v2935, %v2934
    %v3611 = vpack.c.b16 %v2937, %v2936
    %v3612 = vpack.c.b16 %v2939, %v2938
    %v3613 = vpack.c.b16 %v2941, %v2940
    %v3614 = vpack.c.b16 %v2943, %v2942
    %v3615 = vpack.c.b16 %v2945, %v2944
    %v3616 = vpack.c.b16 %v2947, %v2946
    %v3617 = vpack.c.b16 %v2949, %v2948
    %v3618 = vpack.c.b16 %v2951, %v2950
    %v3619 = vpack.c.b16 %v2953, %v2952
    %v3620 = vpack.c.b16 %v2955, %v2954
    %v3621 = vpack.c.b16 %v2957, %v2956
    %v3622 = vpack.c.b16 %v2959, %v2958
    %v3623 = vpack.c.b16 %v2961, %v2960
    %v3624 = vpack.c.b16 %v2963, %v2962
    %v3625 = vpack.c.b16 %v2965, %v2964
    %v3626 = vpack.c.b16 %v2967, %v2966
    %v3627 = vpack.c.b16 %v2969, %v2968
    %v3628 = vpack.c.b16 %v2971, %v2970
    %v3629 = vpack.c.b16 %v2973, %v2972
    %v3630 = vpack.c.b16 %v2975, %v2974
    %v3631 = vpack.c.b16 %v2977, %v2976
    %v3632 = vpack.c.b16 %v2979, %v2978
    %v3633 = vpack.c.b16 %v2981, %v2980
    %v3634 = vpack.c.b16 %v2983, %v2982
    %v3635 = vpack.c.b16 %v2985, %v2984
    %v3636 = vpack.c.b16 %v2987, %v2986
    %v3637 = vpack.c.b16 %v2989, %v2988
    %v3638 = vpack.c.b16 %v2991, %v2990
    %v3639 = vpack.c.b16 %v2993, %v2992
    %v3640 = vpack.c.b16 %v2995, %v2994
    %v3641 = vpack.c.b16 %v2997, %v2996
    %v3642 = vpack.c.b16 %v2999, %v2998
    %v3643 = vpack.c.b16 %v3001, %v3000
    %v3644 = vpack.c.b16 %v3003, %v3002
    %v3645 = vpack.c.b16 %v3005, %v3004
    %v3646 = vpack.c.b16 %v3007, %v3006
    %v3647 = vpack.c.b16 %v3009, %v3008
    %v3648 = vpack.c.b16 %v3011, %v3010
    %v3649 = vpack.c.b16 %v3013, %v3012
    %v3650 = vpack.c.b16 %v3015, %v3014
    %v3651 = vpack.c.b16 %v3017, %v3016
    %v3652 = vpack.c.b16 %v3019, %v3018
    %v3653 = vpack.c.b16 %v3021, %v3020
    %v3654 = vpack.c.b16 %v3023, %v3022
    %v3655 = vpack.c.b16 %v3025, %v3024
    %v3656 = vpack.c.b16 %v3027, %v3026
    %v3657 = vpack.c.b16 %v3029, %v3028
    %v3658 = vpack.c.b16 %v3031, %v3030
    %v3659 = vpack.c.b16 %v3033, %v3032
    %v3660 = vpack.c.b16 %v3035, %v3034
    %v3661 = vpack.c.b16 %v3037, %v3036
    %v3662 = vpack.c.b16 %v3039, %v3038
    %v3663 = vpack.c.b16 %v3041, %v3040
    %v3664 = vpack.c.b16 %v3043, %v3042
    %v3665 = vpack.c.b16 %v3045, %v3044
    %v3666 = vpack.c.b16 %v3047, %v3046
    %v3667 = vpack.c.b16 %v3049, %v3048
    %v3668 = vpack.c.b16 %v3051, %v3050
    %v3669 = vpack.c.b16 %v3053, %v3052
    %v3670 = vpack.c.b16 %v3055, %v3054
    %v3671 = vpack.c.b16 %v3057, %v3056
    %v3672 = vpack.c.b16 %v3059, %v3058
    %v3673 = vpack.c.b16 %v3061, %v3060
    %v3674 = vpack.c.b16 %v3063, %v3062
    %v3675 = vpack.c.b16 %v3065, %v3064
    %v3676 = vpack.c.b16 %v3067, %v3066
    %v3677 = vpack.c.b16 %v3069, %v3068
    %v3678 = vpack.c.b16 %v3071, %v3070
    %v3679 = vpack.c.b16 %v3073, %v3072
    %v3680 = vpack.c.b16 %v3075, %v3074
    %v3681 = vpack.c.b16 %v3077, %v3076
    %v3682 = vpack.c.b16 %v3079, %v3078
    %v3683 = vpack.c.b16 %v3081, %v3080
    %v3684 = vpack.c.b16 %v3083, %v3082
    %v3685 = vpack.c.b16 %v3085, %v3084
    %v3686 = vpack.c.b16 %v3087, %v3086
    %v3687 = vpack.c.b16 %v3089, %v3088
    %v3688 = vpack.c.b16 %v3091, %v3090
    %v3689 = vpack.c.b16 %v3093, %v3092
    %v3690 = vpack.c.b16 %v3095, %v3094
    %v3691 = vpack.c.b16 %v3097, %v3096
    %v3692 = vpack.c.b16 %v3099, %v3098
    %v3693 = vpack.c.b16 %v3101, %v3100
    %v3694 = vpack.c.b16 %v3103, %v3102
    %v3695 = vpack.c.b16 %v3105, %v3104
    %v3696 = vpack.c.b16 %v3107, %v3106
    %v3697 = vpack.c.b16 %v3109, %v3108
    %v3698 = vpack.c.b16 %v3111, %v3110
    %v3699 = vpack.c.b16 %v3113, %v3112
    %v3700 = vpack.c.b16 %v3115, %v3114
    %v3701 = vpack.c.b16 %v3117, %v3116
    %v3702 = vpack.c.b16 %v3119, %v3118
    %v3703 = vpack.c.b16 %v3121, %v3120
    %v3704 = vpack.c.b16 %v3123, %v3122
    %v3705 = vpack.c.b16 %v3125, %v3124
    %v3706 = vpack.c.b16 %v3127, %v3126
    %v3707 = vpack.c.b16 %v3129, %v3128
    %v3708 = vpack.c.b16 %v3131, %v3130
    %v3709 = vpack.c.b16 %v3133, %v3132
    %v3710 = vpack.c.b16 %v3135, %v3134
    %v3711 = vpack.c.b16 %v3137, %v3136
    %v3712 = vpack.c.b16 %v3139, %v3138
    %v3713 = vpack.c.b16 %v3141, %v3140
    %v3714 = vpack.c.b16 %v3143, %v3142
    %v3715 = vpack.c.b16 %v3145, %v3144
    %v3716 = vpack.c.b16 %v3147, %v3146
    %v3717 = vpack.c.b16 %v3149, %v3148
    %v3718 = vpack.c.b16 %v3151, %v3150
    %v3719 = vpack.c.b16 %v3153, %v3152
    %v3720 = vpack.c.b16 %v3155, %v3154
    %v3721 = vpack.c.b16 %v3157, %v3156
    %v3722 = vpack.c.b16 %v3159, %v3158
    %v3723 = vpack.c.b16 %v3161, %v3160
    %v3724 = vpack.c.b16 %v3163, %v3162
    %v3725 = vpack.c.b16 %v3165, %v3164
    %v3726 = vpack.c.b16 %v3167, %v3166
    %v3727 = vpack.c.b16 %v3169, %v3168
    %v3728 = vpack.c.b16 %v3171, %v3170
    %v3729 = vpack.c.b16 %v3173, %v3172
    %v3730 = vpack.c.b16 %v3175, %v3174
    %v3731 = vpack.c.b16 %v3177, %v3176
    %v3732 = vpack.c.b16 %v3179, %v3178
    %v3733 = vpack.c.b16 %v3181, %v3180
    %v3734 = vpack.c.b16 %v3183, %v3182
    %v3735 = vpack.c.b16 %v3185, %v3184
    %v3736 = vpack.c.b16 %v3187, %v3186
    %v3737 = vpack.c.b16 %v3189, %v3188
    %v3738 = vpack.c.b16 %v3191, %v3190
    %v3739 = vpack.c.b16 %v3193, %v3192
    %v3740 = vpack.c.b16 %v3195, %v3194
    %v3741 = vpack.c.b16 %v3197, %v3196
    %v3742 = vpack.c.b16 %v3199, %v3198
    %v3743 = vpack.c.b16 %v3201, %v3200
    %v3744 = vpack.c.b16 %v3203, %v3202
    %v3745 = vpack.c.b16 %v3205, %v3204
    %v3746 = vpack.c.b16 %v3207, %v3206
    %v3747 = vpack.c.b16 %v3209, %v3208
    %v3748 = vpack.c.b16 %v3211, %v3210
    %v3749 = vpack.c.b16 %v3213, %v3212
    %v3750 = vpack.c.b16 %v3215, %v3214
    %v3751 = vpack.c.b16 %v3217, %v3216
    %v3752 = vpack.c.b16 %v3219, %v3218
    %v3753 = vpack.c.b16 %v3221, %v3220
    %v3754 = vpack.c.b16 %v3223, %v3222
    %v3755 = vpack.c.b16 %v3225, %v3224
    %v3756 = vpack.c.b16 %v3227, %v3226
    %v3757 = vpack.c.b16 %v3229, %v3228
    %v3758 = vpack.c.b16 %v3231, %v3230
    %v3759 = vpack.c.b16 %v3233, %v3232
    %v3760 = vpack.c.b16 %v3235, %v3234
    %v3761 = vpack.c.b16 %v3237, %v3236
    %v3762 = vpack.c.b16 %v3239, %v3238
    %v3763 = vpack.c.b16 %v3241, %v3240
    %v3764 = vpack.c.b16 %v3243, %v3242
    %v3765 = vpack.c.b16 %v3245, %v3244
    %v3766 = vpack.c.b16 %v3247, %v3246
    %v3767 = vpack.c.b16 %v3249, %v3248
    %v3768 = vpack.c.b16 %v3251, %v3250
    %v3769 = vpack.c.b16 %v3253, %v3252
    %v3770 = vpack.c.b16 %v3255, %v3254
    %v3771 = vpack.c.b16 %v3257, %v3256
    %v3772 = vpack.c.b16 %v3259, %v3258
    %v3773 = vpack.c.b16 %v3261, %v3260
    %4286 = vmatpush.bf16.msra.mxu0 %v3269
    %4287 = vmatpush.bf16.msra.mxu0 %v3268
    %4288 = vmatpush.bf16.msra.mxu0 %v3267
    %4289 = vmatpush.bf16.msra.mxu0 %v3266
    %4290 = vmatpush.bf16.msra.mxu0 %v3265
    %4291 = vmatpush.bf16.msra.mxu0 %v3264
    %4292 = vmatpush.bf16.msra.mxu0 %v3263
    %4293 = vmatpush.bf16.msra.mxu0 %v3262
    %4294 = vmatmul.bf16.gmra.mxu0 %v122
    %v4295 = vpop.f32.mrf.mxu0
    %v4296 = vadd.f32 %v1212, %v4295
    %v4297 = vpop.f32.mrf.mxu0
    %4298 = vdwg.mxu0
    %4299 = vmatpush.bf16.msra.mxu0 %v3277
    %4300 = vmatpush.bf16.msra.mxu0 %v3276
    %4301 = vmatpush.bf16.msra.mxu0 %v3275
    %4302 = vmatpush.bf16.msra.mxu0 %v3274
    %4303 = vmatpush.bf16.msra.mxu0 %v3273
    %4304 = vmatpush.bf16.msra.mxu0 %v3272
    %4305 = vmatpush.bf16.msra.mxu0 %v3271
    %4306 = vmatpush.bf16.msra.mxu0 %v3270
    %4307 = vmatmul.bf16.gmra.mxu0 %v123
    %v4308 = vpop.f32.mrf.mxu0
    %v4309 = vadd.f32 %v4296, %v4308
    %v4310 = vpop.f32.mrf.mxu0
    %4311 = vdwg.mxu0
    %4312 = vmatpush.bf16.msra.mxu0 %v3285
    %4313 = vmatpush.bf16.msra.mxu0 %v3284
    %4314 = vmatpush.bf16.msra.mxu0 %v3283
    %4315 = vmatpush.bf16.msra.mxu0 %v3282
    %4316 = vmatpush.bf16.msra.mxu0 %v3281
    %4317 = vmatpush.bf16.msra.mxu0 %v3280
    %4318 = vmatpush.bf16.msra.mxu0 %v3279
    %4319 = vmatpush.bf16.msra.mxu0 %v3278
    %4320 = vmatmul.bf16.gmra.mxu0 %v124
    %v4321 = vpop.f32.mrf.mxu0
    %v4322 = vadd.f32 %v4309, %v4321
    %v4323 = vpop.f32.mrf.mxu0
    %4324 = vdwg.mxu0
    %4325 = vmatpush.bf16.msra.mxu0 %v3293
    %4326 = vmatpush.bf16.msra.mxu0 %v3292
    %4327 = vmatpush.bf16.msra.mxu0 %v3291
    %4328 = vmatpush.bf16.msra.mxu0 %v3290
    %4329 = vmatpush.bf16.msra.mxu0 %v3289
    %4330 = vmatpush.bf16.msra.mxu0 %v3288
    %4331 = vmatpush.bf16.msra.mxu0 %v3287
    %4332 = vmatpush.bf16.msra.mxu0 %v3286
    %4333 = vmatmul.bf16.gmra.mxu0 %v125
    %v4334 = vpop.f32.mrf.mxu0
    %v4335 = vadd.f32 %v4322, %v4334
    %v4336 = vpop.f32.mrf.mxu0
    %4337 = vdwg.mxu0
    %4338 = vmatpush.bf16.msra.mxu0 %v3301
    %4339 = vmatpush.bf16.msra.mxu0 %v3300
    %4340 = vmatpush.bf16.msra.mxu0 %v3299
    %4341 = vmatpush.bf16.msra.mxu0 %v3298
    %4342 = vmatpush.bf16.msra.mxu0 %v3297
    %4343 = vmatpush.bf16.msra.mxu0 %v3296
    %4344 = vmatpush.bf16.msra.mxu0 %v3295
    %4345 = vmatpush.bf16.msra.mxu0 %v3294
    %4346 = vmatmul.bf16.gmra.mxu0 %v126
    %v4347 = vpop.f32.mrf.mxu0
    %v4348 = vadd.f32 %v4335, %v4347
    %v4349 = vpop.f32.mrf.mxu0
    %4350 = vdwg.mxu0
    %4351 = vmatpush.bf16.msra.mxu0 %v3309
    %4352 = vmatpush.bf16.msra.mxu0 %v3308
    %4353 = vmatpush.bf16.msra.mxu0 %v3307
    %4354 = vmatpush.bf16.msra.mxu0 %v3306
    %4355 = vmatpush.bf16.msra.mxu0 %v3305
    %4356 = vmatpush.bf16.msra.mxu0 %v3304
    %4357 = vmatpush.bf16.msra.mxu0 %v3303
    %4358 = vmatpush.bf16.msra.mxu0 %v3302
    %4359 = vmatmul.bf16.gmra.mxu0 %v127
    %v4360 = vpop.f32.mrf.mxu0
    %v4361 = vadd.f32 %v4348, %v4360
    %v4362 = vpop.f32.mrf.mxu0
    %4363 = vdwg.mxu0
    %4364 = vmatpush.bf16.msra.mxu0 %v3317
    %4365 = vmatpush.bf16.msra.mxu0 %v3316
    %4366 = vmatpush.bf16.msra.mxu0 %v3315
    %4367 = vmatpush.bf16.msra.mxu0 %v3314
    %4368 = vmatpush.bf16.msra.mxu0 %v3313
    %4369 = vmatpush.bf16.msra.mxu0 %v3312
    %4370 = vmatpush.bf16.msra.mxu0 %v3311
    %4371 = vmatpush.bf16.msra.mxu0 %v3310
    %4372 = vmatmul.bf16.gmra.mxu0 %v128
    %v4373 = vpop.f32.mrf.mxu0
    %v4374 = vadd.f32 %v4361, %v4373
    %v4375 = vpop.f32.mrf.mxu0
    %4376 = vdwg.mxu0
    %4377 = vmatpush.bf16.msra.mxu0 %v3325
    %4378 = vmatpush.bf16.msra.mxu0 %v3324
    %4379 = vmatpush.bf16.msra.mxu0 %v3323
    %4380 = vmatpush.bf16.msra.mxu0 %v3322
    %4381 = vmatpush.bf16.msra.mxu0 %v3321
    %4382 = vmatpush.bf16.msra.mxu0 %v3320
    %4383 = vmatpush.bf16.msra.mxu0 %v3319
    %4384 = vmatpush.bf16.msra.mxu0 %v3318
    %4385 = vmatmul.bf16.gmra.mxu0 %v129
    %v4386 = vpop.f32.mrf.mxu0
    %v4387 = vadd.f32 %v4374, %v4386
    %v4388 = vpop.f32.mrf.mxu0
    %4389 = vdwg.mxu0
    %4390 = vmatpush.bf16.msra.mxu0 %v3333
    %4391 = vmatpush.bf16.msra.mxu0 %v3332
    %4392 = vmatpush.bf16.msra.mxu0 %v3331
    %4393 = vmatpush.bf16.msra.mxu0 %v3330
    %4394 = vmatpush.bf16.msra.mxu0 %v3329
    %4395 = vmatpush.bf16.msra.mxu0 %v3328
    %4396 = vmatpush.bf16.msra.mxu0 %v3327
    %4397 = vmatpush.bf16.msra.mxu0 %v3326
    %4398 = vmatmul.bf16.gmra.mxu0 %v130
    %v4399 = vpop.f32.mrf.mxu0
    %v4400 = vadd.f32 %v4387, %v4399
    %v4401 = vpop.f32.mrf.mxu0
    %4402 = vdwg.mxu0
    %4403 = vmatpush.bf16.msra.mxu0 %v3341
    %4404 = vmatpush.bf16.msra.mxu0 %v3340
    %4405 = vmatpush.bf16.msra.mxu0 %v3339
    %4406 = vmatpush.bf16.msra.mxu0 %v3338
    %4407 = vmatpush.bf16.msra.mxu0 %v3337
    %4408 = vmatpush.bf16.msra.mxu0 %v3336
    %4409 = vmatpush.bf16.msra.mxu0 %v3335
    %4410 = vmatpush.bf16.msra.mxu0 %v3334
    %4411 = vmatmul.bf16.gmra.mxu0 %v131
    %v4412 = vpop.f32.mrf.mxu0
    %v4413 = vadd.f32 %v4400, %v4412
    %v4414 = vpop.f32.mrf.mxu0
    %4415 = vdwg.mxu0
    %4416 = vmatpush.bf16.msra.mxu0 %v3349
    %4417 = vmatpush.bf16.msra.mxu0 %v3348
    %4418 = vmatpush.bf16.msra.mxu0 %v3347
    %4419 = vmatpush.bf16.msra.mxu0 %v3346
    %4420 = vmatpush.bf16.msra.mxu0 %v3345
    %4421 = vmatpush.bf16.msra.mxu0 %v3344
    %4422 = vmatpush.bf16.msra.mxu0 %v3343
    %4423 = vmatpush.bf16.msra.mxu0 %v3342
    %4424 = vmatmul.bf16.gmra.mxu0 %v132
    %v4425 = vpop.f32.mrf.mxu0
    %v4426 = vadd.f32 %v4413, %v4425
    %v4427 = vpop.f32.mrf.mxu0
    %4428 = vdwg.mxu0
    %4429 = vmatpush.bf16.msra.mxu0 %v3357
    %4430 = vmatpush.bf16.msra.mxu0 %v3356
    %4431 = vmatpush.bf16.msra.mxu0 %v3355
    %4432 = vmatpush.bf16.msra.mxu0 %v3354
    %4433 = vmatpush.bf16.msra.mxu0 %v3353
    %4434 = vmatpush.bf16.msra.mxu0 %v3352
    %4435 = vmatpush.bf16.msra.mxu0 %v3351
    %4436 = vmatpush.bf16.msra.mxu0 %v3350
    %4437 = vmatmul.bf16.gmra.mxu0 %v133
    %v4438 = vpop.f32.mrf.mxu0
    %v4439 = vadd.f32 %v4426, %v4438
    %v4440 = vpop.f32.mrf.mxu0
    %4441 = vdwg.mxu0
    %4442 = vmatpush.bf16.msra.mxu0 %v3365
    %4443 = vmatpush.bf16.msra.mxu0 %v3364
    %4444 = vmatpush.bf16.msra.mxu0 %v3363
    %4445 = vmatpush.bf16.msra.mxu0 %v3362
    %4446 = vmatpush.bf16.msra.mxu0 %v3361
    %4447 = vmatpush.bf16.msra.mxu0 %v3360
    %4448 = vmatpush.bf16.msra.mxu0 %v3359
    %4449 = vmatpush.bf16.msra.mxu0 %v3358
    %4450 = vmatmul.bf16.gmra.mxu0 %v134
    %v4451 = vpop.f32.mrf.mxu0
    %v4452 = vadd.f32 %v4439, %v4451
    %v4453 = vpop.f32.mrf.mxu0
    %4454 = vdwg.mxu0
    %4455 = vmatpush.bf16.msra.mxu0 %v3373
    %4456 = vmatpush.bf16.msra.mxu0 %v3372
    %4457 = vmatpush.bf16.msra.mxu0 %v3371
    %4458 = vmatpush.bf16.msra.mxu0 %v3370
    %4459 = vmatpush.bf16.msra.mxu0 %v3369
    %4460 = vmatpush.bf16.msra.mxu0 %v3368
    %4461 = vmatpush.bf16.msra.mxu0 %v3367
    %4462 = vmatpush.bf16.msra.mxu0 %v3366
    %4463 = vmatmul.bf16.gmra.mxu0 %v135
    %v4464 = vpop.f32.mrf.mxu0
    %v4465 = vadd.f32 %v4452, %v4464
    %v4466 = vpop.f32.mrf.mxu0
    %4467 = vdwg.mxu0
    %4468 = vmatpush.bf16.msra.mxu0 %v3381
    %4469 = vmatpush.bf16.msra.mxu0 %v3380
    %4470 = vmatpush.bf16.msra.mxu0 %v3379
    %4471 = vmatpush.bf16.msra.mxu0 %v3378
    %4472 = vmatpush.bf16.msra.mxu0 %v3377
    %4473 = vmatpush.bf16.msra.mxu0 %v3376
    %4474 = vmatpush.bf16.msra.mxu0 %v3375
    %4475 = vmatpush.bf16.msra.mxu0 %v3374
    %4476 = vmatmul.bf16.gmra.mxu0 %v136
    %v4477 = vpop.f32.mrf.mxu0
    %v4478 = vadd.f32 %v4465, %v4477
    %v4479 = vpop.f32.mrf.mxu0
    %4480 = vdwg.mxu0
    %4481 = vmatpush.bf16.msra.mxu0 %v3389
    %4482 = vmatpush.bf16.msra.mxu0 %v3388
    %4483 = vmatpush.bf16.msra.mxu0 %v3387
    %4484 = vmatpush.bf16.msra.mxu0 %v3386
    %4485 = vmatpush.bf16.msra.mxu0 %v3385
    %4486 = vmatpush.bf16.msra.mxu0 %v3384
    %4487 = vmatpush.bf16.msra.mxu0 %v3383
    %4488 = vmatpush.bf16.msra.mxu0 %v3382
    %4489 = vmatmul.bf16.gmra.mxu0 %v137
    %v4490 = vpop.f32.mrf.mxu0
    %v4491 = vadd.f32 %v4478, %v4490
    %v4492 = vpop.f32.mrf.mxu0
    %4493 = vdwg.mxu0
    %4494 = vmatpush.bf16.msra.mxu0 %v3397
    %4495 = vmatpush.bf16.msra.mxu0 %v3396
    %4496 = vmatpush.bf16.msra.mxu0 %v3395
    %4497 = vmatpush.bf16.msra.mxu0 %v3394
    %4498 = vmatpush.bf16.msra.mxu0 %v3393
    %4499 = vmatpush.bf16.msra.mxu0 %v3392
    %4500 = vmatpush.bf16.msra.mxu0 %v3391
    %4501 = vmatpush.bf16.msra.mxu0 %v3390
    %4502 = vmatmul.bf16.gmra.mxu0 %v138
    %v4503 = vpop.f32.mrf.mxu0
    %v4504 = vadd.f32 %v4491, %v4503
    %v4505 = vpop.f32.mrf.mxu0
    %4506 = vdwg.mxu0
    %4507 = vmatpush.bf16.msra.mxu0 %v3405
    %4508 = vmatpush.bf16.msra.mxu0 %v3404
    %4509 = vmatpush.bf16.msra.mxu0 %v3403
    %4510 = vmatpush.bf16.msra.mxu0 %v3402
    %4511 = vmatpush.bf16.msra.mxu0 %v3401
    %4512 = vmatpush.bf16.msra.mxu0 %v3400
    %4513 = vmatpush.bf16.msra.mxu0 %v3399
    %4514 = vmatpush.bf16.msra.mxu0 %v3398
    %4515 = vmatmul.bf16.gmra.mxu0 %v139
    %v4516 = vpop.f32.mrf.mxu0
    %v4517 = vadd.f32 %v4504, %v4516
    %v4518 = vpop.f32.mrf.mxu0
    %4519 = vdwg.mxu0
    %4520 = vmatpush.bf16.msra.mxu0 %v3413
    %4521 = vmatpush.bf16.msra.mxu0 %v3412
    %4522 = vmatpush.bf16.msra.mxu0 %v3411
    %4523 = vmatpush.bf16.msra.mxu0 %v3410
    %4524 = vmatpush.bf16.msra.mxu0 %v3409
    %4525 = vmatpush.bf16.msra.mxu0 %v3408
    %4526 = vmatpush.bf16.msra.mxu0 %v3407
    %4527 = vmatpush.bf16.msra.mxu0 %v3406
    %4528 = vmatmul.bf16.gmra.mxu0 %v140
    %v4529 = vpop.f32.mrf.mxu0
    %v4530 = vadd.f32 %v4517, %v4529
    %v4531 = vpop.f32.mrf.mxu0
    %4532 = vdwg.mxu0
    %4533 = vmatpush.bf16.msra.mxu0 %v3421
    %4534 = vmatpush.bf16.msra.mxu0 %v3420
    %4535 = vmatpush.bf16.msra.mxu0 %v3419
    %4536 = vmatpush.bf16.msra.mxu0 %v3418
    %4537 = vmatpush.bf16.msra.mxu0 %v3417
    %4538 = vmatpush.bf16.msra.mxu0 %v3416
    %4539 = vmatpush.bf16.msra.mxu0 %v3415
    %4540 = vmatpush.bf16.msra.mxu0 %v3414
    %4541 = vmatmul.bf16.gmra.mxu0 %v141
    %v4542 = vpop.f32.mrf.mxu0
    %v4543 = vadd.f32 %v4530, %v4542
    %v4544 = vpop.f32.mrf.mxu0
    %4545 = vdwg.mxu0
    %4546 = vmatpush.bf16.msra.mxu0 %v3429
    %4547 = vmatpush.bf16.msra.mxu0 %v3428
    %4548 = vmatpush.bf16.msra.mxu0 %v3427
    %4549 = vmatpush.bf16.msra.mxu0 %v3426
    %4550 = vmatpush.bf16.msra.mxu0 %v3425
    %4551 = vmatpush.bf16.msra.mxu0 %v3424
    %4552 = vmatpush.bf16.msra.mxu0 %v3423
    %4553 = vmatpush.bf16.msra.mxu0 %v3422
    %4554 = vmatmul.bf16.gmra.mxu0 %v142
    %v4555 = vpop.f32.mrf.mxu0
    %v4556 = vadd.f32 %v4543, %v4555
    %v4557 = vpop.f32.mrf.mxu0
    %4558 = vdwg.mxu0
    %4559 = vmatpush.bf16.msra.mxu0 %v3437
    %4560 = vmatpush.bf16.msra.mxu0 %v3436
    %4561 = vmatpush.bf16.msra.mxu0 %v3435
    %4562 = vmatpush.bf16.msra.mxu0 %v3434
    %4563 = vmatpush.bf16.msra.mxu0 %v3433
    %4564 = vmatpush.bf16.msra.mxu0 %v3432
    %4565 = vmatpush.bf16.msra.mxu0 %v3431
    %4566 = vmatpush.bf16.msra.mxu0 %v3430
    %4567 = vmatmul.bf16.gmra.mxu0 %v143
    %v4568 = vpop.f32.mrf.mxu0
    %v4569 = vadd.f32 %v4556, %v4568
    %v4570 = vpop.f32.mrf.mxu0
    %4571 = vdwg.mxu0
    %4572 = vmatpush.bf16.msra.mxu0 %v3445
    %4573 = vmatpush.bf16.msra.mxu0 %v3444
    %4574 = vmatpush.bf16.msra.mxu0 %v3443
    %4575 = vmatpush.bf16.msra.mxu0 %v3442
    %4576 = vmatpush.bf16.msra.mxu0 %v3441
    %4577 = vmatpush.bf16.msra.mxu0 %v3440
    %4578 = vmatpush.bf16.msra.mxu0 %v3439
    %4579 = vmatpush.bf16.msra.mxu0 %v3438
    %4580 = vmatmul.bf16.gmra.mxu0 %v144
    %v4581 = vpop.f32.mrf.mxu0
    %v4582 = vadd.f32 %v4569, %v4581
    %v4583 = vpop.f32.mrf.mxu0
    %4584 = vdwg.mxu0
    %4585 = vmatpush.bf16.msra.mxu0 %v3453
    %4586 = vmatpush.bf16.msra.mxu0 %v3452
    %4587 = vmatpush.bf16.msra.mxu0 %v3451
    %4588 = vmatpush.bf16.msra.mxu0 %v3450
    %4589 = vmatpush.bf16.msra.mxu0 %v3449
    %4590 = vmatpush.bf16.msra.mxu0 %v3448
    %4591 = vmatpush.bf16.msra.mxu0 %v3447
    %4592 = vmatpush.bf16.msra.mxu0 %v3446
    %4593 = vmatmul.bf16.gmra.mxu0 %v145
    %v4594 = vpop.f32.mrf.mxu0
    %v4595 = vadd.f32 %v4582, %v4594
    %v4596 = vpop.f32.mrf.mxu0
    %4597 = vdwg.mxu0
    %4598 = vmatpush.bf16.msra.mxu0 %v3461
    %4599 = vmatpush.bf16.msra.mxu0 %v3460
    %4600 = vmatpush.bf16.msra.mxu0 %v3459
    %4601 = vmatpush.bf16.msra.mxu0 %v3458
    %4602 = vmatpush.bf16.msra.mxu0 %v3457
    %4603 = vmatpush.bf16.msra.mxu0 %v3456
    %4604 = vmatpush.bf16.msra.mxu0 %v3455
    %4605 = vmatpush.bf16.msra.mxu0 %v3454
    %4606 = vmatmul.bf16.gmra.mxu0 %v146
    %v4607 = vpop.f32.mrf.mxu0
    %v4608 = vadd.f32 %v4595, %v4607
    %v4609 = vpop.f32.mrf.mxu0
    %4610 = vdwg.mxu0
    %4611 = vmatpush.bf16.msra.mxu0 %v3469
    %4612 = vmatpush.bf16.msra.mxu0 %v3468
    %4613 = vmatpush.bf16.msra.mxu0 %v3467
    %4614 = vmatpush.bf16.msra.mxu0 %v3466
    %4615 = vmatpush.bf16.msra.mxu0 %v3465
    %4616 = vmatpush.bf16.msra.mxu0 %v3464
    %4617 = vmatpush.bf16.msra.mxu0 %v3463
    %4618 = vmatpush.bf16.msra.mxu0 %v3462
    %4619 = vmatmul.bf16.gmra.mxu0 %v147
    %v4620 = vpop.f32.mrf.mxu0
    %v4621 = vadd.f32 %v4608, %v4620
    %v4622 = vpop.f32.mrf.mxu0
    %4623 = vdwg.mxu0
    %4624 = vmatpush.bf16.msra.mxu0 %v3477
    %4625 = vmatpush.bf16.msra.mxu0 %v3476
    %4626 = vmatpush.bf16.msra.mxu0 %v3475
    %4627 = vmatpush.bf16.msra.mxu0 %v3474
    %4628 = vmatpush.bf16.msra.mxu0 %v3473
    %4629 = vmatpush.bf16.msra.mxu0 %v3472
    %4630 = vmatpush.bf16.msra.mxu0 %v3471
    %4631 = vmatpush.bf16.msra.mxu0 %v3470
    %4632 = vmatmul.bf16.gmra.mxu0 %v148
    %v4633 = vpop.f32.mrf.mxu0
    %v4634 = vadd.f32 %v4621, %v4633
    %v4635 = vpop.f32.mrf.mxu0
    %4636 = vdwg.mxu0
    %4637 = vmatpush.bf16.msra.mxu0 %v3485
    %4638 = vmatpush.bf16.msra.mxu0 %v3484
    %4639 = vmatpush.bf16.msra.mxu0 %v3483
    %4640 = vmatpush.bf16.msra.mxu0 %v3482
    %4641 = vmatpush.bf16.msra.mxu0 %v3481
    %4642 = vmatpush.bf16.msra.mxu0 %v3480
    %4643 = vmatpush.bf16.msra.mxu0 %v3479
    %4644 = vmatpush.bf16.msra.mxu0 %v3478
    %4645 = vmatmul.bf16.gmra.mxu0 %v149
    %v4646 = vpop.f32.mrf.mxu0
    %v4647 = vadd.f32 %v4634, %v4646
    %v4648 = vpop.f32.mrf.mxu0
    %4649 = vdwg.mxu0
    %4650 = vmatpush.bf16.msra.mxu0 %v3493
    %4651 = vmatpush.bf16.msra.mxu0 %v3492
    %4652 = vmatpush.bf16.msra.mxu0 %v3491
    %4653 = vmatpush.bf16.msra.mxu0 %v3490
    %4654 = vmatpush.bf16.msra.mxu0 %v3489
    %4655 = vmatpush.bf16.msra.mxu0 %v3488
    %4656 = vmatpush.bf16.msra.mxu0 %v3487
    %4657 = vmatpush.bf16.msra.mxu0 %v3486
    %4658 = vmatmul.bf16.gmra.mxu0 %v150
    %v4659 = vpop.f32.mrf.mxu0
    %v4660 = vadd.f32 %v4647, %v4659
    %v4661 = vpop.f32.mrf.mxu0
    %4662 = vdwg.mxu0
    %4663 = vmatpush.bf16.msra.mxu0 %v3501
    %4664 = vmatpush.bf16.msra.mxu0 %v3500
    %4665 = vmatpush.bf16.msra.mxu0 %v3499
    %4666 = vmatpush.bf16.msra.mxu0 %v3498
    %4667 = vmatpush.bf16.msra.mxu0 %v3497
    %4668 = vmatpush.bf16.msra.mxu0 %v3496
    %4669 = vmatpush.bf16.msra.mxu0 %v3495
    %4670 = vmatpush.bf16.msra.mxu0 %v3494
    %4671 = vmatmul.bf16.gmra.mxu0 %v151
    %v4672 = vpop.f32.mrf.mxu0
    %v4673 = vadd.f32 %v4660, %v4672
    %v4674 = vpop.f32.mrf.mxu0
    %4675 = vdwg.mxu0
    %4676 = vmatpush.bf16.msra.mxu0 %v3509
    %4677 = vmatpush.bf16.msra.mxu0 %v3508
    %4678 = vmatpush.bf16.msra.mxu0 %v3507
    %4679 = vmatpush.bf16.msra.mxu0 %v3506
    %4680 = vmatpush.bf16.msra.mxu0 %v3505
    %4681 = vmatpush.bf16.msra.mxu0 %v3504
    %4682 = vmatpush.bf16.msra.mxu0 %v3503
    %4683 = vmatpush.bf16.msra.mxu0 %v3502
    %4684 = vmatmul.bf16.gmra.mxu0 %v152
    %v4685 = vpop.f32.mrf.mxu0
    %v4686 = vadd.f32 %v4673, %v4685
    %v4687 = vpop.f32.mrf.mxu0
    %4688 = vdwg.mxu0
    %4689 = vmatpush.bf16.msra.mxu0 %v3517
    %4690 = vmatpush.bf16.msra.mxu0 %v3516
    %4691 = vmatpush.bf16.msra.mxu0 %v3515
    %4692 = vmatpush.bf16.msra.mxu0 %v3514
    %4693 = vmatpush.bf16.msra.mxu0 %v3513
    %4694 = vmatpush.bf16.msra.mxu0 %v3512
    %4695 = vmatpush.bf16.msra.mxu0 %v3511
    %4696 = vmatpush.bf16.msra.mxu0 %v3510
    %4697 = vmatmul.bf16.gmra.mxu0 %v153
    %v4698 = vpop.f32.mrf.mxu0
    %v4699 = vadd.f32 %v4686, %v4698
    %v4700 = vpop.f32.mrf.mxu0
    %4701 = vdwg.mxu0
    %4702 = vmatpush.bf16.msra.mxu0 %v3525
    %4703 = vmatpush.bf16.msra.mxu0 %v3524
    %4704 = vmatpush.bf16.msra.mxu0 %v3523
    %4705 = vmatpush.bf16.msra.mxu0 %v3522
    %4706 = vmatpush.bf16.msra.mxu0 %v3521
    %4707 = vmatpush.bf16.msra.mxu0 %v3520
    %4708 = vmatpush.bf16.msra.mxu0 %v3519
    %4709 = vmatpush.bf16.msra.mxu0 %v3518
    %4710 = vmatmul.bf16.gmra.mxu0 %v154
    %v4711 = vpop.f32.mrf.mxu0
    %v4712 = vadd.f32 %v4699, %v4711
    %v4713 = vpop.f32.mrf.mxu0
    %4714 = vdwg.mxu0
    %4715 = vmatpush.bf16.msra.mxu0 %v3533
    %4716 = vmatpush.bf16.msra.mxu0 %v3532
    %4717 = vmatpush.bf16.msra.mxu0 %v3531
    %4718 = vmatpush.bf16.msra.mxu0 %v3530
    %4719 = vmatpush.bf16.msra.mxu0 %v3529
    %4720 = vmatpush.bf16.msra.mxu0 %v3528
    %4721 = vmatpush.bf16.msra.mxu0 %v3527
    %4722 = vmatpush.bf16.msra.mxu0 %v3526
    %4723 = vmatmul.bf16.gmra.mxu0 %v155
    %v4724 = vpop.f32.mrf.mxu0
    %v4725 = vadd.f32 %v4712, %v4724
    %v4726 = vpop.f32.mrf.mxu0
    %4727 = vdwg.mxu0
    %4728 = vmatpush.bf16.msra.mxu0 %v3541
    %4729 = vmatpush.bf16.msra.mxu0 %v3540
    %4730 = vmatpush.bf16.msra.mxu0 %v3539
    %4731 = vmatpush.bf16.msra.mxu0 %v3538
    %4732 = vmatpush.bf16.msra.mxu0 %v3537
    %4733 = vmatpush.bf16.msra.mxu0 %v3536
    %4734 = vmatpush.bf16.msra.mxu0 %v3535
    %4735 = vmatpush.bf16.msra.mxu0 %v3534
    %4736 = vmatmul.bf16.gmra.mxu0 %v156
    %v4737 = vpop.f32.mrf.mxu0
    %v4738 = vadd.f32 %v4725, %v4737
    %v4739 = vpop.f32.mrf.mxu0
    %4740 = vdwg.mxu0
    %4741 = vmatpush.bf16.msra.mxu0 %v3549
    %4742 = vmatpush.bf16.msra.mxu0 %v3548
    %4743 = vmatpush.bf16.msra.mxu0 %v3547
    %4744 = vmatpush.bf16.msra.mxu0 %v3546
    %4745 = vmatpush.bf16.msra.mxu0 %v3545
    %4746 = vmatpush.bf16.msra.mxu0 %v3544
    %4747 = vmatpush.bf16.msra.mxu0 %v3543
    %4748 = vmatpush.bf16.msra.mxu0 %v3542
    %4749 = vmatmul.bf16.gmra.mxu0 %v157
    %v4750 = vpop.f32.mrf.mxu0
    %v4751 = vadd.f32 %v4738, %v4750
    %v4752 = vpop.f32.mrf.mxu0
    %4753 = vdwg.mxu0
    %4754 = vmatpush.bf16.msra.mxu0 %v3557
    %4755 = vmatpush.bf16.msra.mxu0 %v3556
    %4756 = vmatpush.bf16.msra.mxu0 %v3555
    %4757 = vmatpush.bf16.msra.mxu0 %v3554
    %4758 = vmatpush.bf16.msra.mxu0 %v3553
    %4759 = vmatpush.bf16.msra.mxu0 %v3552
    %4760 = vmatpush.bf16.msra.mxu0 %v3551
    %4761 = vmatpush.bf16.msra.mxu0 %v3550
    %4762 = vmatmul.bf16.gmra.mxu0 %v158
    %v4763 = vpop.f32.mrf.mxu0
    %v4764 = vadd.f32 %v4751, %v4763
    %v4765 = vpop.f32.mrf.mxu0
    %4766 = vdwg.mxu0
    %4767 = vmatpush.bf16.msra.mxu0 %v3565
    %4768 = vmatpush.bf16.msra.mxu0 %v3564
    %4769 = vmatpush.bf16.msra.mxu0 %v3563
    %4770 = vmatpush.bf16.msra.mxu0 %v3562
    %4771 = vmatpush.bf16.msra.mxu0 %v3561
    %4772 = vmatpush.bf16.msra.mxu0 %v3560
    %4773 = vmatpush.bf16.msra.mxu0 %v3559
    %4774 = vmatpush.bf16.msra.mxu0 %v3558
    %4775 = vmatmul.bf16.gmra.mxu0 %v159
    %v4776 = vpop.f32.mrf.mxu0
    %v4777 = vadd.f32 %v4764, %v4776
    %v4778 = vpop.f32.mrf.mxu0
    %4779 = vdwg.mxu0
    %4780 = vmatpush.bf16.msra.mxu0 %v3573
    %4781 = vmatpush.bf16.msra.mxu0 %v3572
    %4782 = vmatpush.bf16.msra.mxu0 %v3571
    %4783 = vmatpush.bf16.msra.mxu0 %v3570
    %4784 = vmatpush.bf16.msra.mxu0 %v3569
    %4785 = vmatpush.bf16.msra.mxu0 %v3568
    %4786 = vmatpush.bf16.msra.mxu0 %v3567
    %4787 = vmatpush.bf16.msra.mxu0 %v3566
    %4788 = vmatmul.bf16.gmra.mxu0 %v160
    %v4789 = vpop.f32.mrf.mxu0
    %v4790 = vadd.f32 %v4777, %v4789
    %v4791 = vpop.f32.mrf.mxu0
    %4792 = vdwg.mxu0
    %4793 = vmatpush.bf16.msra.mxu0 %v3581
    %4794 = vmatpush.bf16.msra.mxu0 %v3580
    %4795 = vmatpush.bf16.msra.mxu0 %v3579
    %4796 = vmatpush.bf16.msra.mxu0 %v3578
    %4797 = vmatpush.bf16.msra.mxu0 %v3577
    %4798 = vmatpush.bf16.msra.mxu0 %v3576
    %4799 = vmatpush.bf16.msra.mxu0 %v3575
    %4800 = vmatpush.bf16.msra.mxu0 %v3574
    %4801 = vmatmul.bf16.gmra.mxu0 %v161
    %v4802 = vpop.f32.mrf.mxu0
    %v4803 = vadd.f32 %v4790, %v4802
    %v4804 = vpop.f32.mrf.mxu0
    %4805 = vdwg.mxu0
    %4806 = vmatpush.bf16.msra.mxu0 %v3589
    %4807 = vmatpush.bf16.msra.mxu0 %v3588
    %4808 = vmatpush.bf16.msra.mxu0 %v3587
    %4809 = vmatpush.bf16.msra.mxu0 %v3586
    %4810 = vmatpush.bf16.msra.mxu0 %v3585
    %4811 = vmatpush.bf16.msra.mxu0 %v3584
    %4812 = vmatpush.bf16.msra.mxu0 %v3583
    %4813 = vmatpush.bf16.msra.mxu0 %v3582
    %4814 = vmatmul.bf16.gmra.mxu0 %v162
    %v4815 = vpop.f32.mrf.mxu0
    %v4816 = vadd.f32 %v4803, %v4815
    %v4817 = vpop.f32.mrf.mxu0
    %4818 = vdwg.mxu0
    %4819 = vmatpush.bf16.msra.mxu0 %v3597
    %4820 = vmatpush.bf16.msra.mxu0 %v3596
    %4821 = vmatpush.bf16.msra.mxu0 %v3595
    %4822 = vmatpush.bf16.msra.mxu0 %v3594
    %4823 = vmatpush.bf16.msra.mxu0 %v3593
    %4824 = vmatpush.bf16.msra.mxu0 %v3592
    %4825 = vmatpush.bf16.msra.mxu0 %v3591
    %4826 = vmatpush.bf16.msra.mxu0 %v3590
    %4827 = vmatmul.bf16.gmra.mxu0 %v163
    %v4828 = vpop.f32.mrf.mxu0
    %v4829 = vadd.f32 %v4816, %v4828
    %v4830 = vpop.f32.mrf.mxu0
    %4831 = vdwg.mxu0
    %4832 = vmatpush.bf16.msra.mxu0 %v3605
    %4833 = vmatpush.bf16.msra.mxu0 %v3604
    %4834 = vmatpush.bf16.msra.mxu0 %v3603
    %4835 = vmatpush.bf16.msra.mxu0 %v3602
    %4836 = vmatpush.bf16.msra.mxu0 %v3601
    %4837 = vmatpush.bf16.msra.mxu0 %v3600
    %4838 = vmatpush.bf16.msra.mxu0 %v3599
    %4839 = vmatpush.bf16.msra.mxu0 %v3598
    %4840 = vmatmul.bf16.gmra.mxu0 %v164
    %v4841 = vpop.f32.mrf.mxu0
    %v4842 = vadd.f32 %v4829, %v4841
    %v4843 = vpop.f32.mrf.mxu0
    %4844 = vdwg.mxu0
    %4845 = vmatpush.bf16.msra.mxu0 %v3613
    %4846 = vmatpush.bf16.msra.mxu0 %v3612
    %4847 = vmatpush.bf16.msra.mxu0 %v3611
    %4848 = vmatpush.bf16.msra.mxu0 %v3610
    %4849 = vmatpush.bf16.msra.mxu0 %v3609
    %4850 = vmatpush.bf16.msra.mxu0 %v3608
    %4851 = vmatpush.bf16.msra.mxu0 %v3607
    %4852 = vmatpush.bf16.msra.mxu0 %v3606
    %4853 = vmatmul.bf16.gmra.mxu0 %v165
    %v4854 = vpop.f32.mrf.mxu0
    %v4855 = vadd.f32 %v4842, %v4854
    %v4856 = vpop.f32.mrf.mxu0
    %4857 = vdwg.mxu0
    %4858 = vmatpush.bf16.msra.mxu0 %v3621
    %4859 = vmatpush.bf16.msra.mxu0 %v3620
    %4860 = vmatpush.bf16.msra.mxu0 %v3619
    %4861 = vmatpush.bf16.msra.mxu0 %v3618
    %4862 = vmatpush.bf16.msra.mxu0 %v3617
    %4863 = vmatpush.bf16.msra.mxu0 %v3616
    %4864 = vmatpush.bf16.msra.mxu0 %v3615
    %4865 = vmatpush.bf16.msra.mxu0 %v3614
    %4866 = vmatmul.bf16.gmra.mxu0 %v166
    %v4867 = vpop.f32.mrf.mxu0
    %v4868 = vadd.f32 %v4855, %v4867
    %v4869 = vpop.f32.mrf.mxu0
    %4870 = vdwg.mxu0
    %4871 = vmatpush.bf16.msra.mxu0 %v3629
    %4872 = vmatpush.bf16.msra.mxu0 %v3628
    %4873 = vmatpush.bf16.msra.mxu0 %v3627
    %4874 = vmatpush.bf16.msra.mxu0 %v3626
    %4875 = vmatpush.bf16.msra.mxu0 %v3625
    %4876 = vmatpush.bf16.msra.mxu0 %v3624
    %4877 = vmatpush.bf16.msra.mxu0 %v3623
    %4878 = vmatpush.bf16.msra.mxu0 %v3622
    %4879 = vmatmul.bf16.gmra.mxu0 %v167
    %v4880 = vpop.f32.mrf.mxu0
    %v4881 = vadd.f32 %v4868, %v4880
    %v4882 = vpop.f32.mrf.mxu0
    %4883 = vdwg.mxu0
    %4884 = vmatpush.bf16.msra.mxu0 %v3637
    %4885 = vmatpush.bf16.msra.mxu0 %v3636
    %4886 = vmatpush.bf16.msra.mxu0 %v3635
    %4887 = vmatpush.bf16.msra.mxu0 %v3634
    %4888 = vmatpush.bf16.msra.mxu0 %v3633
    %4889 = vmatpush.bf16.msra.mxu0 %v3632
    %4890 = vmatpush.bf16.msra.mxu0 %v3631
    %4891 = vmatpush.bf16.msra.mxu0 %v3630
    %4892 = vmatmul.bf16.gmra.mxu0 %v168
    %v4893 = vpop.f32.mrf.mxu0
    %v4894 = vadd.f32 %v4881, %v4893
    %v4895 = vpop.f32.mrf.mxu0
    %4896 = vdwg.mxu0
    %4897 = vmatpush.bf16.msra.mxu0 %v3645
    %4898 = vmatpush.bf16.msra.mxu0 %v3644
    %4899 = vmatpush.bf16.msra.mxu0 %v3643
    %4900 = vmatpush.bf16.msra.mxu0 %v3642
    %4901 = vmatpush.bf16.msra.mxu0 %v3641
    %4902 = vmatpush.bf16.msra.mxu0 %v3640
    %4903 = vmatpush.bf16.msra.mxu0 %v3639
    %4904 = vmatpush.bf16.msra.mxu0 %v3638
    %4905 = vmatmul.bf16.gmra.mxu0 %v169
    %v4906 = vpop.f32.mrf.mxu0
    %v4907 = vadd.f32 %v4894, %v4906
    %v4908 = vpop.f32.mrf.mxu0
    %4909 = vdwg.mxu0
    %4910 = vmatpush.bf16.msra.mxu0 %v3653
    %4911 = vmatpush.bf16.msra.mxu0 %v3652
    %4912 = vmatpush.bf16.msra.mxu0 %v3651
    %4913 = vmatpush.bf16.msra.mxu0 %v3650
    %4914 = vmatpush.bf16.msra.mxu0 %v3649
    %4915 = vmatpush.bf16.msra.mxu0 %v3648
    %4916 = vmatpush.bf16.msra.mxu0 %v3647
    %4917 = vmatpush.bf16.msra.mxu0 %v3646
    %4918 = vmatmul.bf16.gmra.mxu0 %v170
    %v4919 = vpop.f32.mrf.mxu0
    %v4920 = vadd.f32 %v4907, %v4919
    %v4921 = vpop.f32.mrf.mxu0
    %4922 = vdwg.mxu0
    %4923 = vmatpush.bf16.msra.mxu0 %v3661
    %4924 = vmatpush.bf16.msra.mxu0 %v3660
    %4925 = vmatpush.bf16.msra.mxu0 %v3659
    %4926 = vmatpush.bf16.msra.mxu0 %v3658
    %4927 = vmatpush.bf16.msra.mxu0 %v3657
    %4928 = vmatpush.bf16.msra.mxu0 %v3656
    %4929 = vmatpush.bf16.msra.mxu0 %v3655
    %4930 = vmatpush.bf16.msra.mxu0 %v3654
    %4931 = vmatmul.bf16.gmra.mxu0 %v171
    %v4932 = vpop.f32.mrf.mxu0
    %v4933 = vadd.f32 %v4920, %v4932
    %v4934 = vpop.f32.mrf.mxu0
    %4935 = vdwg.mxu0
    %4936 = vmatpush.bf16.msra.mxu0 %v3669
    %4937 = vmatpush.bf16.msra.mxu0 %v3668
    %4938 = vmatpush.bf16.msra.mxu0 %v3667
    %4939 = vmatpush.bf16.msra.mxu0 %v3666
    %4940 = vmatpush.bf16.msra.mxu0 %v3665
    %4941 = vmatpush.bf16.msra.mxu0 %v3664
    %4942 = vmatpush.bf16.msra.mxu0 %v3663
    %4943 = vmatpush.bf16.msra.mxu0 %v3662
    %4944 = vmatmul.bf16.gmra.mxu0 %v172
    %v4945 = vpop.f32.mrf.mxu0
    %v4946 = vadd.f32 %v4933, %v4945
    %v4947 = vpop.f32.mrf.mxu0
    %4948 = vdwg.mxu0
    %4949 = vmatpush.bf16.msra.mxu0 %v3677
    %4950 = vmatpush.bf16.msra.mxu0 %v3676
    %4951 = vmatpush.bf16.msra.mxu0 %v3675
    %4952 = vmatpush.bf16.msra.mxu0 %v3674
    %4953 = vmatpush.bf16.msra.mxu0 %v3673
    %4954 = vmatpush.bf16.msra.mxu0 %v3672
    %4955 = vmatpush.bf16.msra.mxu0 %v3671
    %4956 = vmatpush.bf16.msra.mxu0 %v3670
    %4957 = vmatmul.bf16.gmra.mxu0 %v173
    %v4958 = vpop.f32.mrf.mxu0
    %v4959 = vadd.f32 %v4946, %v4958
    %v4960 = vpop.f32.mrf.mxu0
    %4961 = vdwg.mxu0
    %4962 = vmatpush.bf16.msra.mxu0 %v3685
    %4963 = vmatpush.bf16.msra.mxu0 %v3684
    %4964 = vmatpush.bf16.msra.mxu0 %v3683
    %4965 = vmatpush.bf16.msra.mxu0 %v3682
    %4966 = vmatpush.bf16.msra.mxu0 %v3681
    %4967 = vmatpush.bf16.msra.mxu0 %v3680
    %4968 = vmatpush.bf16.msra.mxu0 %v3679
    %4969 = vmatpush.bf16.msra.mxu0 %v3678
    %4970 = vmatmul.bf16.gmra.mxu0 %v174
    %v4971 = vpop.f32.mrf.mxu0
    %v4972 = vadd.f32 %v4959, %v4971
    %v4973 = vpop.f32.mrf.mxu0
    %4974 = vdwg.mxu0
    %4975 = vmatpush.bf16.msra.mxu0 %v3693
    %4976 = vmatpush.bf16.msra.mxu0 %v3692
    %4977 = vmatpush.bf16.msra.mxu0 %v3691
    %4978 = vmatpush.bf16.msra.mxu0 %v3690
    %4979 = vmatpush.bf16.msra.mxu0 %v3689
    %4980 = vmatpush.bf16.msra.mxu0 %v3688
    %4981 = vmatpush.bf16.msra.mxu0 %v3687
    %4982 = vmatpush.bf16.msra.mxu0 %v3686
    %4983 = vmatmul.bf16.gmra.mxu0 %v175
    %v4984 = vpop.f32.mrf.mxu0
    %v4985 = vadd.f32 %v4972, %v4984
    %v4986 = vpop.f32.mrf.mxu0
    %4987 = vdwg.mxu0
    %4988 = vmatpush.bf16.msra.mxu0 %v3701
    %4989 = vmatpush.bf16.msra.mxu0 %v3700
    %4990 = vmatpush.bf16.msra.mxu0 %v3699
    %4991 = vmatpush.bf16.msra.mxu0 %v3698
    %4992 = vmatpush.bf16.msra.mxu0 %v3697
    %4993 = vmatpush.bf16.msra.mxu0 %v3696
    %4994 = vmatpush.bf16.msra.mxu0 %v3695
    %4995 = vmatpush.bf16.msra.mxu0 %v3694
    %4996 = vmatmul.bf16.gmra.mxu0 %v176
    %v4997 = vpop.f32.mrf.mxu0
    %v4998 = vadd.f32 %v4985, %v4997
    %v4999 = vpop.f32.mrf.mxu0
    %5000 = vdwg.mxu0
    %5001 = vmatpush.bf16.msra.mxu0 %v3709
    %5002 = vmatpush.bf16.msra.mxu0 %v3708
    %5003 = vmatpush.bf16.msra.mxu0 %v3707
    %5004 = vmatpush.bf16.msra.mxu0 %v3706
    %5005 = vmatpush.bf16.msra.mxu0 %v3705
    %5006 = vmatpush.bf16.msra.mxu0 %v3704
    %5007 = vmatpush.bf16.msra.mxu0 %v3703
    %5008 = vmatpush.bf16.msra.mxu0 %v3702
    %5009 = vmatmul.bf16.gmra.mxu0 %v177
    %v5010 = vpop.f32.mrf.mxu0
    %v5011 = vadd.f32 %v4998, %v5010
    %v5012 = vpop.f32.mrf.mxu0
    %5013 = vdwg.mxu0
    %5014 = vmatpush.bf16.msra.mxu0 %v3717
    %5015 = vmatpush.bf16.msra.mxu0 %v3716
    %5016 = vmatpush.bf16.msra.mxu0 %v3715
    %5017 = vmatpush.bf16.msra.mxu0 %v3714
    %5018 = vmatpush.bf16.msra.mxu0 %v3713
    %5019 = vmatpush.bf16.msra.mxu0 %v3712
    %5020 = vmatpush.bf16.msra.mxu0 %v3711
    %5021 = vmatpush.bf16.msra.mxu0 %v3710
    %5022 = vmatmul.bf16.gmra.mxu0 %v178
    %v5023 = vpop.f32.mrf.mxu0
    %v5024 = vadd.f32 %v5011, %v5023
    %v5025 = vpop.f32.mrf.mxu0
    %5026 = vdwg.mxu0
    %5027 = vmatpush.bf16.msra.mxu0 %v3725
    %5028 = vmatpush.bf16.msra.mxu0 %v3724
    %5029 = vmatpush.bf16.msra.mxu0 %v3723
    %5030 = vmatpush.bf16.msra.mxu0 %v3722
    %5031 = vmatpush.bf16.msra.mxu0 %v3721
    %5032 = vmatpush.bf16.msra.mxu0 %v3720
    %5033 = vmatpush.bf16.msra.mxu0 %v3719
    %5034 = vmatpush.bf16.msra.mxu0 %v3718
    %5035 = vmatmul.bf16.gmra.mxu0 %v179
    %v5036 = vpop.f32.mrf.mxu0
    %v5037 = vadd.f32 %v5024, %v5036
    %v5038 = vpop.f32.mrf.mxu0
    %5039 = vdwg.mxu0
    %5040 = vmatpush.bf16.msra.mxu0 %v3733
    %5041 = vmatpush.bf16.msra.mxu0 %v3732
    %5042 = vmatpush.bf16.msra.mxu0 %v3731
    %5043 = vmatpush.bf16.msra.mxu0 %v3730
    %5044 = vmatpush.bf16.msra.mxu0 %v3729
    %5045 = vmatpush.bf16.msra.mxu0 %v3728
    %5046 = vmatpush.bf16.msra.mxu0 %v3727
    %5047 = vmatpush.bf16.msra.mxu0 %v3726
    %5048 = vmatmul.bf16.gmra.mxu0 %v180
    %v5049 = vpop.f32.mrf.mxu0
    %v5050 = vadd.f32 %v5037, %v5049
    %v5051 = vpop.f32.mrf.mxu0
    %5052 = vdwg.mxu0
    %5053 = vmatpush.bf16.msra.mxu0 %v3741
    %5054 = vmatpush.bf16.msra.mxu0 %v3740
    %5055 = vmatpush.bf16.msra.mxu0 %v3739
    %5056 = vmatpush.bf16.msra.mxu0 %v3738
    %5057 = vmatpush.bf16.msra.mxu0 %v3737
    %5058 = vmatpush.bf16.msra.mxu0 %v3736
    %5059 = vmatpush.bf16.msra.mxu0 %v3735
    %5060 = vmatpush.bf16.msra.mxu0 %v3734
    %5061 = vmatmul.bf16.gmra.mxu0 %v181
    %v5062 = vpop.f32.mrf.mxu0
    %v5063 = vadd.f32 %v5050, %v5062
    %v5064 = vpop.f32.mrf.mxu0
    %5065 = vdwg.mxu0
    %5066 = vmatpush.bf16.msra.mxu0 %v3749
    %5067 = vmatpush.bf16.msra.mxu0 %v3748
    %5068 = vmatpush.bf16.msra.mxu0 %v3747
    %5069 = vmatpush.bf16.msra.mxu0 %v3746
    %5070 = vmatpush.bf16.msra.mxu0 %v3745
    %5071 = vmatpush.bf16.msra.mxu0 %v3744
    %5072 = vmatpush.bf16.msra.mxu0 %v3743
    %5073 = vmatpush.bf16.msra.mxu0 %v3742
    %5074 = vmatmul.bf16.gmra.mxu0 %v182
    %v5075 = vpop.f32.mrf.mxu0
    %v5076 = vadd.f32 %v5063, %v5075
    %v5077 = vpop.f32.mrf.mxu0
    %5078 = vdwg.mxu0
    %5079 = vmatpush.bf16.msra.mxu0 %v3757
    %5080 = vmatpush.bf16.msra.mxu0 %v3756
    %5081 = vmatpush.bf16.msra.mxu0 %v3755
    %5082 = vmatpush.bf16.msra.mxu0 %v3754
    %5083 = vmatpush.bf16.msra.mxu0 %v3753
    %5084 = vmatpush.bf16.msra.mxu0 %v3752
    %5085 = vmatpush.bf16.msra.mxu0 %v3751
    %5086 = vmatpush.bf16.msra.mxu0 %v3750
    %5087 = vmatmul.bf16.gmra.mxu0 %v183
    %v5088 = vpop.f32.mrf.mxu0
    %v5089 = vadd.f32 %v5076, %v5088
    %v5090 = vpop.f32.mrf.mxu0
    %5091 = vdwg.mxu0
    %5092 = vmatpush.bf16.msra.mxu0 %v3765
    %5093 = vmatpush.bf16.msra.mxu0 %v3764
    %5094 = vmatpush.bf16.msra.mxu0 %v3763
    %5095 = vmatpush.bf16.msra.mxu0 %v3762
    %5096 = vmatpush.bf16.msra.mxu0 %v3761
    %5097 = vmatpush.bf16.msra.mxu0 %v3760
    %5098 = vmatpush.bf16.msra.mxu0 %v3759
    %5099 = vmatpush.bf16.msra.mxu0 %v3758
    %5100 = vmatmul.bf16.gmra.mxu0 %v184
    %v5101 = vpop.f32.mrf.mxu0
    %v5102 = vadd.f32 %v5089, %v5101
    %v5103 = vpop.f32.mrf.mxu0
    %5104 = vdwg.mxu0
    %5105 = vmatpush.bf16.msra.mxu0 %v3773
    %5106 = vmatpush.bf16.msra.mxu0 %v3772
    %5107 = vmatpush.bf16.msra.mxu0 %v3771
    %5108 = vmatpush.bf16.msra.mxu0 %v3770
    %5109 = vmatpush.bf16.msra.mxu0 %v3769
    %5110 = vmatpush.bf16.msra.mxu0 %v3768
    %5111 = vmatpush.bf16.msra.mxu0 %v3767
    %5112 = vmatpush.bf16.msra.mxu0 %v3766
    %5113 = vmatmul.bf16.gmra.mxu0 %v185
    %v5114 = vpop.f32.mrf.mxu0
    %v5115 = vadd.f32 %v5102, %v5114
    %v5116 = vpop.f32.mrf.mxu0
    %5117 = vdwg.mxu0
    %5118 = vst [vmem:[#allocation8] sm:$0xff] %v5115
    // Predicated region
    $region26: #{tpu_custom_call.1} parent=1 // pred_check
      _
    $region27: #{tpu_custom_call.1} parent=1 // pred_check_branch
      %5120 = sbr.rel (0) target = $region29
    $region28: #{tpu_custom_call.1} parent=1 // pred_region
      %5122 = vsyncadd [#allocation4], 0
      %s5124 = sshll.u32 [#allocation8], 4
      %s5125 = int_to_ptr.vmem [resolvable:$true] %s5124
      %s5126 = sshll.u32 %s3, 4
      %s5127 = int_to_ptr.hbm [resolvable:$true] %s5126
      %5129 = dma.vmem_to_hbm [thread:$0]  %s5125, 128, %s5127, [#allocation4]
    $region29: #{tpu_custom_call.1} parent=1 // pred_fallthru
      _
    // Predicated region
    $region30: #{tpu_custom_call.1} parent=1 // pred_check
      _
    $region31: #{tpu_custom_call.1} parent=1 // pred_check_branch
      %5131 = sbr.rel (0) target = $region33
    $region32: #{tpu_custom_call.1} parent=1 // pred_region
      %5133 = dma.done [#allocation4], 128
    $region33: #{tpu_custom_call.1} parent=1 // pred_fallthru
      _
    %5134 = vsyncpa [#allocation3], 1
    %5135 = vsyncpa [#allocation6], 1
    %5136 = vsyncpa [#allocation4], 1

</llo_original>
